<compile_context>
chip_gen: v5e
topology: v5e:2x2
jax: 0.10.0
libtpu: 0.0.40
codegen_flags: <defaults>
</compile_context>

<pallas_src>
import functools

import jax
import jax.numpy as jnp
from jax import lax
from jax.experimental import pallas as pl
from jax.experimental.pallas import tpu as pltpu

_PAD = 128  # lane-dense padding for every feature dimension


def _round_up(n: int, m: int) -> int:
    return -(-n // m) * m


# ----------------------------------------------------------------------------
# Fused Pallas kernel: entire MLP (hidden1 -> hidden2 -> n_mid shared layers
# -> hidden3 -> predict) + sigmoid + masked softmax(dim=1) in one launch.
# ----------------------------------------------------------------------------
def _fused_mlp_kernel(x_ref, w1_ref, b1_ref, w2_ref, b2_ref, wh_ref, bh_ref,
                      w3_ref, b3_ref, wp_ref, bp_ref, o_ref, *, n_mid, n_output):
    f32 = jnp.float32
    act_dt = x_ref.dtype  # bf16 activations between layers

    def dense_relu(x, w_ref, b_ref):
        y = jnp.dot(x, w_ref[...], preferred_element_type=f32) + b_ref[...]
        return jnp.maximum(y, 0.0).astype(act_dt)

    x = dense_relu(x_ref[...], w1_ref, b1_ref)   # (B, 1024)
    x = dense_relu(x, w2_ref, b2_ref)            # (B, 512)

    if n_mid > 0:
        # Shared 500x500 (padded 512x512) layer: weight/bias read ONCE, stay
        # resident across the loop; bias broadcast hoisted out of the loop.
        wh = wh_ref[...]
        bh = jnp.broadcast_to(bh_ref[...], (x.shape[0], wh.shape[1]))

        def body(_, xc):
            y = jnp.dot(xc, wh, preferred_element_type=f32) + bh
            return jnp.maximum(y, 0.0).astype(act_dt)

        x = lax.fori_loop(0, n_mid, body, x, unroll=True)

    x = dense_relu(x, w3_ref, b3_ref)            # (B, 128)

    # predict layer + sigmoid (EUP exp + approx reciprocal on EUP slot)
    y = jnp.dot(x, wp_ref[...], preferred_element_type=f32) + bp_ref[...]
    s = pl.reciprocal(1.0 + jnp.exp(-y), approx=True)

    # softmax over the real n_output classes (dim=1); padded lanes masked out
    col = lax.broadcasted_iota(jnp.int32, s.shape, 1)
    valid = col < n_output
    s = jnp.where(valid, s, -1e30)
    e = jnp.exp(s - jnp.max(s, axis=1, keepdims=True))
    e = jnp.where(valid, e, 0.0)
    o_ref[...] = (e / jnp.sum(e, axis=1, keepdims=True)).astype(o_ref.dtype)


def _pad_input(x, in_pad):
    """Zero-pad (batch, features) to (multiple-of-8 batch, in_pad) in bf16."""
    batch, n_feat = x.shape
    b_pad = max(8, _round_up(batch, 8))
    xp = jnp.zeros((b_pad, in_pad), jnp.float32).at[:batch, :n_feat].set(x)
    return xp.astype(jnp.bfloat16)


def fused_network_softmax(params, x, depth, n_output):
    """softmax(network_model(x), dim=1) as a single Pallas kernel launch."""
    n_mid = max(int(depth) - 4, 0)
    batch = x.shape[0]
    w1, b1 = params["hidden1"]
    w2, b2 = params["hidden2"]
    wh, bh = params["hidden"]
    w3, b3 = params["hidden3"]
    wp, bp = params["predict"]

    xp = _pad_input(x, w1.shape[0])
    b_pad, out_pad = xp.shape[0], wp.shape[1]

    kernel = functools.partial(_fused_mlp_kernel, n_mid=n_mid, n_output=n_output)
    vmem = pl.BlockSpec(memory_space=pltpu.MemorySpace.VMEM)

    operands = (xp, w1, b1, w2, b2, wh, bh, w3, b3, wp, bp)
    flops = 2 * b_pad * (w1.shape[0] * w1.shape[1] + w2.shape[0] * w2.shape[1]
                         + n_mid * wh.shape[0] * wh.shape[1]
                         + w3.shape[0] * w3.shape[1] + wp.shape[0] * wp.shape[1])
    bytes_accessed = sum(int(a.size) * a.dtype.itemsize for a in operands) \
        + b_pad * out_pad * 4
    cost = pl.CostEstimate(flops=flops,
                           transcendentals=2 * b_pad * out_pad,
                           bytes_accessed=bytes_accessed)

    out = pl.pallas_call(
        kernel,
        out_shape=jax.ShapeDtypeStruct((b_pad, out_pad), jnp.float32),
        in_specs=[vmem] * len(operands),
        out_specs=vmem,
        cost_estimate=cost,
    )(*operands)
    return out[:batch, :n_output]


# ----------------------------------------------------------------------------
# renderer_model pieces outside the classifier
# ----------------------------------------------------------------------------
def get_points_from_angles(distance, elevation, azimuth, degrees=True):
    """nr.get_points_from_angles: spherical angles -> camera eye (batch, 3)."""
    if degrees:
        elevation = elevation * (jnp.pi / 180.0)
        azimuth = azimuth * (jnp.pi / 180.0)
    return jnp.stack(
        [distance * jnp.cos(elevation) * jnp.sin(azimuth),
         distance * jnp.sin(elevation),
         -distance * jnp.cos(elevation) * jnp.cos(azimuth)], axis=-1)


def renderer_model_forward(params, azimuth, camera_distance, elevation, images,
                           depth, n_output):
    eye = get_points_from_angles(camera_distance, elevation, azimuth)
    # TODO(synk): the differentiable mesh rasterizer (nr.Renderer, camera_mode
    # 'look_at', vertices/faces/textures -> image) has no Pallas equivalent;
    # `images` stands in for renderer(vertices, faces, textures)[0].
    x = images.reshape(images.shape[0], -1)
    prop = fused_network_softmax(params, x, depth, n_output)
    return prop, eye


# ----------------------------------------------------------------------------
# Parameters: logical Linear shapes, zero-padded to lane-dense (128) multiples,
# weights stored bf16 (biases f32).
# ----------------------------------------------------------------------------
def init_params(key, n_feature, n_output):
    logical = [
        ("hidden1", n_feature, 1000),
        ("hidden2", 1000, 500),
        ("hidden", 500, 500),
        ("hidden3", 500, 50),
        ("predict", 50, n_output),
    ]
    keys = jax.random.split(key, len(logical))
    params = {}
    for k, (name, n_in, n_out) in zip(keys, logical):
        kw, kb = jax.random.split(k)
        bound = 1.0 / (n_in ** 0.5)
        w = jax.random.uniform(kw, (n_in, n_out), jnp.float32, -bound, bound)
        b = jax.random.uniform(kb, (n_out,), jnp.float32, -bound, bound)
        in_pad, out_pad = _round_up(n_in, _PAD), _round_up(n_out, _PAD)
        wp = jnp.zeros((in_pad, out_pad), jnp.float32).at[:n_in, :n_out].set(w)
        bp = jnp.zeros((1, out_pad), jnp.float32).at[0, :n_out].set(b)
        params[name] = (wp.astype(jnp.bfloat16), bp)
    return params


# Pure-JAX reference mirroring the kernel math (for correctness checking).
def reference_forward(params, images, depth, n_output):
    n_mid = max(int(depth) - 4, 0)
    x = images.reshape(images.shape[0], -1)
    batch = x.shape[0]
    w1, b1 = params["hidden1"]
    w2, b2 = params["hidden2"]
    wh, bh = params["hidden"]
    w3, b3 = params["hidden3"]
    wp, bp = params["predict"]
    h = _pad_input(x, w1.shape[0])

    def dense_relu(h, w, b):
        y = jnp.dot(h, w, preferred_element_type=jnp.float32) + b
        return jnp.maximum(y, 0.0).astype(jnp.bfloat16)

    h = dense_relu(h, w1, b1)
    h = dense_relu(h, w2, b2)
    for _ in range(n_mid):
        h = dense_relu(h, wh, bh)
    h = dense_relu(h, w3, b3)
    y = jnp.dot(h, wp, preferred_element_type=jnp.float32) + bp
    s = jax.nn.sigmoid(y)[:, :n_output]
    return jax.nn.softmax(s, axis=1)[:batch]


if __name__ == "__main__":
    image_size = 16
    n_output = 4
    depth = 6            # -> 2 iterations of the shared 500x500 layer
    batch = 8            # pretend 8 rendered views

    n_feature = 3 * image_size * image_size  # flattened rendered image

    key = jax.random.PRNGKey(0)
    k_p, k_img = jax.random.split(key)
    params = init_params(k_p, n_feature, n_output)

    # Stand-in for renderer(vertices, faces, textures)[0]  (see TODO above).
    images = jax.random.uniform(k_img, (batch, 3, image_size, image_size),
                                jnp.float32)
    camera_distance = jnp.asarray([2.732], jnp.float32)
    elevation = jnp.asarray([30.0], jnp.float32)
    azimuth = jnp.asarray([45.0], jnp.float32)

    prop, eye = renderer_model_forward(params, azimuth, camera_distance,
                                       elevation, images, depth, n_output)
    prop = jax.block_until_ready(prop)

    assert prop.shape == (batch, n_output)
    assert eye.shape == (1, 3)
    # softmax output: entries in [0, 1], rows sum to 1
    assert bool(jnp.all((prop >= 0.0) & (prop <= 1.0)))
    assert bool(jnp.allclose(jnp.sum(prop, axis=1), 1.0, atol=1e-3))
    # matches the pure-JAX reference of the same (bf16-weight) model
    ref = reference_forward(params, images, depth, n_output)
    assert bool(jnp.allclose(prop, ref, atol=2e-2))
    print("KERNEL_OK")
</pallas_src>

<mosaic_0001>
module attributes {stable_mosaic.version = 11 : i64} {
  func.func @_fused_mlp_kernel(%arg0: memref<8x768xbf16, #tpu.memory_space<vmem>>, %arg1: memref<768x1024xbf16, #tpu.memory_space<vmem>>, %arg2: memref<1x1024xf32, #tpu.memory_space<vmem>>, %arg3: memref<1024x512xbf16, #tpu.memory_space<vmem>>, %arg4: memref<1x512xf32, #tpu.memory_space<vmem>>, %arg5: memref<512x512xbf16, #tpu.memory_space<vmem>>, %arg6: memref<1x512xf32, #tpu.memory_space<vmem>>, %arg7: memref<512x128xbf16, #tpu.memory_space<vmem>>, %arg8: memref<1x128xf32, #tpu.memory_space<vmem>>, %arg9: memref<128x128xbf16, #tpu.memory_space<vmem>>, %arg10: memref<1x128xf32, #tpu.memory_space<vmem>>, %arg11: memref<8x128xf32, #tpu.memory_space<vmem>>) attributes {dimension_semantics = [], scalar_prefetch = 0 : i64, scratch_operands = 0 : i64, tpu.core_type = #tpu.core_type<tc>} {
    %c0 = arith.constant 0 : index
    %c0_0 = arith.constant 0 : index
    %0 = vector.load %arg0[%c0, %c0_0] : memref<8x768xbf16, #tpu.memory_space<vmem>>, vector<8x768xbf16>
    %c0_1 = arith.constant 0 : index
    %c0_2 = arith.constant 0 : index
    %1 = vector.load %arg1[%c0_1, %c0_2] : memref<768x1024xbf16, #tpu.memory_space<vmem>>, vector<768x1024xbf16>
    %cst = arith.constant dense<0.000000e+00> : vector<8x1024xf32>
    %2 = tpu.matmul %0, %1, %cst {dimension_numbers = #tpu.dot_dimension_numbers<[1], [0], [0], [1], [0, 0, 1, 1], [], []>} : vector<8x768xbf16>, vector<768x1024xbf16>, vector<8x1024xf32> -> vector<8x1024xf32>
    %c0_3 = arith.constant 0 : index
    %c0_4 = arith.constant 0 : index
    %3 = vector.load %arg2[%c0_3, %c0_4] : memref<1x1024xf32, #tpu.memory_space<vmem>>, vector<1x1024xf32>
    %4 = vector.broadcast %3 : vector<1x1024xf32> to vector<8x1024xf32>
    %5 = arith.addf %2, %4 : vector<8x1024xf32>
    %cst_5 = arith.constant 0.000000e+00 : f32
    %6 = vector.broadcast %cst_5 : f32 to vector<8x1024xf32>
    %7 = arith.maximumf %5, %6 : vector<8x1024xf32>
    %8 = arith.truncf %7 : vector<8x1024xf32> to vector<8x1024xbf16>
    %c0_6 = arith.constant 0 : index
    %c0_7 = arith.constant 0 : index
    %9 = vector.load %arg3[%c0_6, %c0_7] : memref<1024x512xbf16, #tpu.memory_space<vmem>>, vector<1024x512xbf16>
    %cst_8 = arith.constant dense<0.000000e+00> : vector<8x512xf32>
    %10 = tpu.matmul %8, %9, %cst_8 {dimension_numbers = #tpu.dot_dimension_numbers<[1], [0], [0], [1], [0, 0, 1, 1], [], []>} : vector<8x1024xbf16>, vector<1024x512xbf16>, vector<8x512xf32> -> vector<8x512xf32>
    %c0_9 = arith.constant 0 : index
    %c0_10 = arith.constant 0 : index
    %11 = vector.load %arg4[%c0_9, %c0_10] : memref<1x512xf32, #tpu.memory_space<vmem>>, vector<1x512xf32>
    %12 = vector.broadcast %11 : vector<1x512xf32> to vector<8x512xf32>
    %13 = arith.addf %10, %12 : vector<8x512xf32>
    %cst_11 = arith.constant 0.000000e+00 : f32
    %14 = vector.broadcast %cst_11 : f32 to vector<8x512xf32>
    %15 = arith.maximumf %13, %14 : vector<8x512xf32>
    %16 = arith.truncf %15 : vector<8x512xf32> to vector<8x512xbf16>
    %c0_12 = arith.constant 0 : index
    %c0_13 = arith.constant 0 : index
    %17 = vector.load %arg5[%c0_12, %c0_13] : memref<512x512xbf16, #tpu.memory_space<vmem>>, vector<512x512xbf16>
    %c0_14 = arith.constant 0 : index
    %c0_15 = arith.constant 0 : index
    %18 = vector.load %arg6[%c0_14, %c0_15] : memref<1x512xf32, #tpu.memory_space<vmem>>, vector<1x512xf32>
    %19 = vector.shape_cast %18 : vector<1x512xf32> to vector<1x512xf32>
    %20 = vector.broadcast %19 : vector<1x512xf32> to vector<8x512xf32>
    %c0_i32 = arith.constant 0 : i32
    %cst_16 = arith.constant dense<0.000000e+00> : vector<8x512xf32>
    %21 = tpu.matmul %16, %17, %cst_16 {dimension_numbers = #tpu.dot_dimension_numbers<[1], [0], [0], [1], [0, 0, 1, 1], [], []>} : vector<8x512xbf16>, vector<512x512xbf16>, vector<8x512xf32> -> vector<8x512xf32>
    %22 = arith.addf %21, %20 : vector<8x512xf32>
    %cst_17 = arith.constant 0.000000e+00 : f32
    %23 = vector.broadcast %cst_17 : f32 to vector<8x512xf32>
    %24 = arith.maximumf %22, %23 : vector<8x512xf32>
    %25 = arith.truncf %24 : vector<8x512xf32> to vector<8x512xbf16>
    %c1_i32 = arith.constant 1 : i32
    %cst_18 = arith.constant dense<0.000000e+00> : vector<8x512xf32>
    %26 = tpu.matmul %25, %17, %cst_18 {dimension_numbers = #tpu.dot_dimension_numbers<[1], [0], [0], [1], [0, 0, 1, 1], [], []>} : vector<8x512xbf16>, vector<512x512xbf16>, vector<8x512xf32> -> vector<8x512xf32>
    %27 = arith.addf %26, %20 : vector<8x512xf32>
    %cst_19 = arith.constant 0.000000e+00 : f32
    %28 = vector.broadcast %cst_19 : f32 to vector<8x512xf32>
    %29 = arith.maximumf %27, %28 : vector<8x512xf32>
    %30 = arith.truncf %29 : vector<8x512xf32> to vector<8x512xbf16>
    %c0_20 = arith.constant 0 : index
    %c0_21 = arith.constant 0 : index
    %31 = vector.load %arg7[%c0_20, %c0_21] : memref<512x128xbf16, #tpu.memory_space<vmem>>, vector<512x128xbf16>
    %cst_22 = arith.constant dense<0.000000e+00> : vector<8x128xf32>
    %32 = tpu.matmul %30, %31, %cst_22 {dimension_numbers = #tpu.dot_dimension_numbers<[1], [0], [0], [1], [0, 0, 1, 1], [], []>} : vector<8x512xbf16>, vector<512x128xbf16>, vector<8x128xf32> -> vector<8x128xf32>
    %c0_23 = arith.constant 0 : index
    %c0_24 = arith.constant 0 : index
    %33 = vector.load %arg8[%c0_23, %c0_24] : memref<1x128xf32, #tpu.memory_space<vmem>>, vector<1x128xf32>
    %34 = vector.broadcast %33 : vector<1x128xf32> to vector<8x128xf32>
    %35 = arith.addf %32, %34 : vector<8x128xf32>
    %cst_25 = arith.constant 0.000000e+00 : f32
    %36 = vector.broadcast %cst_25 : f32 to vector<8x128xf32>
    %37 = arith.maximumf %35, %36 : vector<8x128xf32>
    %38 = arith.truncf %37 : vector<8x128xf32> to vector<8x128xbf16>
    %c0_26 = arith.constant 0 : index
    %c0_27 = arith.constant 0 : index
    %39 = vector.load %arg9[%c0_26, %c0_27] : memref<128x128xbf16, #tpu.memory_space<vmem>>, vector<128x128xbf16>
    %cst_28 = arith.constant dense<0.000000e+00> : vector<8x128xf32>
    %40 = tpu.matmul %38, %39, %cst_28 {dimension_numbers = #tpu.dot_dimension_numbers<[1], [0], [0], [1], [0, 0, 1, 1], [], []>} : vector<8x128xbf16>, vector<128x128xbf16>, vector<8x128xf32> -> vector<8x128xf32>
    %c0_29 = arith.constant 0 : index
    %c0_30 = arith.constant 0 : index
    %41 = vector.load %arg10[%c0_29, %c0_30] : memref<1x128xf32, #tpu.memory_space<vmem>>, vector<1x128xf32>
    %42 = vector.broadcast %41 : vector<1x128xf32> to vector<8x128xf32>
    %43 = arith.addf %40, %42 : vector<8x128xf32>
    %cst_31 = arith.constant 0.000000e+00 : f32
    %44 = vector.broadcast %cst_31 : f32 to vector<8x128xf32>
    %45 = arith.subf %44, %43 : vector<8x128xf32>
    %46 = math.exp %45 : vector<8x128xf32>
    %cst_32 = arith.constant 1.000000e+00 : f32
    %47 = vector.broadcast %cst_32 : f32 to vector<8x128xf32>
    %48 = arith.addf %47, %46 : vector<8x128xf32>
    %49 = tpu.reciprocal %48 {approx = true} : vector<8x128xf32> -> vector<8x128xf32>
    %50 = tpu.iota {dimensions = array<i32: 1>} : vector<8x128xi32>
    %c4_i32 = arith.constant 4 : i32
    %51 = vector.broadcast %c4_i32 : i32 to vector<8x128xi32>
    %52 = arith.cmpi slt, %50, %51 : vector<8x128xi32>
    %cst_33 = arith.constant -1.000000e+30 : f32
    %53 = vector.broadcast %cst_33 : f32 to vector<8x128xf32>
    %54 = arith.select %52, %49, %53 : vector<8x128xi1>, vector<8x128xf32>
    %cst_34 = arith.constant dense<0xFF800000> : vector<8xf32>
    %55 = vector.multi_reduction <maximumf>, %54, %cst_34 [1] : vector<8x128xf32> to vector<8xf32>
    %56 = vector.shape_cast %55 : vector<8xf32> to vector<8x1xf32>
    %57 = vector.broadcast %56 : vector<8x1xf32> to vector<8x128xf32>
    %58 = arith.subf %54, %57 : vector<8x128xf32>
    %59 = math.exp %58 : vector<8x128xf32>
    %cst_35 = arith.constant 0.000000e+00 : f32
    %60 = vector.broadcast %cst_35 : f32 to vector<8x128xf32>
    %61 = arith.select %52, %59, %60 : vector<8x128xi1>, vector<8x128xf32>
    %cst_36 = arith.constant dense<0.000000e+00> : vector<8xf32>
    %62 = vector.multi_reduction <add>, %61, %cst_36 [1] : vector<8x128xf32> to vector<8xf32>
    %63 = vector.shape_cast %62 : vector<8xf32> to vector<8x1xf32>
    %64 = vector.broadcast %63 : vector<8x1xf32> to vector<8x128xf32>
    %65 = arith.divf %61, %64 : vector<8x128xf32>
    %c0_37 = arith.constant 0 : index
    %c0_38 = arith.constant 0 : index
    %66 = vector.load %arg11[%c0_37, %c0_38] : memref<8x128xf32, #tpu.memory_space<vmem>>, vector<8x128xf32>
    tpu.vector_store %arg11[%c0_37, %c0_38], %65 {strides = array<i32>} : memref<8x128xf32, #tpu.memory_space<vmem>>, vector<8x128xf32>,
    return
  }
}

</mosaic_0001>

<llo_original>
// kernel: tpu_custom_call.1
$region0: #{tpu_custom_call.1}
  #allocation0 [shape = 'u32[]', space=smem, size = 0x4, offset = 0x4, fixed_abs, tag = 'smem constant byte address 0x4 - core index']
  #allocation1 [shape = 'u32[72,128]{1,0:T(1,128)}', space=vmem, size = 0x9000, scoped, tag = 'internal scratch']
  %s0 = inlined_call_operand.hbm [shape: bf16[8,768], index: 0, kind: input, shape index: {}]
  %s1 = inlined_call_operand.hbm [shape: bf16[768,1024], index: 1, kind: input, shape index: {}]
  %s2 = inlined_call_operand.hbm [shape: f32[1,1024], index: 2, kind: input, shape index: {}]
  %s3 = inlined_call_operand.hbm [shape: bf16[1024,512], index: 3, kind: input, shape index: {}]
  %s4 = inlined_call_operand.hbm [shape: f32[1,512], index: 4, kind: input, shape index: {}]
  %s5 = inlined_call_operand.hbm [shape: bf16[512,512], index: 5, kind: input, shape index: {}]
  %s6 = inlined_call_operand.hbm [shape: f32[1,512], index: 6, kind: input, shape index: {}]
  %s7 = inlined_call_operand.hbm [shape: bf16[512,128], index: 7, kind: input, shape index: {}]
  %s8 = inlined_call_operand.hbm [shape: f32[1,128], index: 8, kind: input, shape index: {}]
  %s9 = inlined_call_operand.hbm [shape: bf16[128,128], index: 9, kind: input, shape index: {}]
  %s10 = inlined_call_operand.hbm [shape: f32[1,128], index: 10, kind: input, shape index: {}]
  %s11 = inlined_call_operand.hbm [shape: f32[8,128], index: 11, kind: output, shape index: {}]
  %s12 = sld [smem:[#allocation0]]
  $region98: #{tpu_custom_call.1} parent=0
    _
  %s14 = ssub.s32 1, %s12
  %s15 = scalar_select 0, %s14, %s12
  $region1: #{tpu_custom_call.1} parent=0
    #allocation2 [shape = 'u8[12288]{0}', space=vmem, size = 0x3000, scoped, tag = 'input window, operand 0, single buffered']
    #allocation3 [shape = 's32[1]{0}', space=sflag, size = 0x4, scoped, tag = 'scoped memory for tpu_custom_call.1']
    #allocation4 [shape = 's32[1]{0}', space=sflag, size = 0x4, scoped, tag = 'scoped memory for tpu_custom_call.1']
    #allocation5 [shape = 'u8[1572864]{0}', space=vmem, size = 0x180000, scoped, tag = 'input window, operand 1, single buffered']
    #allocation6 [shape = 's32[1]{0}', space=sflag, size = 0x4, scoped, tag = 'scoped memory for tpu_custom_call.1']
    #allocation7 [shape = 'u8[4096]{0}', space=vmem, size = 0x1000, scoped, tag = 'input window, operand 2, single buffered']
    #allocation8 [shape = 'u8[1048576]{0}', space=vmem, size = 0x100000, scoped, tag = 'input window, operand 3, single buffered']
    #allocation9 [shape = 's32[1]{0}', space=sflag, size = 0x4, scoped, tag = 'scoped memory for tpu_custom_call.1']
    #allocation10 [shape = 'u8[2048]{0}', space=vmem, size = 0x800, scoped, tag = 'input window, operand 4, single buffered']
    #allocation11 [shape = 'u8[524288]{0}', space=vmem, size = 0x80000, scoped, tag = 'input window, operand 5, single buffered']
    #allocation12 [shape = 's32[1]{0}', space=sflag, size = 0x4, scoped, tag = 'scoped memory for tpu_custom_call.1']
    #allocation13 [shape = 'u8[2048]{0}', space=vmem, size = 0x800, scoped, tag = 'input window, operand 6, single buffered']
    #allocation14 [shape = 'u8[131072]{0}', space=vmem, size = 0x20000, scoped, tag = 'input window, operand 7, single buffered']
    #allocation15 [shape = 's32[1]{0}', space=sflag, size = 0x4, scoped, tag = 'scoped memory for tpu_custom_call.1']
    #allocation16 [shape = 'u8[512]{0}', space=vmem, size = 0x400, scoped, tag = 'input window, operand 8, single buffered']
    #allocation17 [shape = 'u8[32768]{0}', space=vmem, size = 0x8000, scoped, tag = 'input window, operand 9, single buffered']
    #allocation18 [shape = 's32[1]{0}', space=sflag, size = 0x4, scoped, tag = 'scoped memory for tpu_custom_call.1']
    #allocation19 [shape = 'u8[512]{0}', space=vmem, size = 0x400, scoped, tag = 'input window, operand 10, single buffered']
    #allocation20 [shape = 'u8[4096]{0}', space=vmem, size = 0x1000, scoped, tag = 'output window, operand 0, single buffered']
    %16 = vsyncpa [#allocation3], 0
    %17 = vsyncpa [#allocation6], 0
    %18 = vsyncpa [#allocation9], 0
    %19 = vsyncpa [#allocation12], 0
    %20 = vsyncpa [#allocation15], 0
    %21 = vsyncpa [#allocation18], 0
    %22 = vsyncpa [#allocation4], 0
    // Predicated region
    $region2: #{tpu_custom_call.1} parent=1 // pred_check
      _
    $region3: #{tpu_custom_call.1} parent=1 // pred_check_branch
      %24 = sbr.rel (0) target = $region5
    $region4: #{tpu_custom_call.1} parent=1 // pred_region
      %26 = vsyncadd [#allocation3], 0
      %s28 = sshll.u32 %s0, 4
      %s29 = int_to_ptr.hbm [resolvable:$true] %s28
      %s30 = sshll.u32 [#allocation2], 4
      %s31 = int_to_ptr.vmem [resolvable:$true] %s30
      %33 = dma.hbm_to_vmem [thread:$0]  %s29, 384, %s31, [#allocation3]
    $region5: #{tpu_custom_call.1} parent=1 // pred_fallthru
      _
    // Predicated region
    $region6: #{tpu_custom_call.1} parent=1 // pred_check
      _
    $region7: #{tpu_custom_call.1} parent=1 // pred_check_branch
      %35 = sbr.rel (0) target = $region9
    $region8: #{tpu_custom_call.1} parent=1 // pred_region
      %37 = vsyncadd [#allocation6], 0
      %s38 = sshll.u32 %s1, 4
      %s39 = int_to_ptr.hbm [resolvable:$true] %s38
      %s40 = sshll.u32 [#allocation5], 4
      %s41 = int_to_ptr.vmem [resolvable:$true] %s40
      %46 = dma.hbm_to_vmem [thread:$0]  %s39, 49152, %s41, [#allocation6], 512, 512, 32
    $region9: #{tpu_custom_call.1} parent=1 // pred_fallthru
      _
    // Predicated region
    $region10: #{tpu_custom_call.1} parent=1 // pred_check
      _
    $region11: #{tpu_custom_call.1} parent=1 // pred_check_branch
      %48 = sbr.rel (0) target = $region13
    $region12: #{tpu_custom_call.1} parent=1 // pred_region
      %50 = vsyncadd [#allocation6], 0
      %s52 = sshll.u32 %s2, 4
      %s53 = int_to_ptr.hbm [resolvable:$true] %s52
      %s54 = sshll.u32 [#allocation7], 4
      %s55 = int_to_ptr.vmem [resolvable:$true] %s54
      %57 = dma.hbm_to_vmem [thread:$0]  %s53, 128, %s55, [#allocation6]
    $region13: #{tpu_custom_call.1} parent=1 // pred_fallthru
      _
    // Predicated region
    $region14: #{tpu_custom_call.1} parent=1 // pred_check
      _
    $region15: #{tpu_custom_call.1} parent=1 // pred_check_branch
      %59 = sbr.rel (0) target = $region17
    $region16: #{tpu_custom_call.1} parent=1 // pred_region
      %61 = vsyncadd [#allocation9], 0
      %s62 = sshll.u32 %s3, 4
      %s63 = int_to_ptr.hbm [resolvable:$true] %s62
      %s64 = sshll.u32 [#allocation8], 4
      %s65 = int_to_ptr.vmem [resolvable:$true] %s64
      %70 = dma.hbm_to_vmem [thread:$0]  %s63, 32768, %s65, [#allocation9], 256, 256, 16
    $region17: #{tpu_custom_call.1} parent=1 // pred_fallthru
      _
    // Predicated region
    $region18: #{tpu_custom_call.1} parent=1 // pred_check
      _
    $region19: #{tpu_custom_call.1} parent=1 // pred_check_branch
      %72 = sbr.rel (0) target = $region21
    $region20: #{tpu_custom_call.1} parent=1 // pred_region
      %74 = vsyncadd [#allocation9], 0
      %s76 = sshll.u32 %s4, 4
      %s77 = int_to_ptr.hbm [resolvable:$true] %s76
      %s78 = sshll.u32 [#allocation10], 4
      %s79 = int_to_ptr.vmem [resolvable:$true] %s78
      %81 = dma.hbm_to_vmem [thread:$0]  %s77, 64, %s79, [#allocation9]
    $region21: #{tpu_custom_call.1} parent=1 // pred_fallthru
      _
    // Predicated region
    $region22: #{tpu_custom_call.1} parent=1 // pred_check
      _
    $region23: #{tpu_custom_call.1} parent=1 // pred_check_branch
      %83 = sbr.rel (0) target = $region25
    $region24: #{tpu_custom_call.1} parent=1 // pred_region
      %85 = vsyncadd [#allocation12], 0
      %s86 = sshll.u32 %s5, 4
      %s87 = int_to_ptr.hbm [resolvable:$true] %s86
      %s88 = sshll.u32 [#allocation11], 4
      %s89 = int_to_ptr.vmem [resolvable:$true] %s88
      %94 = dma.hbm_to_vmem [thread:$0]  %s87, 16384, %s89, [#allocation12], 256, 256, 16
    $region25: #{tpu_custom_call.1} parent=1 // pred_fallthru
      _
    // Predicated region
    $region26: #{tpu_custom_call.1} parent=1 // pred_check
      _
    $region27: #{tpu_custom_call.1} parent=1 // pred_check_branch
      %96 = sbr.rel (0) target = $region29
    $region28: #{tpu_custom_call.1} parent=1 // pred_region
      %98 = vsyncadd [#allocation12], 0
      %s100 = sshll.u32 %s6, 4
      %s101 = int_to_ptr.hbm [resolvable:$true] %s100
      %s102 = sshll.u32 [#allocation13], 4
      %s103 = int_to_ptr.vmem [resolvable:$true] %s102
      %105 = dma.hbm_to_vmem [thread:$0]  %s101, 64, %s103, [#allocation12]
    $region29: #{tpu_custom_call.1} parent=1 // pred_fallthru
      _
    // Predicated region
    $region30: #{tpu_custom_call.1} parent=1 // pred_check
      _
    $region31: #{tpu_custom_call.1} parent=1 // pred_check_branch
      %107 = sbr.rel (0) target = $region33
    $region32: #{tpu_custom_call.1} parent=1 // pred_region
      %109 = vsyncadd [#allocation15], 0
      %s110 = sshll.u32 %s7, 4
      %s111 = int_to_ptr.hbm [resolvable:$true] %s110
      %s112 = sshll.u32 [#allocation14], 4
      %s113 = int_to_ptr.vmem [resolvable:$true] %s112
      %118 = dma.hbm_to_vmem [thread:$0]  %s111, 4096, %s113, [#allocation15], 64, 64, 4
    $region33: #{tpu_custom_call.1} parent=1 // pred_fallthru
      _
    // Predicated region
    $region34: #{tpu_custom_call.1} parent=1 // pred_check
      _
    $region35: #{tpu_custom_call.1} parent=1 // pred_check_branch
      %120 = sbr.rel (0) target = $region37
    $region36: #{tpu_custom_call.1} parent=1 // pred_region
      %122 = vsyncadd [#allocation15], 0
      %s124 = sshll.u32 %s8, 4
      %s125 = int_to_ptr.hbm [resolvable:$true] %s124
      %s126 = sshll.u32 [#allocation16], 4
      %s127 = int_to_ptr.vmem [resolvable:$true] %s126
      %129 = dma.hbm_to_vmem [thread:$0]  %s125, 16, %s127, [#allocation15]
    $region37: #{tpu_custom_call.1} parent=1 // pred_fallthru
      _
    // Predicated region
    $region38: #{tpu_custom_call.1} parent=1 // pred_check
      _
    $region39: #{tpu_custom_call.1} parent=1 // pred_check_branch
      %131 = sbr.rel (0) target = $region41
    $region40: #{tpu_custom_call.1} parent=1 // pred_region
      %133 = vsyncadd [#allocation18], 0
      %s134 = sshll.u32 %s9, 4
      %s135 = int_to_ptr.hbm [resolvable:$true] %s134
      %s136 = sshll.u32 [#allocation17], 4
      %s137 = int_to_ptr.vmem [resolvable:$true] %s136
      %142 = dma.hbm_to_vmem [thread:$0]  %s135, 1024, %s137, [#allocation18], 64, 64, 4
    $region41: #{tpu_custom_call.1} parent=1 // pred_fallthru
      _
    // Predicated region
    $region42: #{tpu_custom_call.1} parent=1 // pred_check
      _
    $region43: #{tpu_custom_call.1} parent=1 // pred_check_branch
      %144 = sbr.rel (0) target = $region45
    $region44: #{tpu_custom_call.1} parent=1 // pred_region
      %146 = vsyncadd [#allocation18], 0
      %s148 = sshll.u32 %s10, 4
      %s149 = int_to_ptr.hbm [resolvable:$true] %s148
      %s150 = sshll.u32 [#allocation19], 4
      %s151 = int_to_ptr.vmem [resolvable:$true] %s150
      %153 = dma.hbm_to_vmem [thread:$0]  %s149, 16, %s151, [#allocation18]
    $region45: #{tpu_custom_call.1} parent=1 // pred_fallthru
      _
    // Predicated region
    $region46: #{tpu_custom_call.1} parent=1 // pred_check
      _
    $region47: #{tpu_custom_call.1} parent=1 // pred_check_branch
      %155 = sbr.rel (0) target = $region49
    $region48: #{tpu_custom_call.1} parent=1 // pred_region
      %157 = dma.done [#allocation3], 384
    $region49: #{tpu_custom_call.1} parent=1 // pred_fallthru
      _
    // Predicated region
    $region50: #{tpu_custom_call.1} parent=1 // pred_check
      _
    $region51: #{tpu_custom_call.1} parent=1 // pred_check_branch
      %159 = sbr.rel (0) target = $region53
    $region52: #{tpu_custom_call.1} parent=1 // pred_region
      %161 = dma.done [#allocation6], 49152
    $region53: #{tpu_custom_call.1} parent=1 // pred_fallthru
      _
    // Predicated region
    $region54: #{tpu_custom_call.1} parent=1 // pred_check
      _
    $region55: #{tpu_custom_call.1} parent=1 // pred_check_branch
      %163 = sbr.rel (0) target = $region57
    $region56: #{tpu_custom_call.1} parent=1 // pred_region
      %165 = dma.done [#allocation6], 128
    $region57: #{tpu_custom_call.1} parent=1 // pred_fallthru
      _
    // Predicated region
    $region58: #{tpu_custom_call.1} parent=1 // pred_check
      _
    $region59: #{tpu_custom_call.1} parent=1 // pred_check_branch
      %167 = sbr.rel (0) target = $region61
    $region60: #{tpu_custom_call.1} parent=1 // pred_region
      %169 = dma.done [#allocation9], 32768
    $region61: #{tpu_custom_call.1} parent=1 // pred_fallthru
      _
    // Predicated region
    $region62: #{tpu_custom_call.1} parent=1 // pred_check
      _
    $region63: #{tpu_custom_call.1} parent=1 // pred_check_branch
      %171 = sbr.rel (0) target = $region65
    $region64: #{tpu_custom_call.1} parent=1 // pred_region
      %173 = dma.done [#allocation9], 64
    $region65: #{tpu_custom_call.1} parent=1 // pred_fallthru
      _
    // Predicated region
    $region66: #{tpu_custom_call.1} parent=1 // pred_check
      _
    $region67: #{tpu_custom_call.1} parent=1 // pred_check_branch
      %175 = sbr.rel (0) target = $region69
    $region68: #{tpu_custom_call.1} parent=1 // pred_region
      %177 = dma.done [#allocation12], 16384
    $region69: #{tpu_custom_call.1} parent=1 // pred_fallthru
      _
    // Predicated region
    $region70: #{tpu_custom_call.1} parent=1 // pred_check
      _
    $region71: #{tpu_custom_call.1} parent=1 // pred_check_branch
      %179 = sbr.rel (0) target = $region73
    $region72: #{tpu_custom_call.1} parent=1 // pred_region
      %181 = dma.done [#allocation12], 64
    $region73: #{tpu_custom_call.1} parent=1 // pred_fallthru
      _
    // Predicated region
    $region74: #{tpu_custom_call.1} parent=1 // pred_check
      _
    $region75: #{tpu_custom_call.1} parent=1 // pred_check_branch
      %183 = sbr.rel (0) target = $region77
    $region76: #{tpu_custom_call.1} parent=1 // pred_region
      %185 = dma.done [#allocation15], 4096
    $region77: #{tpu_custom_call.1} parent=1 // pred_fallthru
      _
    // Predicated region
    $region78: #{tpu_custom_call.1} parent=1 // pred_check
      _
    $region79: #{tpu_custom_call.1} parent=1 // pred_check_branch
      %187 = sbr.rel (0) target = $region81
    $region80: #{tpu_custom_call.1} parent=1 // pred_region
      %189 = dma.done [#allocation15], 16
    $region81: #{tpu_custom_call.1} parent=1 // pred_fallthru
      _
    // Predicated region
    $region82: #{tpu_custom_call.1} parent=1 // pred_check
      _
    $region83: #{tpu_custom_call.1} parent=1 // pred_check_branch
      %191 = sbr.rel (0) target = $region85
    $region84: #{tpu_custom_call.1} parent=1 // pred_region
      %193 = dma.done [#allocation18], 1024
    $region85: #{tpu_custom_call.1} parent=1 // pred_fallthru
      _
    // Predicated region
    $region86: #{tpu_custom_call.1} parent=1 // pred_check
      _
    $region87: #{tpu_custom_call.1} parent=1 // pred_check_branch
      %195 = sbr.rel (0) target = $region89
    $region88: #{tpu_custom_call.1} parent=1 // pred_region
      %197 = dma.done [#allocation18], 16
    $region89: #{tpu_custom_call.1} parent=1 // pred_fallthru
      _
    %v198 = vld [vmem:[#allocation2] sm:$0xff]
    %v199 = vld [vmem:[#allocation2 + $0x8] sm:$0xff]
    %v200 = vld [vmem:[#allocation2 + $0x10] sm:$0xff]
    %v201 = vld [vmem:[#allocation5] sm:$0xff]
    %v202 = vld [vmem:[#allocation5 + $0x8] sm:$0xff]
    %v203 = vld [vmem:[#allocation5 + $0x10] sm:$0xff]
    %v204 = vld [vmem:[#allocation5 + $0x18] sm:$0xff]
    %v205 = vld [vmem:[#allocation5 + $0x20] sm:$0xff]
    %v206 = vld [vmem:[#allocation5 + $0x28] sm:$0xff]
    %v207 = vld [vmem:[#allocation5 + $0x30] sm:$0xff]
    %v208 = vld [vmem:[#allocation5 + $0x38] sm:$0xff]
    %v209 = vld [vmem:[#allocation5 + $0x40] sm:$0xff]
    %v210 = vld [vmem:[#allocation5 + $0x48] sm:$0xff]
    %v211 = vld [vmem:[#allocation5 + $0x50] sm:$0xff]
    %v212 = vld [vmem:[#allocation5 + $0x58] sm:$0xff]
    %v213 = vld [vmem:[#allocation5 + $0x60] sm:$0xff]
    %v214 = vld [vmem:[#allocation5 + $0x68] sm:$0xff]
    %v215 = vld [vmem:[#allocation5 + $0x70] sm:$0xff]
    %v216 = vld [vmem:[#allocation5 + $0x78] sm:$0xff]
    %v217 = vld [vmem:[#allocation5 + $0x80] sm:$0xff]
    %v218 = vld [vmem:[#allocation5 + $0x88] sm:$0xff]
    %v219 = vld [vmem:[#allocation5 + $0x90] sm:$0xff]
    %v220 = vld [vmem:[#allocation5 + $0x98] sm:$0xff]
    %v221 = vld [vmem:[#allocation5 + $0xa0] sm:$0xff]
    %v222 = vld [vmem:[#allocation5 + $0xa8] sm:$0xff]
    %v223 = vld [vmem:[#allocation5 + $0xb0] sm:$0xff]
    %v224 = vld [vmem:[#allocation5 + $0xb8] sm:$0xff]
    %v225 = vld [vmem:[#allocation5 + $0xc0] sm:$0xff]
    %v226 = vld [vmem:[#allocation5 + $0xc8] sm:$0xff]
    %v227 = vld [vmem:[#allocation5 + $0xd0] sm:$0xff]
    %v228 = vld [vmem:[#allocation5 + $0xd8] sm:$0xff]
    %v229 = vld [vmem:[#allocation5 + $0xe0] sm:$0xff]
    %v230 = vld [vmem:[#allocation5 + $0xe8] sm:$0xff]
    %v231 = vld [vmem:[#allocation5 + $0xf0] sm:$0xff]
    %v232 = vld [vmem:[#allocation5 + $0xf8] sm:$0xff]
    %v233 = vld [vmem:[#allocation5 + $0x100] sm:$0xff]
    %v234 = vld [vmem:[#allocation5 + $0x108] sm:$0xff]
    %v235 = vld [vmem:[#allocation5 + $0x110] sm:$0xff]
    %v236 = vld [vmem:[#allocation5 + $0x118] sm:$0xff]
    %v237 = vld [vmem:[#allocation5 + $0x120] sm:$0xff]
    %v238 = vld [vmem:[#allocation5 + $0x128] sm:$0xff]
    %v239 = vld [vmem:[#allocation5 + $0x130] sm:$0xff]
    %v240 = vld [vmem:[#allocation5 + $0x138] sm:$0xff]
    %v241 = vld [vmem:[#allocation5 + $0x140] sm:$0xff]
    %v242 = vld [vmem:[#allocation5 + $0x148] sm:$0xff]
    %v243 = vld [vmem:[#allocation5 + $0x150] sm:$0xff]
    %v244 = vld [vmem:[#allocation5 + $0x158] sm:$0xff]
    %v245 = vld [vmem:[#allocation5 + $0x160] sm:$0xff]
    %v246 = vld [vmem:[#allocation5 + $0x168] sm:$0xff]
    %v247 = vld [vmem:[#allocation5 + $0x170] sm:$0xff]
    %v248 = vld [vmem:[#allocation5 + $0x178] sm:$0xff]
    %v249 = vld [vmem:[#allocation5 + $0x180] sm:$0xff]
    %v250 = vld [vmem:[#allocation5 + $0x188] sm:$0xff]
    %v251 = vld [vmem:[#allocation5 + $0x190] sm:$0xff]
    %v252 = vld [vmem:[#allocation5 + $0x198] sm:$0xff]
    %v253 = vld [vmem:[#allocation5 + $0x1a0] sm:$0xff]
    %v254 = vld [vmem:[#allocation5 + $0x1a8] sm:$0xff]
    %v255 = vld [vmem:[#allocation5 + $0x1b0] sm:$0xff]
    %v256 = vld [vmem:[#allocation5 + $0x1b8] sm:$0xff]
    %v257 = vld [vmem:[#allocation5 + $0x1c0] sm:$0xff]
    %v258 = vld [vmem:[#allocation5 + $0x1c8] sm:$0xff]
    %v259 = vld [vmem:[#allocation5 + $0x1d0] sm:$0xff]
    %v260 = vld [vmem:[#allocation5 + $0x1d8] sm:$0xff]
    %v261 = vld [vmem:[#allocation5 + $0x1e0] sm:$0xff]
    %v262 = vld [vmem:[#allocation5 + $0x1e8] sm:$0xff]
    %v263 = vld [vmem:[#allocation5 + $0x1f0] sm:$0xff]
    %v264 = vld [vmem:[#allocation5 + $0x1f8] sm:$0xff]
    %v265 = vld [vmem:[#allocation5 + $0x200] sm:$0xff]
    %v266 = vld [vmem:[#allocation5 + $0x208] sm:$0xff]
    %v267 = vld [vmem:[#allocation5 + $0x210] sm:$0xff]
    %v268 = vld [vmem:[#allocation5 + $0x218] sm:$0xff]
    %v269 = vld [vmem:[#allocation5 + $0x220] sm:$0xff]
    %v270 = vld [vmem:[#allocation5 + $0x228] sm:$0xff]
    %v271 = vld [vmem:[#allocation5 + $0x230] sm:$0xff]
    %v272 = vld [vmem:[#allocation5 + $0x238] sm:$0xff]
    %v273 = vld [vmem:[#allocation5 + $0x240] sm:$0xff]
    %v274 = vld [vmem:[#allocation5 + $0x248] sm:$0xff]
    %v275 = vld [vmem:[#allocation5 + $0x250] sm:$0xff]
    %v276 = vld [vmem:[#allocation5 + $0x258] sm:$0xff]
    %v277 = vld [vmem:[#allocation5 + $0x260] sm:$0xff]
    %v278 = vld [vmem:[#allocation5 + $0x268] sm:$0xff]
    %v279 = vld [vmem:[#allocation5 + $0x270] sm:$0xff]
    %v280 = vld [vmem:[#allocation5 + $0x278] sm:$0xff]
    %v281 = vld [vmem:[#allocation5 + $0x280] sm:$0xff]
    %v282 = vld [vmem:[#allocation5 + $0x288] sm:$0xff]
    %v283 = vld [vmem:[#allocation5 + $0x290] sm:$0xff]
    %v284 = vld [vmem:[#allocation5 + $0x298] sm:$0xff]
    %v285 = vld [vmem:[#allocation5 + $0x2a0] sm:$0xff]
    %v286 = vld [vmem:[#allocation5 + $0x2a8] sm:$0xff]
    %v287 = vld [vmem:[#allocation5 + $0x2b0] sm:$0xff]
    %v288 = vld [vmem:[#allocation5 + $0x2b8] sm:$0xff]
    %v289 = vld [vmem:[#allocation5 + $0x2c0] sm:$0xff]
    %v290 = vld [vmem:[#allocation5 + $0x2c8] sm:$0xff]
    %v291 = vld [vmem:[#allocation5 + $0x2d0] sm:$0xff]
    %v292 = vld [vmem:[#allocation5 + $0x2d8] sm:$0xff]
    %v293 = vld [vmem:[#allocation5 + $0x2e0] sm:$0xff]
    %v294 = vld [vmem:[#allocation5 + $0x2e8] sm:$0xff]
    %v295 = vld [vmem:[#allocation5 + $0x2f0] sm:$0xff]
    %v296 = vld [vmem:[#allocation5 + $0x2f8] sm:$0xff]
    %v297 = vld [vmem:[#allocation5 + $0x300] sm:$0xff]
    %v298 = vld [vmem:[#allocation5 + $0x308] sm:$0xff]
    %v299 = vld [vmem:[#allocation5 + $0x310] sm:$0xff]
    %v300 = vld [vmem:[#allocation5 + $0x318] sm:$0xff]
    %v301 = vld [vmem:[#allocation5 + $0x320] sm:$0xff]
    %v302 = vld [vmem:[#allocation5 + $0x328] sm:$0xff]
    %v303 = vld [vmem:[#allocation5 + $0x330] sm:$0xff]
    %v304 = vld [vmem:[#allocation5 + $0x338] sm:$0xff]
    %v305 = vld [vmem:[#allocation5 + $0x340] sm:$0xff]
    %v306 = vld [vmem:[#allocation5 + $0x348] sm:$0xff]
    %v307 = vld [vmem:[#allocation5 + $0x350] sm:$0xff]
    %v308 = vld [vmem:[#allocation5 + $0x358] sm:$0xff]
    %v309 = vld [vmem:[#allocation5 + $0x360] sm:$0xff]
    %v310 = vld [vmem:[#allocation5 + $0x368] sm:$0xff]
    %v311 = vld [vmem:[#allocation5 + $0x370] sm:$0xff]
    %v312 = vld [vmem:[#allocation5 + $0x378] sm:$0xff]
    %v313 = vld [vmem:[#allocation5 + $0x380] sm:$0xff]
    %v314 = vld [vmem:[#allocation5 + $0x388] sm:$0xff]
    %v315 = vld [vmem:[#allocation5 + $0x390] sm:$0xff]
    %v316 = vld [vmem:[#allocation5 + $0x398] sm:$0xff]
    %v317 = vld [vmem:[#allocation5 + $0x3a0] sm:$0xff]
    %v318 = vld [vmem:[#allocation5 + $0x3a8] sm:$0xff]
    %v319 = vld [vmem:[#allocation5 + $0x3b0] sm:$0xff]
    %v320 = vld [vmem:[#allocation5 + $0x3b8] sm:$0xff]
    %v321 = vld [vmem:[#allocation5 + $0x3c0] sm:$0xff]
    %v322 = vld [vmem:[#allocation5 + $0x3c8] sm:$0xff]
    %v323 = vld [vmem:[#allocation5 + $0x3d0] sm:$0xff]
    %v324 = vld [vmem:[#allocation5 + $0x3d8] sm:$0xff]
    %v325 = vld [vmem:[#allocation5 + $0x3e0] sm:$0xff]
    %v326 = vld [vmem:[#allocation5 + $0x3e8] sm:$0xff]
    %v327 = vld [vmem:[#allocation5 + $0x3f0] sm:$0xff]
    %v328 = vld [vmem:[#allocation5 + $0x3f8] sm:$0xff]
    %v329 = vld [vmem:[#allocation5 + $0x400] sm:$0xff]
    %v330 = vld [vmem:[#allocation5 + $0x408] sm:$0xff]
    %v331 = vld [vmem:[#allocation5 + $0x410] sm:$0xff]
    %v332 = vld [vmem:[#allocation5 + $0x418] sm:$0xff]
    %v333 = vld [vmem:[#allocation5 + $0x420] sm:$0xff]
    %v334 = vld [vmem:[#allocation5 + $0x428] sm:$0xff]
    %v335 = vld [vmem:[#allocation5 + $0x430] sm:$0xff]
    %v336 = vld [vmem:[#allocation5 + $0x438] sm:$0xff]
    %v337 = vld [vmem:[#allocation5 + $0x440] sm:$0xff]
    %v338 = vld [vmem:[#allocation5 + $0x448] sm:$0xff]
    %v339 = vld [vmem:[#allocation5 + $0x450] sm:$0xff]
    %v340 = vld [vmem:[#allocation5 + $0x458] sm:$0xff]
    %v341 = vld [vmem:[#allocation5 + $0x460] sm:$0xff]
    %v342 = vld [vmem:[#allocation5 + $0x468] sm:$0xff]
    %v343 = vld [vmem:[#allocation5 + $0x470] sm:$0xff]
    %v344 = vld [vmem:[#allocation5 + $0x478] sm:$0xff]
    %v345 = vld [vmem:[#allocation5 + $0x480] sm:$0xff]
    %v346 = vld [vmem:[#allocation5 + $0x488] sm:$0xff]
    %v347 = vld [vmem:[#allocation5 + $0x490] sm:$0xff]
    %v348 = vld [vmem:[#allocation5 + $0x498] sm:$0xff]
    %v349 = vld [vmem:[#allocation5 + $0x4a0] sm:$0xff]
    %v350 = vld [vmem:[#allocation5 + $0x4a8] sm:$0xff]
    %v351 = vld [vmem:[#allocation5 + $0x4b0] sm:$0xff]
    %v352 = vld [vmem:[#allocation5 + $0x4b8] sm:$0xff]
    %v353 = vld [vmem:[#allocation5 + $0x4c0] sm:$0xff]
    %v354 = vld [vmem:[#allocation5 + $0x4c8] sm:$0xff]
    %v355 = vld [vmem:[#allocation5 + $0x4d0] sm:$0xff]
    %v356 = vld [vmem:[#allocation5 + $0x4d8] sm:$0xff]
    %v357 = vld [vmem:[#allocation5 + $0x4e0] sm:$0xff]
    %v358 = vld [vmem:[#allocation5 + $0x4e8] sm:$0xff]
    %v359 = vld [vmem:[#allocation5 + $0x4f0] sm:$0xff]
    %v360 = vld [vmem:[#allocation5 + $0x4f8] sm:$0xff]
    %v361 = vld [vmem:[#allocation5 + $0x500] sm:$0xff]
    %v362 = vld [vmem:[#allocation5 + $0x508] sm:$0xff]
    %v363 = vld [vmem:[#allocation5 + $0x510] sm:$0xff]
    %v364 = vld [vmem:[#allocation5 + $0x518] sm:$0xff]
    %v365 = vld [vmem:[#allocation5 + $0x520] sm:$0xff]
    %v366 = vld [vmem:[#allocation5 + $0x528] sm:$0xff]
    %v367 = vld [vmem:[#allocation5 + $0x530] sm:$0xff]
    %v368 = vld [vmem:[#allocation5 + $0x538] sm:$0xff]
    %v369 = vld [vmem:[#allocation5 + $0x540] sm:$0xff]
    %v370 = vld [vmem:[#allocation5 + $0x548] sm:$0xff]
    %v371 = vld [vmem:[#allocation5 + $0x550] sm:$0xff]
    %v372 = vld [vmem:[#allocation5 + $0x558] sm:$0xff]
    %v373 = vld [vmem:[#allocation5 + $0x560] sm:$0xff]
    %v374 = vld [vmem:[#allocation5 + $0x568] sm:$0xff]
    %v375 = vld [vmem:[#allocation5 + $0x570] sm:$0xff]
    %v376 = vld [vmem:[#allocation5 + $0x578] sm:$0xff]
    %v377 = vld [vmem:[#allocation5 + $0x580] sm:$0xff]
    %v378 = vld [vmem:[#allocation5 + $0x588] sm:$0xff]
    %v379 = vld [vmem:[#allocation5 + $0x590] sm:$0xff]
    %v380 = vld [vmem:[#allocation5 + $0x598] sm:$0xff]
    %v381 = vld [vmem:[#allocation5 + $0x5a0] sm:$0xff]
    %v382 = vld [vmem:[#allocation5 + $0x5a8] sm:$0xff]
    %v383 = vld [vmem:[#allocation5 + $0x5b0] sm:$0xff]
    %v384 = vld [vmem:[#allocation5 + $0x5b8] sm:$0xff]
    %v385 = vld [vmem:[#allocation5 + $0x5c0] sm:$0xff]
    %v386 = vld [vmem:[#allocation5 + $0x5c8] sm:$0xff]
    %v387 = vld [vmem:[#allocation5 + $0x5d0] sm:$0xff]
    %v388 = vld [vmem:[#allocation5 + $0x5d8] sm:$0xff]
    %v389 = vld [vmem:[#allocation5 + $0x5e0] sm:$0xff]
    %v390 = vld [vmem:[#allocation5 + $0x5e8] sm:$0xff]
    %v391 = vld [vmem:[#allocation5 + $0x5f0] sm:$0xff]
    %v392 = vld [vmem:[#allocation5 + $0x5f8] sm:$0xff]
    %v393 = vld [vmem:[#allocation5 + $0x600] sm:$0xff]
    %v394 = vld [vmem:[#allocation5 + $0x608] sm:$0xff]
    %v395 = vld [vmem:[#allocation5 + $0x610] sm:$0xff]
    %v396 = vld [vmem:[#allocation5 + $0x618] sm:$0xff]
    %v397 = vld [vmem:[#allocation5 + $0x620] sm:$0xff]
    %v398 = vld [vmem:[#allocation5 + $0x628] sm:$0xff]
    %v399 = vld [vmem:[#allocation5 + $0x630] sm:$0xff]
    %v400 = vld [vmem:[#allocation5 + $0x638] sm:$0xff]
    %v401 = vld [vmem:[#allocation5 + $0x640] sm:$0xff]
    %v402 = vld [vmem:[#allocation5 + $0x648] sm:$0xff]
    %v403 = vld [vmem:[#allocation5 + $0x650] sm:$0xff]
    %v404 = vld [vmem:[#allocation5 + $0x658] sm:$0xff]
    %v405 = vld [vmem:[#allocation5 + $0x660] sm:$0xff]
    %v406 = vld [vmem:[#allocation5 + $0x668] sm:$0xff]
    %v407 = vld [vmem:[#allocation5 + $0x670] sm:$0xff]
    %v408 = vld [vmem:[#allocation5 + $0x678] sm:$0xff]
    %v409 = vld [vmem:[#allocation5 + $0x680] sm:$0xff]
    %v410 = vld [vmem:[#allocation5 + $0x688] sm:$0xff]
    %v411 = vld [vmem:[#allocation5 + $0x690] sm:$0xff]
    %v412 = vld [vmem:[#allocation5 + $0x698] sm:$0xff]
    %v413 = vld [vmem:[#allocation5 + $0x6a0] sm:$0xff]
    %v414 = vld [vmem:[#allocation5 + $0x6a8] sm:$0xff]
    %v415 = vld [vmem:[#allocation5 + $0x6b0] sm:$0xff]
    %v416 = vld [vmem:[#allocation5 + $0x6b8] sm:$0xff]
    %v417 = vld [vmem:[#allocation5 + $0x6c0] sm:$0xff]
    %v418 = vld [vmem:[#allocation5 + $0x6c8] sm:$0xff]
    %v419 = vld [vmem:[#allocation5 + $0x6d0] sm:$0xff]
    %v420 = vld [vmem:[#allocation5 + $0x6d8] sm:$0xff]
    %v421 = vld [vmem:[#allocation5 + $0x6e0] sm:$0xff]
    %v422 = vld [vmem:[#allocation5 + $0x6e8] sm:$0xff]
    %v423 = vld [vmem:[#allocation5 + $0x6f0] sm:$0xff]
    %v424 = vld [vmem:[#allocation5 + $0x6f8] sm:$0xff]
    %v425 = vld [vmem:[#allocation5 + $0x700] sm:$0xff]
    %v426 = vld [vmem:[#allocation5 + $0x708] sm:$0xff]
    %v427 = vld [vmem:[#allocation5 + $0x710] sm:$0xff]
    %v428 = vld [vmem:[#allocation5 + $0x718] sm:$0xff]
    %v429 = vld [vmem:[#allocation5 + $0x720] sm:$0xff]
    %v430 = vld [vmem:[#allocation5 + $0x728] sm:$0xff]
    %v431 = vld [vmem:[#allocation5 + $0x730] sm:$0xff]
    %v432 = vld [vmem:[#allocation5 + $0x738] sm:$0xff]
    %v433 = vld [vmem:[#allocation5 + $0x740] sm:$0xff]
    %v434 = vld [vmem:[#allocation5 + $0x748] sm:$0xff]
    %v435 = vld [vmem:[#allocation5 + $0x750] sm:$0xff]
    %v436 = vld [vmem:[#allocation5 + $0x758] sm:$0xff]
    %v437 = vld [vmem:[#allocation5 + $0x760] sm:$0xff]
    %v438 = vld [vmem:[#allocation5 + $0x768] sm:$0xff]
    %v439 = vld [vmem:[#allocation5 + $0x770] sm:$0xff]
    %v440 = vld [vmem:[#allocation5 + $0x778] sm:$0xff]
    %v441 = vld [vmem:[#allocation5 + $0x780] sm:$0xff]
    %v442 = vld [vmem:[#allocation5 + $0x788] sm:$0xff]
    %v443 = vld [vmem:[#allocation5 + $0x790] sm:$0xff]
    %v444 = vld [vmem:[#allocation5 + $0x798] sm:$0xff]
    %v445 = vld [vmem:[#allocation5 + $0x7a0] sm:$0xff]
    %v446 = vld [vmem:[#allocation5 + $0x7a8] sm:$0xff]
    %v447 = vld [vmem:[#allocation5 + $0x7b0] sm:$0xff]
    %v448 = vld [vmem:[#allocation5 + $0x7b8] sm:$0xff]
    %v449 = vld [vmem:[#allocation5 + $0x7c0] sm:$0xff]
    %v450 = vld [vmem:[#allocation5 + $0x7c8] sm:$0xff]
    %v451 = vld [vmem:[#allocation5 + $0x7d0] sm:$0xff]
    %v452 = vld [vmem:[#allocation5 + $0x7d8] sm:$0xff]
    %v453 = vld [vmem:[#allocation5 + $0x7e0] sm:$0xff]
    %v454 = vld [vmem:[#allocation5 + $0x7e8] sm:$0xff]
    %v455 = vld [vmem:[#allocation5 + $0x7f0] sm:$0xff]
    %v456 = vld [vmem:[#allocation5 + $0x7f8] sm:$0xff]
    %v457 = vld [vmem:[#allocation5 + $0x800] sm:$0xff]
    %v458 = vld [vmem:[#allocation5 + $0x808] sm:$0xff]
    %v459 = vld [vmem:[#allocation5 + $0x810] sm:$0xff]
    %v460 = vld [vmem:[#allocation5 + $0x818] sm:$0xff]
    %v461 = vld [vmem:[#allocation5 + $0x820] sm:$0xff]
    %v462 = vld [vmem:[#allocation5 + $0x828] sm:$0xff]
    %v463 = vld [vmem:[#allocation5 + $0x830] sm:$0xff]
    %v464 = vld [vmem:[#allocation5 + $0x838] sm:$0xff]
    %v465 = vld [vmem:[#allocation5 + $0x840] sm:$0xff]
    %v466 = vld [vmem:[#allocation5 + $0x848] sm:$0xff]
    %v467 = vld [vmem:[#allocation5 + $0x850] sm:$0xff]
    %v468 = vld [vmem:[#allocation5 + $0x858] sm:$0xff]
    %v469 = vld [vmem:[#allocation5 + $0x860] sm:$0xff]
    %v470 = vld [vmem:[#allocation5 + $0x868] sm:$0xff]
    %v471 = vld [vmem:[#allocation5 + $0x870] sm:$0xff]
    %v472 = vld [vmem:[#allocation5 + $0x878] sm:$0xff]
    %v473 = vld [vmem:[#allocation5 + $0x880] sm:$0xff]
    %v474 = vld [vmem:[#allocation5 + $0x888] sm:$0xff]
    %v475 = vld [vmem:[#allocation5 + $0x890] sm:$0xff]
    %v476 = vld [vmem:[#allocation5 + $0x898] sm:$0xff]
    %v477 = vld [vmem:[#allocation5 + $0x8a0] sm:$0xff]
    %v478 = vld [vmem:[#allocation5 + $0x8a8] sm:$0xff]
    %v479 = vld [vmem:[#allocation5 + $0x8b0] sm:$0xff]
    %v480 = vld [vmem:[#allocation5 + $0x8b8] sm:$0xff]
    %v481 = vld [vmem:[#allocation5 + $0x8c0] sm:$0xff]
    %v482 = vld [vmem:[#allocation5 + $0x8c8] sm:$0xff]
    %v483 = vld [vmem:[#allocation5 + $0x8d0] sm:$0xff]
    %v484 = vld [vmem:[#allocation5 + $0x8d8] sm:$0xff]
    %v485 = vld [vmem:[#allocation5 + $0x8e0] sm:$0xff]
    %v486 = vld [vmem:[#allocation5 + $0x8e8] sm:$0xff]
    %v487 = vld [vmem:[#allocation5 + $0x8f0] sm:$0xff]
    %v488 = vld [vmem:[#allocation5 + $0x8f8] sm:$0xff]
    %v489 = vld [vmem:[#allocation5 + $0x900] sm:$0xff]
    %v490 = vld [vmem:[#allocation5 + $0x908] sm:$0xff]
    %v491 = vld [vmem:[#allocation5 + $0x910] sm:$0xff]
    %v492 = vld [vmem:[#allocation5 + $0x918] sm:$0xff]
    %v493 = vld [vmem:[#allocation5 + $0x920] sm:$0xff]
    %v494 = vld [vmem:[#allocation5 + $0x928] sm:$0xff]
    %v495 = vld [vmem:[#allocation5 + $0x930] sm:$0xff]
    %v496 = vld [vmem:[#allocation5 + $0x938] sm:$0xff]
    %v497 = vld [vmem:[#allocation5 + $0x940] sm:$0xff]
    %v498 = vld [vmem:[#allocation5 + $0x948] sm:$0xff]
    %v499 = vld [vmem:[#allocation5 + $0x950] sm:$0xff]
    %v500 = vld [vmem:[#allocation5 + $0x958] sm:$0xff]
    %v501 = vld [vmem:[#allocation5 + $0x960] sm:$0xff]
    %v502 = vld [vmem:[#allocation5 + $0x968] sm:$0xff]
    %v503 = vld [vmem:[#allocation5 + $0x970] sm:$0xff]
    %v504 = vld [vmem:[#allocation5 + $0x978] sm:$0xff]
    %v505 = vld [vmem:[#allocation5 + $0x980] sm:$0xff]
    %v506 = vld [vmem:[#allocation5 + $0x988] sm:$0xff]
    %v507 = vld [vmem:[#allocation5 + $0x990] sm:$0xff]
    %v508 = vld [vmem:[#allocation5 + $0x998] sm:$0xff]
    %v509 = vld [vmem:[#allocation5 + $0x9a0] sm:$0xff]
    %v510 = vld [vmem:[#allocation5 + $0x9a8] sm:$0xff]
    %v511 = vld [vmem:[#allocation5 + $0x9b0] sm:$0xff]
    %v512 = vld [vmem:[#allocation5 + $0x9b8] sm:$0xff]
    %v513 = vld [vmem:[#allocation5 + $0x9c0] sm:$0xff]
    %v514 = vld [vmem:[#allocation5 + $0x9c8] sm:$0xff]
    %v515 = vld [vmem:[#allocation5 + $0x9d0] sm:$0xff]
    %v516 = vld [vmem:[#allocation5 + $0x9d8] sm:$0xff]
    %v517 = vld [vmem:[#allocation5 + $0x9e0] sm:$0xff]
    %v518 = vld [vmem:[#allocation5 + $0x9e8] sm:$0xff]
    %v519 = vld [vmem:[#allocation5 + $0x9f0] sm:$0xff]
    %v520 = vld [vmem:[#allocation5 + $0x9f8] sm:$0xff]
    %v521 = vld [vmem:[#allocation5 + $0xa00] sm:$0xff]
    %v522 = vld [vmem:[#allocation5 + $0xa08] sm:$0xff]
    %v523 = vld [vmem:[#allocation5 + $0xa10] sm:$0xff]
    %v524 = vld [vmem:[#allocation5 + $0xa18] sm:$0xff]
    %v525 = vld [vmem:[#allocation5 + $0xa20] sm:$0xff]
    %v526 = vld [vmem:[#allocation5 + $0xa28] sm:$0xff]
    %v527 = vld [vmem:[#allocation5 + $0xa30] sm:$0xff]
    %v528 = vld [vmem:[#allocation5 + $0xa38] sm:$0xff]
    %v529 = vld [vmem:[#allocation5 + $0xa40] sm:$0xff]
    %v530 = vld [vmem:[#allocation5 + $0xa48] sm:$0xff]
    %v531 = vld [vmem:[#allocation5 + $0xa50] sm:$0xff]
    %v532 = vld [vmem:[#allocation5 + $0xa58] sm:$0xff]
    %v533 = vld [vmem:[#allocation5 + $0xa60] sm:$0xff]
    %v534 = vld [vmem:[#allocation5 + $0xa68] sm:$0xff]
    %v535 = vld [vmem:[#allocation5 + $0xa70] sm:$0xff]
    %v536 = vld [vmem:[#allocation5 + $0xa78] sm:$0xff]
    %v537 = vld [vmem:[#allocation5 + $0xa80] sm:$0xff]
    %v538 = vld [vmem:[#allocation5 + $0xa88] sm:$0xff]
    %v539 = vld [vmem:[#allocation5 + $0xa90] sm:$0xff]
    %v540 = vld [vmem:[#allocation5 + $0xa98] sm:$0xff]
    %v541 = vld [vmem:[#allocation5 + $0xaa0] sm:$0xff]
    %v542 = vld [vmem:[#allocation5 + $0xaa8] sm:$0xff]
    %v543 = vld [vmem:[#allocation5 + $0xab0] sm:$0xff]
    %v544 = vld [vmem:[#allocation5 + $0xab8] sm:$0xff]
    %v545 = vld [vmem:[#allocation5 + $0xac0] sm:$0xff]
    %v546 = vld [vmem:[#allocation5 + $0xac8] sm:$0xff]
    %v547 = vld [vmem:[#allocation5 + $0xad0] sm:$0xff]
    %v548 = vld [vmem:[#allocation5 + $0xad8] sm:$0xff]
    %v549 = vld [vmem:[#allocation5 + $0xae0] sm:$0xff]
    %v550 = vld [vmem:[#allocation5 + $0xae8] sm:$0xff]
    %v551 = vld [vmem:[#allocation5 + $0xaf0] sm:$0xff]
    %v552 = vld [vmem:[#allocation5 + $0xaf8] sm:$0xff]
    %v553 = vld [vmem:[#allocation5 + $0xb00] sm:$0xff]
    %v554 = vld [vmem:[#allocation5 + $0xb08] sm:$0xff]
    %v555 = vld [vmem:[#allocation5 + $0xb10] sm:$0xff]
    %v556 = vld [vmem:[#allocation5 + $0xb18] sm:$0xff]
    %v557 = vld [vmem:[#allocation5 + $0xb20] sm:$0xff]
    %v558 = vld [vmem:[#allocation5 + $0xb28] sm:$0xff]
    %v559 = vld [vmem:[#allocation5 + $0xb30] sm:$0xff]
    %v560 = vld [vmem:[#allocation5 + $0xb38] sm:$0xff]
    %v561 = vld [vmem:[#allocation5 + $0xb40] sm:$0xff]
    %v562 = vld [vmem:[#allocation5 + $0xb48] sm:$0xff]
    %v563 = vld [vmem:[#allocation5 + $0xb50] sm:$0xff]
    %v564 = vld [vmem:[#allocation5 + $0xb58] sm:$0xff]
    %v565 = vld [vmem:[#allocation5 + $0xb60] sm:$0xff]
    %v566 = vld [vmem:[#allocation5 + $0xb68] sm:$0xff]
    %v567 = vld [vmem:[#allocation5 + $0xb70] sm:$0xff]
    %v568 = vld [vmem:[#allocation5 + $0xb78] sm:$0xff]
    %v569 = vld [vmem:[#allocation5 + $0xb80] sm:$0xff]
    %v570 = vld [vmem:[#allocation5 + $0xb88] sm:$0xff]
    %v571 = vld [vmem:[#allocation5 + $0xb90] sm:$0xff]
    %v572 = vld [vmem:[#allocation5 + $0xb98] sm:$0xff]
    %v573 = vld [vmem:[#allocation5 + $0xba0] sm:$0xff]
    %v574 = vld [vmem:[#allocation5 + $0xba8] sm:$0xff]
    %v575 = vld [vmem:[#allocation5 + $0xbb0] sm:$0xff]
    %v576 = vld [vmem:[#allocation5 + $0xbb8] sm:$0xff]
    %v577 = vld [vmem:[#allocation5 + $0xbc0] sm:$0xff]
    %v578 = vld [vmem:[#allocation5 + $0xbc8] sm:$0xff]
    %v579 = vld [vmem:[#allocation5 + $0xbd0] sm:$0xff]
    %v580 = vld [vmem:[#allocation5 + $0xbd8] sm:$0xff]
    %v581 = vld [vmem:[#allocation5 + $0xbe0] sm:$0xff]
    %v582 = vld [vmem:[#allocation5 + $0xbe8] sm:$0xff]
    %v583 = vld [vmem:[#allocation5 + $0xbf0] sm:$0xff]
    %v584 = vld [vmem:[#allocation5 + $0xbf8] sm:$0xff]
    %v585 = vld [vmem:[#allocation7] sm:$0xff]
    %v587 = vperm.slane %v585, 0
    %v588 = vperm.slane %v585, 1
    %v589 = vperm.slane %v585, 2
    %v590 = vperm.slane %v585, 3
    %v591 = vperm.slane %v585, 4
    %v592 = vperm.slane %v585, 5
    %v593 = vperm.slane %v585, 6
    %v594 = vperm.slane %v585, 7
    %v606 = vunpack.c.l.b16 %v198
    %v607 = vunpack.c.h.b16 %v198
    %v608 = vunpack.c.l.b16 %v199
    %v609 = vunpack.c.h.b16 %v199
    %v610 = vunpack.c.l.b16 %v200
    %v611 = vunpack.c.h.b16 %v200
    %v612 = vpack.c.b16 %v606, %v606
    %v613 = vpack.c.b16 %v607, %v607
    %v614 = vpack.c.b16 %v608, %v608
    %v615 = vpack.c.b16 %v609, %v609
    %v616 = vpack.c.b16 %v610, %v610
    %v617 = vpack.c.b16 %v611, %v611
    %v1008 = vunpack.c.l.b16 %v201
    %v1009 = vunpack.c.h.b16 %v201
    %v1010 = vunpack.c.l.b16 %v202
    %v1011 = vunpack.c.h.b16 %v202
    %v1012 = vunpack.c.l.b16 %v203
    %v1013 = vunpack.c.h.b16 %v203
    %v1014 = vunpack.c.l.b16 %v204
    %v1015 = vunpack.c.h.b16 %v204
    %v1016 = vunpack.c.l.b16 %v205
    %v1017 = vunpack.c.h.b16 %v205
    %v1018 = vunpack.c.l.b16 %v206
    %v1019 = vunpack.c.h.b16 %v206
    %v1020 = vunpack.c.l.b16 %v207
    %v1021 = vunpack.c.h.b16 %v207
    %v1022 = vunpack.c.l.b16 %v208
    %v1023 = vunpack.c.h.b16 %v208
    %v1024 = vunpack.c.l.b16 %v209
    %v1025 = vunpack.c.h.b16 %v209
    %v1026 = vunpack.c.l.b16 %v210
    %v1027 = vunpack.c.h.b16 %v210
    %v1028 = vunpack.c.l.b16 %v211
    %v1029 = vunpack.c.h.b16 %v211
    %v1030 = vunpack.c.l.b16 %v212
    %v1031 = vunpack.c.h.b16 %v212
    %v1032 = vunpack.c.l.b16 %v213
    %v1033 = vunpack.c.h.b16 %v213
    %v1034 = vunpack.c.l.b16 %v214
    %v1035 = vunpack.c.h.b16 %v214
    %v1036 = vunpack.c.l.b16 %v215
    %v1037 = vunpack.c.h.b16 %v215
    %v1038 = vunpack.c.l.b16 %v216
    %v1039 = vunpack.c.h.b16 %v216
    %v1040 = vunpack.c.l.b16 %v217
    %v1041 = vunpack.c.h.b16 %v217
    %v1042 = vunpack.c.l.b16 %v218
    %v1043 = vunpack.c.h.b16 %v218
    %v1044 = vunpack.c.l.b16 %v219
    %v1045 = vunpack.c.h.b16 %v219
    %v1046 = vunpack.c.l.b16 %v220
    %v1047 = vunpack.c.h.b16 %v220
    %v1048 = vunpack.c.l.b16 %v221
    %v1049 = vunpack.c.h.b16 %v221
    %v1050 = vunpack.c.l.b16 %v222
    %v1051 = vunpack.c.h.b16 %v222
    %v1052 = vunpack.c.l.b16 %v223
    %v1053 = vunpack.c.h.b16 %v223
    %v1054 = vunpack.c.l.b16 %v224
    %v1055 = vunpack.c.h.b16 %v224
    %v1056 = vunpack.c.l.b16 %v225
    %v1057 = vunpack.c.h.b16 %v225
    %v1058 = vunpack.c.l.b16 %v226
    %v1059 = vunpack.c.h.b16 %v226
    %v1060 = vunpack.c.l.b16 %v227
    %v1061 = vunpack.c.h.b16 %v227
    %v1062 = vunpack.c.l.b16 %v228
    %v1063 = vunpack.c.h.b16 %v228
    %v1064 = vunpack.c.l.b16 %v229
    %v1065 = vunpack.c.h.b16 %v229
    %v1066 = vunpack.c.l.b16 %v230
    %v1067 = vunpack.c.h.b16 %v230
    %v1068 = vunpack.c.l.b16 %v231
    %v1069 = vunpack.c.h.b16 %v231
    %v1070 = vunpack.c.l.b16 %v232
    %v1071 = vunpack.c.h.b16 %v232
    %v1072 = vunpack.c.l.b16 %v233
    %v1073 = vunpack.c.h.b16 %v233
    %v1074 = vunpack.c.l.b16 %v234
    %v1075 = vunpack.c.h.b16 %v234
    %v1076 = vunpack.c.l.b16 %v235
    %v1077 = vunpack.c.h.b16 %v235
    %v1078 = vunpack.c.l.b16 %v236
    %v1079 = vunpack.c.h.b16 %v236
    %v1080 = vunpack.c.l.b16 %v237
    %v1081 = vunpack.c.h.b16 %v237
    %v1082 = vunpack.c.l.b16 %v238
    %v1083 = vunpack.c.h.b16 %v238
    %v1084 = vunpack.c.l.b16 %v239
    %v1085 = vunpack.c.h.b16 %v239
    %v1086 = vunpack.c.l.b16 %v240
    %v1087 = vunpack.c.h.b16 %v240
    %v1088 = vunpack.c.l.b16 %v241
    %v1089 = vunpack.c.h.b16 %v241
    %v1090 = vunpack.c.l.b16 %v242
    %v1091 = vunpack.c.h.b16 %v242
    %v1092 = vunpack.c.l.b16 %v243
    %v1093 = vunpack.c.h.b16 %v243
    %v1094 = vunpack.c.l.b16 %v244
    %v1095 = vunpack.c.h.b16 %v244
    %v1096 = vunpack.c.l.b16 %v245
    %v1097 = vunpack.c.h.b16 %v245
    %v1098 = vunpack.c.l.b16 %v246
    %v1099 = vunpack.c.h.b16 %v246
    %v1100 = vunpack.c.l.b16 %v247
    %v1101 = vunpack.c.h.b16 %v247
    %v1102 = vunpack.c.l.b16 %v248
    %v1103 = vunpack.c.h.b16 %v248
    %v1104 = vunpack.c.l.b16 %v249
    %v1105 = vunpack.c.h.b16 %v249
    %v1106 = vunpack.c.l.b16 %v250
    %v1107 = vunpack.c.h.b16 %v250
    %v1108 = vunpack.c.l.b16 %v251
    %v1109 = vunpack.c.h.b16 %v251
    %v1110 = vunpack.c.l.b16 %v252
    %v1111 = vunpack.c.h.b16 %v252
    %v1112 = vunpack.c.l.b16 %v253
    %v1113 = vunpack.c.h.b16 %v253
    %v1114 = vunpack.c.l.b16 %v254
    %v1115 = vunpack.c.h.b16 %v254
    %v1116 = vunpack.c.l.b16 %v255
    %v1117 = vunpack.c.h.b16 %v255
    %v1118 = vunpack.c.l.b16 %v256
    %v1119 = vunpack.c.h.b16 %v256
    %v1120 = vunpack.c.l.b16 %v257
    %v1121 = vunpack.c.h.b16 %v257
    %v1122 = vunpack.c.l.b16 %v258
    %v1123 = vunpack.c.h.b16 %v258
    %v1124 = vunpack.c.l.b16 %v259
    %v1125 = vunpack.c.h.b16 %v259
    %v1126 = vunpack.c.l.b16 %v260
    %v1127 = vunpack.c.h.b16 %v260
    %v1128 = vunpack.c.l.b16 %v261
    %v1129 = vunpack.c.h.b16 %v261
    %v1130 = vunpack.c.l.b16 %v262
    %v1131 = vunpack.c.h.b16 %v262
    %v1132 = vunpack.c.l.b16 %v263
    %v1133 = vunpack.c.h.b16 %v263
    %v1134 = vunpack.c.l.b16 %v264
    %v1135 = vunpack.c.h.b16 %v264
    %v1136 = vunpack.c.l.b16 %v265
    %v1137 = vunpack.c.h.b16 %v265
    %v1138 = vunpack.c.l.b16 %v266
    %v1139 = vunpack.c.h.b16 %v266
    %v1140 = vunpack.c.l.b16 %v267
    %v1141 = vunpack.c.h.b16 %v267
    %v1142 = vunpack.c.l.b16 %v268
    %v1143 = vunpack.c.h.b16 %v268
    %v1144 = vunpack.c.l.b16 %v269
    %v1145 = vunpack.c.h.b16 %v269
    %v1146 = vunpack.c.l.b16 %v270
    %v1147 = vunpack.c.h.b16 %v270
    %v1148 = vunpack.c.l.b16 %v271
    %v1149 = vunpack.c.h.b16 %v271
    %v1150 = vunpack.c.l.b16 %v272
    %v1151 = vunpack.c.h.b16 %v272
    %v1152 = vunpack.c.l.b16 %v273
    %v1153 = vunpack.c.h.b16 %v273
    %v1154 = vunpack.c.l.b16 %v274
    %v1155 = vunpack.c.h.b16 %v274
    %v1156 = vunpack.c.l.b16 %v275
    %v1157 = vunpack.c.h.b16 %v275
    %v1158 = vunpack.c.l.b16 %v276
    %v1159 = vunpack.c.h.b16 %v276
    %v1160 = vunpack.c.l.b16 %v277
    %v1161 = vunpack.c.h.b16 %v277
    %v1162 = vunpack.c.l.b16 %v278
    %v1163 = vunpack.c.h.b16 %v278
    %v1164 = vunpack.c.l.b16 %v279
    %v1165 = vunpack.c.h.b16 %v279
    %v1166 = vunpack.c.l.b16 %v280
    %v1167 = vunpack.c.h.b16 %v280
    %v1168 = vunpack.c.l.b16 %v281
    %v1169 = vunpack.c.h.b16 %v281
    %v1170 = vunpack.c.l.b16 %v282
    %v1171 = vunpack.c.h.b16 %v282
    %v1172 = vunpack.c.l.b16 %v283
    %v1173 = vunpack.c.h.b16 %v283
    %v1174 = vunpack.c.l.b16 %v284
    %v1175 = vunpack.c.h.b16 %v284
    %v1176 = vunpack.c.l.b16 %v285
    %v1177 = vunpack.c.h.b16 %v285
    %v1178 = vunpack.c.l.b16 %v286
    %v1179 = vunpack.c.h.b16 %v286
    %v1180 = vunpack.c.l.b16 %v287
    %v1181 = vunpack.c.h.b16 %v287
    %v1182 = vunpack.c.l.b16 %v288
    %v1183 = vunpack.c.h.b16 %v288
    %v1184 = vunpack.c.l.b16 %v289
    %v1185 = vunpack.c.h.b16 %v289
    %v1186 = vunpack.c.l.b16 %v290
    %v1187 = vunpack.c.h.b16 %v290
    %v1188 = vunpack.c.l.b16 %v291
    %v1189 = vunpack.c.h.b16 %v291
    %v1190 = vunpack.c.l.b16 %v292
    %v1191 = vunpack.c.h.b16 %v292
    %v1192 = vunpack.c.l.b16 %v293
    %v1193 = vunpack.c.h.b16 %v293
    %v1194 = vunpack.c.l.b16 %v294
    %v1195 = vunpack.c.h.b16 %v294
    %v1196 = vunpack.c.l.b16 %v295
    %v1197 = vunpack.c.h.b16 %v295
    %v1198 = vunpack.c.l.b16 %v296
    %v1199 = vunpack.c.h.b16 %v296
    %v1200 = vunpack.c.l.b16 %v297
    %v1201 = vunpack.c.h.b16 %v297
    %v1202 = vunpack.c.l.b16 %v298
    %v1203 = vunpack.c.h.b16 %v298
    %v1204 = vunpack.c.l.b16 %v299
    %v1205 = vunpack.c.h.b16 %v299
    %v1206 = vunpack.c.l.b16 %v300
    %v1207 = vunpack.c.h.b16 %v300
    %v1208 = vunpack.c.l.b16 %v301
    %v1209 = vunpack.c.h.b16 %v301
    %v1210 = vunpack.c.l.b16 %v302
    %v1211 = vunpack.c.h.b16 %v302
    %v1212 = vunpack.c.l.b16 %v303
    %v1213 = vunpack.c.h.b16 %v303
    %v1214 = vunpack.c.l.b16 %v304
    %v1215 = vunpack.c.h.b16 %v304
    %v1216 = vunpack.c.l.b16 %v305
    %v1217 = vunpack.c.h.b16 %v305
    %v1218 = vunpack.c.l.b16 %v306
    %v1219 = vunpack.c.h.b16 %v306
    %v1220 = vunpack.c.l.b16 %v307
    %v1221 = vunpack.c.h.b16 %v307
    %v1222 = vunpack.c.l.b16 %v308
    %v1223 = vunpack.c.h.b16 %v308
    %v1224 = vunpack.c.l.b16 %v309
    %v1225 = vunpack.c.h.b16 %v309
    %v1226 = vunpack.c.l.b16 %v310
    %v1227 = vunpack.c.h.b16 %v310
    %v1228 = vunpack.c.l.b16 %v311
    %v1229 = vunpack.c.h.b16 %v311
    %v1230 = vunpack.c.l.b16 %v312
    %v1231 = vunpack.c.h.b16 %v312
    %v1232 = vunpack.c.l.b16 %v313
    %v1233 = vunpack.c.h.b16 %v313
    %v1234 = vunpack.c.l.b16 %v314
    %v1235 = vunpack.c.h.b16 %v314
    %v1236 = vunpack.c.l.b16 %v315
    %v1237 = vunpack.c.h.b16 %v315
    %v1238 = vunpack.c.l.b16 %v316
    %v1239 = vunpack.c.h.b16 %v316
    %v1240 = vunpack.c.l.b16 %v317
    %v1241 = vunpack.c.h.b16 %v317
    %v1242 = vunpack.c.l.b16 %v318
    %v1243 = vunpack.c.h.b16 %v318
    %v1244 = vunpack.c.l.b16 %v319
    %v1245 = vunpack.c.h.b16 %v319
    %v1246 = vunpack.c.l.b16 %v320
    %v1247 = vunpack.c.h.b16 %v320
    %v1248 = vunpack.c.l.b16 %v321
    %v1249 = vunpack.c.h.b16 %v321
    %v1250 = vunpack.c.l.b16 %v322
    %v1251 = vunpack.c.h.b16 %v322
    %v1252 = vunpack.c.l.b16 %v323
    %v1253 = vunpack.c.h.b16 %v323
    %v1254 = vunpack.c.l.b16 %v324
    %v1255 = vunpack.c.h.b16 %v324
    %v1256 = vunpack.c.l.b16 %v325
    %v1257 = vunpack.c.h.b16 %v325
    %v1258 = vunpack.c.l.b16 %v326
    %v1259 = vunpack.c.h.b16 %v326
    %v1260 = vunpack.c.l.b16 %v327
    %v1261 = vunpack.c.h.b16 %v327
    %v1262 = vunpack.c.l.b16 %v328
    %v1263 = vunpack.c.h.b16 %v328
    %v1264 = vunpack.c.l.b16 %v329
    %v1265 = vunpack.c.h.b16 %v329
    %v1266 = vunpack.c.l.b16 %v330
    %v1267 = vunpack.c.h.b16 %v330
    %v1268 = vunpack.c.l.b16 %v331
    %v1269 = vunpack.c.h.b16 %v331
    %v1270 = vunpack.c.l.b16 %v332
    %v1271 = vunpack.c.h.b16 %v332
    %v1272 = vunpack.c.l.b16 %v333
    %v1273 = vunpack.c.h.b16 %v333
    %v1274 = vunpack.c.l.b16 %v334
    %v1275 = vunpack.c.h.b16 %v334
    %v1276 = vunpack.c.l.b16 %v335
    %v1277 = vunpack.c.h.b16 %v335
    %v1278 = vunpack.c.l.b16 %v336
    %v1279 = vunpack.c.h.b16 %v336
    %v1280 = vunpack.c.l.b16 %v337
    %v1281 = vunpack.c.h.b16 %v337
    %v1282 = vunpack.c.l.b16 %v338
    %v1283 = vunpack.c.h.b16 %v338
    %v1284 = vunpack.c.l.b16 %v339
    %v1285 = vunpack.c.h.b16 %v339
    %v1286 = vunpack.c.l.b16 %v340
    %v1287 = vunpack.c.h.b16 %v340
    %v1288 = vunpack.c.l.b16 %v341
    %v1289 = vunpack.c.h.b16 %v341
    %v1290 = vunpack.c.l.b16 %v342
    %v1291 = vunpack.c.h.b16 %v342
    %v1292 = vunpack.c.l.b16 %v343
    %v1293 = vunpack.c.h.b16 %v343
    %v1294 = vunpack.c.l.b16 %v344
    %v1295 = vunpack.c.h.b16 %v344
    %v1296 = vunpack.c.l.b16 %v345
    %v1297 = vunpack.c.h.b16 %v345
    %v1298 = vunpack.c.l.b16 %v346
    %v1299 = vunpack.c.h.b16 %v346
    %v1300 = vunpack.c.l.b16 %v347
    %v1301 = vunpack.c.h.b16 %v347
    %v1302 = vunpack.c.l.b16 %v348
    %v1303 = vunpack.c.h.b16 %v348
    %v1304 = vunpack.c.l.b16 %v349
    %v1305 = vunpack.c.h.b16 %v349
    %v1306 = vunpack.c.l.b16 %v350
    %v1307 = vunpack.c.h.b16 %v350
    %v1308 = vunpack.c.l.b16 %v351
    %v1309 = vunpack.c.h.b16 %v351
    %v1310 = vunpack.c.l.b16 %v352
    %v1311 = vunpack.c.h.b16 %v352
    %v1312 = vunpack.c.l.b16 %v353
    %v1313 = vunpack.c.h.b16 %v353
    %v1314 = vunpack.c.l.b16 %v354
    %v1315 = vunpack.c.h.b16 %v354
    %v1316 = vunpack.c.l.b16 %v355
    %v1317 = vunpack.c.h.b16 %v355
    %v1318 = vunpack.c.l.b16 %v356
    %v1319 = vunpack.c.h.b16 %v356
    %v1320 = vunpack.c.l.b16 %v357
    %v1321 = vunpack.c.h.b16 %v357
    %v1322 = vunpack.c.l.b16 %v358
    %v1323 = vunpack.c.h.b16 %v358
    %v1324 = vunpack.c.l.b16 %v359
    %v1325 = vunpack.c.h.b16 %v359
    %v1326 = vunpack.c.l.b16 %v360
    %v1327 = vunpack.c.h.b16 %v360
    %v1328 = vunpack.c.l.b16 %v361
    %v1329 = vunpack.c.h.b16 %v361
    %v1330 = vunpack.c.l.b16 %v362
    %v1331 = vunpack.c.h.b16 %v362
    %v1332 = vunpack.c.l.b16 %v363
    %v1333 = vunpack.c.h.b16 %v363
    %v1334 = vunpack.c.l.b16 %v364
    %v1335 = vunpack.c.h.b16 %v364
    %v1336 = vunpack.c.l.b16 %v365
    %v1337 = vunpack.c.h.b16 %v365
    %v1338 = vunpack.c.l.b16 %v366
    %v1339 = vunpack.c.h.b16 %v366
    %v1340 = vunpack.c.l.b16 %v367
    %v1341 = vunpack.c.h.b16 %v367
    %v1342 = vunpack.c.l.b16 %v368
    %v1343 = vunpack.c.h.b16 %v368
    %v1344 = vunpack.c.l.b16 %v369
    %v1345 = vunpack.c.h.b16 %v369
    %v1346 = vunpack.c.l.b16 %v370
    %v1347 = vunpack.c.h.b16 %v370
    %v1348 = vunpack.c.l.b16 %v371
    %v1349 = vunpack.c.h.b16 %v371
    %v1350 = vunpack.c.l.b16 %v372
    %v1351 = vunpack.c.h.b16 %v372
    %v1352 = vunpack.c.l.b16 %v373
    %v1353 = vunpack.c.h.b16 %v373
    %v1354 = vunpack.c.l.b16 %v374
    %v1355 = vunpack.c.h.b16 %v374
    %v1356 = vunpack.c.l.b16 %v375
    %v1357 = vunpack.c.h.b16 %v375
    %v1358 = vunpack.c.l.b16 %v376
    %v1359 = vunpack.c.h.b16 %v376
    %v1360 = vunpack.c.l.b16 %v377
    %v1361 = vunpack.c.h.b16 %v377
    %v1362 = vunpack.c.l.b16 %v378
    %v1363 = vunpack.c.h.b16 %v378
    %v1364 = vunpack.c.l.b16 %v379
    %v1365 = vunpack.c.h.b16 %v379
    %v1366 = vunpack.c.l.b16 %v380
    %v1367 = vunpack.c.h.b16 %v380
    %v1368 = vunpack.c.l.b16 %v381
    %v1369 = vunpack.c.h.b16 %v381
    %v1370 = vunpack.c.l.b16 %v382
    %v1371 = vunpack.c.h.b16 %v382
    %v1372 = vunpack.c.l.b16 %v383
    %v1373 = vunpack.c.h.b16 %v383
    %v1374 = vunpack.c.l.b16 %v384
    %v1375 = vunpack.c.h.b16 %v384
    %v1376 = vunpack.c.l.b16 %v385
    %v1377 = vunpack.c.h.b16 %v385
    %v1378 = vunpack.c.l.b16 %v386
    %v1379 = vunpack.c.h.b16 %v386
    %v1380 = vunpack.c.l.b16 %v387
    %v1381 = vunpack.c.h.b16 %v387
    %v1382 = vunpack.c.l.b16 %v388
    %v1383 = vunpack.c.h.b16 %v388
    %v1384 = vunpack.c.l.b16 %v389
    %v1385 = vunpack.c.h.b16 %v389
    %v1386 = vunpack.c.l.b16 %v390
    %v1387 = vunpack.c.h.b16 %v390
    %v1388 = vunpack.c.l.b16 %v391
    %v1389 = vunpack.c.h.b16 %v391
    %v1390 = vunpack.c.l.b16 %v392
    %v1391 = vunpack.c.h.b16 %v392
    %v1392 = vunpack.c.l.b16 %v393
    %v1393 = vunpack.c.h.b16 %v393
    %v1394 = vunpack.c.l.b16 %v394
    %v1395 = vunpack.c.h.b16 %v394
    %v1396 = vunpack.c.l.b16 %v395
    %v1397 = vunpack.c.h.b16 %v395
    %v1398 = vunpack.c.l.b16 %v396
    %v1399 = vunpack.c.h.b16 %v396
    %v1400 = vunpack.c.l.b16 %v397
    %v1401 = vunpack.c.h.b16 %v397
    %v1402 = vunpack.c.l.b16 %v398
    %v1403 = vunpack.c.h.b16 %v398
    %v1404 = vunpack.c.l.b16 %v399
    %v1405 = vunpack.c.h.b16 %v399
    %v1406 = vunpack.c.l.b16 %v400
    %v1407 = vunpack.c.h.b16 %v400
    %v1408 = vunpack.c.l.b16 %v401
    %v1409 = vunpack.c.h.b16 %v401
    %v1410 = vunpack.c.l.b16 %v402
    %v1411 = vunpack.c.h.b16 %v402
    %v1412 = vunpack.c.l.b16 %v403
    %v1413 = vunpack.c.h.b16 %v403
    %v1414 = vunpack.c.l.b16 %v404
    %v1415 = vunpack.c.h.b16 %v404
    %v1416 = vunpack.c.l.b16 %v405
    %v1417 = vunpack.c.h.b16 %v405
    %v1418 = vunpack.c.l.b16 %v406
    %v1419 = vunpack.c.h.b16 %v406
    %v1420 = vunpack.c.l.b16 %v407
    %v1421 = vunpack.c.h.b16 %v407
    %v1422 = vunpack.c.l.b16 %v408
    %v1423 = vunpack.c.h.b16 %v408
    %v1424 = vunpack.c.l.b16 %v409
    %v1425 = vunpack.c.h.b16 %v409
    %v1426 = vunpack.c.l.b16 %v410
    %v1427 = vunpack.c.h.b16 %v410
    %v1428 = vunpack.c.l.b16 %v411
    %v1429 = vunpack.c.h.b16 %v411
    %v1430 = vunpack.c.l.b16 %v412
    %v1431 = vunpack.c.h.b16 %v412
    %v1432 = vunpack.c.l.b16 %v413
    %v1433 = vunpack.c.h.b16 %v413
    %v1434 = vunpack.c.l.b16 %v414
    %v1435 = vunpack.c.h.b16 %v414
    %v1436 = vunpack.c.l.b16 %v415
    %v1437 = vunpack.c.h.b16 %v415
    %v1438 = vunpack.c.l.b16 %v416
    %v1439 = vunpack.c.h.b16 %v416
    %v1440 = vunpack.c.l.b16 %v417
    %v1441 = vunpack.c.h.b16 %v417
    %v1442 = vunpack.c.l.b16 %v418
    %v1443 = vunpack.c.h.b16 %v418
    %v1444 = vunpack.c.l.b16 %v419
    %v1445 = vunpack.c.h.b16 %v419
    %v1446 = vunpack.c.l.b16 %v420
    %v1447 = vunpack.c.h.b16 %v420
    %v1448 = vunpack.c.l.b16 %v421
    %v1449 = vunpack.c.h.b16 %v421
    %v1450 = vunpack.c.l.b16 %v422
    %v1451 = vunpack.c.h.b16 %v422
    %v1452 = vunpack.c.l.b16 %v423
    %v1453 = vunpack.c.h.b16 %v423
    %v1454 = vunpack.c.l.b16 %v424
    %v1455 = vunpack.c.h.b16 %v424
    %v1456 = vunpack.c.l.b16 %v425
    %v1457 = vunpack.c.h.b16 %v425
    %v1458 = vunpack.c.l.b16 %v426
    %v1459 = vunpack.c.h.b16 %v426
    %v1460 = vunpack.c.l.b16 %v427
    %v1461 = vunpack.c.h.b16 %v427
    %v1462 = vunpack.c.l.b16 %v428
    %v1463 = vunpack.c.h.b16 %v428
    %v1464 = vunpack.c.l.b16 %v429
    %v1465 = vunpack.c.h.b16 %v429
    %v1466 = vunpack.c.l.b16 %v430
    %v1467 = vunpack.c.h.b16 %v430
    %v1468 = vunpack.c.l.b16 %v431
    %v1469 = vunpack.c.h.b16 %v431
    %v1470 = vunpack.c.l.b16 %v432
    %v1471 = vunpack.c.h.b16 %v432
    %v1472 = vunpack.c.l.b16 %v433
    %v1473 = vunpack.c.h.b16 %v433
    %v1474 = vunpack.c.l.b16 %v434
    %v1475 = vunpack.c.h.b16 %v434
    %v1476 = vunpack.c.l.b16 %v435
    %v1477 = vunpack.c.h.b16 %v435
    %v1478 = vunpack.c.l.b16 %v436
    %v1479 = vunpack.c.h.b16 %v436
    %v1480 = vunpack.c.l.b16 %v437
    %v1481 = vunpack.c.h.b16 %v437
    %v1482 = vunpack.c.l.b16 %v438
    %v1483 = vunpack.c.h.b16 %v438
    %v1484 = vunpack.c.l.b16 %v439
    %v1485 = vunpack.c.h.b16 %v439
    %v1486 = vunpack.c.l.b16 %v440
    %v1487 = vunpack.c.h.b16 %v440
    %v1488 = vunpack.c.l.b16 %v441
    %v1489 = vunpack.c.h.b16 %v441
    %v1490 = vunpack.c.l.b16 %v442
    %v1491 = vunpack.c.h.b16 %v442
    %v1492 = vunpack.c.l.b16 %v443
    %v1493 = vunpack.c.h.b16 %v443
    %v1494 = vunpack.c.l.b16 %v444
    %v1495 = vunpack.c.h.b16 %v444
    %v1496 = vunpack.c.l.b16 %v445
    %v1497 = vunpack.c.h.b16 %v445
    %v1498 = vunpack.c.l.b16 %v446
    %v1499 = vunpack.c.h.b16 %v446
    %v1500 = vunpack.c.l.b16 %v447
    %v1501 = vunpack.c.h.b16 %v447
    %v1502 = vunpack.c.l.b16 %v448
    %v1503 = vunpack.c.h.b16 %v448
    %v1504 = vunpack.c.l.b16 %v449
    %v1505 = vunpack.c.h.b16 %v449
    %v1506 = vunpack.c.l.b16 %v450
    %v1507 = vunpack.c.h.b16 %v450
    %v1508 = vunpack.c.l.b16 %v451
    %v1509 = vunpack.c.h.b16 %v451
    %v1510 = vunpack.c.l.b16 %v452
    %v1511 = vunpack.c.h.b16 %v452
    %v1512 = vunpack.c.l.b16 %v453
    %v1513 = vunpack.c.h.b16 %v453
    %v1514 = vunpack.c.l.b16 %v454
    %v1515 = vunpack.c.h.b16 %v454
    %v1516 = vunpack.c.l.b16 %v455
    %v1517 = vunpack.c.h.b16 %v455
    %v1518 = vunpack.c.l.b16 %v456
    %v1519 = vunpack.c.h.b16 %v456
    %v1520 = vunpack.c.l.b16 %v457
    %v1521 = vunpack.c.h.b16 %v457
    %v1522 = vunpack.c.l.b16 %v458
    %v1523 = vunpack.c.h.b16 %v458
    %v1524 = vunpack.c.l.b16 %v459
    %v1525 = vunpack.c.h.b16 %v459
    %v1526 = vunpack.c.l.b16 %v460
    %v1527 = vunpack.c.h.b16 %v460
    %v1528 = vunpack.c.l.b16 %v461
    %v1529 = vunpack.c.h.b16 %v461
    %v1530 = vunpack.c.l.b16 %v462
    %v1531 = vunpack.c.h.b16 %v462
    %v1532 = vunpack.c.l.b16 %v463
    %v1533 = vunpack.c.h.b16 %v463
    %v1534 = vunpack.c.l.b16 %v464
    %v1535 = vunpack.c.h.b16 %v464
    %v1536 = vunpack.c.l.b16 %v465
    %v1537 = vunpack.c.h.b16 %v465
    %v1538 = vunpack.c.l.b16 %v466
    %v1539 = vunpack.c.h.b16 %v466
    %v1540 = vunpack.c.l.b16 %v467
    %v1541 = vunpack.c.h.b16 %v467
    %v1542 = vunpack.c.l.b16 %v468
    %v1543 = vunpack.c.h.b16 %v468
    %v1544 = vunpack.c.l.b16 %v469
    %v1545 = vunpack.c.h.b16 %v469
    %v1546 = vunpack.c.l.b16 %v470
    %v1547 = vunpack.c.h.b16 %v470
    %v1548 = vunpack.c.l.b16 %v471
    %v1549 = vunpack.c.h.b16 %v471
    %v1550 = vunpack.c.l.b16 %v472
    %v1551 = vunpack.c.h.b16 %v472
    %v1552 = vunpack.c.l.b16 %v473
    %v1553 = vunpack.c.h.b16 %v473
    %v1554 = vunpack.c.l.b16 %v474
    %v1555 = vunpack.c.h.b16 %v474
    %v1556 = vunpack.c.l.b16 %v475
    %v1557 = vunpack.c.h.b16 %v475
    %v1558 = vunpack.c.l.b16 %v476
    %v1559 = vunpack.c.h.b16 %v476
    %v1560 = vunpack.c.l.b16 %v477
    %v1561 = vunpack.c.h.b16 %v477
    %v1562 = vunpack.c.l.b16 %v478
    %v1563 = vunpack.c.h.b16 %v478
    %v1564 = vunpack.c.l.b16 %v479
    %v1565 = vunpack.c.h.b16 %v479
    %v1566 = vunpack.c.l.b16 %v480
    %v1567 = vunpack.c.h.b16 %v480
    %v1568 = vunpack.c.l.b16 %v481
    %v1569 = vunpack.c.h.b16 %v481
    %v1570 = vunpack.c.l.b16 %v482
    %v1571 = vunpack.c.h.b16 %v482
    %v1572 = vunpack.c.l.b16 %v483
    %v1573 = vunpack.c.h.b16 %v483
    %v1574 = vunpack.c.l.b16 %v484
    %v1575 = vunpack.c.h.b16 %v484
    %v1576 = vunpack.c.l.b16 %v485
    %v1577 = vunpack.c.h.b16 %v485
    %v1578 = vunpack.c.l.b16 %v486
    %v1579 = vunpack.c.h.b16 %v486
    %v1580 = vunpack.c.l.b16 %v487
    %v1581 = vunpack.c.h.b16 %v487
    %v1582 = vunpack.c.l.b16 %v488
    %v1583 = vunpack.c.h.b16 %v488
    %v1584 = vunpack.c.l.b16 %v489
    %v1585 = vunpack.c.h.b16 %v489
    %v1586 = vunpack.c.l.b16 %v490
    %v1587 = vunpack.c.h.b16 %v490
    %v1588 = vunpack.c.l.b16 %v491
    %v1589 = vunpack.c.h.b16 %v491
    %v1590 = vunpack.c.l.b16 %v492
    %v1591 = vunpack.c.h.b16 %v492
    %v1592 = vunpack.c.l.b16 %v493
    %v1593 = vunpack.c.h.b16 %v493
    %v1594 = vunpack.c.l.b16 %v494
    %v1595 = vunpack.c.h.b16 %v494
    %v1596 = vunpack.c.l.b16 %v495
    %v1597 = vunpack.c.h.b16 %v495
    %v1598 = vunpack.c.l.b16 %v496
    %v1599 = vunpack.c.h.b16 %v496
    %v1600 = vunpack.c.l.b16 %v497
    %v1601 = vunpack.c.h.b16 %v497
    %v1602 = vunpack.c.l.b16 %v498
    %v1603 = vunpack.c.h.b16 %v498
    %v1604 = vunpack.c.l.b16 %v499
    %v1605 = vunpack.c.h.b16 %v499
    %v1606 = vunpack.c.l.b16 %v500
    %v1607 = vunpack.c.h.b16 %v500
    %v1608 = vunpack.c.l.b16 %v501
    %v1609 = vunpack.c.h.b16 %v501
    %v1610 = vunpack.c.l.b16 %v502
    %v1611 = vunpack.c.h.b16 %v502
    %v1612 = vunpack.c.l.b16 %v503
    %v1613 = vunpack.c.h.b16 %v503
    %v1614 = vunpack.c.l.b16 %v504
    %v1615 = vunpack.c.h.b16 %v504
    %v1616 = vunpack.c.l.b16 %v505
    %v1617 = vunpack.c.h.b16 %v505
    %v1618 = vunpack.c.l.b16 %v506
    %v1619 = vunpack.c.h.b16 %v506
    %v1620 = vunpack.c.l.b16 %v507
    %v1621 = vunpack.c.h.b16 %v507
    %v1622 = vunpack.c.l.b16 %v508
    %v1623 = vunpack.c.h.b16 %v508
    %v1624 = vunpack.c.l.b16 %v509
    %v1625 = vunpack.c.h.b16 %v509
    %v1626 = vunpack.c.l.b16 %v510
    %v1627 = vunpack.c.h.b16 %v510
    %v1628 = vunpack.c.l.b16 %v511
    %v1629 = vunpack.c.h.b16 %v511
    %v1630 = vunpack.c.l.b16 %v512
    %v1631 = vunpack.c.h.b16 %v512
    %v1632 = vunpack.c.l.b16 %v513
    %v1633 = vunpack.c.h.b16 %v513
    %v1634 = vunpack.c.l.b16 %v514
    %v1635 = vunpack.c.h.b16 %v514
    %v1636 = vunpack.c.l.b16 %v515
    %v1637 = vunpack.c.h.b16 %v515
    %v1638 = vunpack.c.l.b16 %v516
    %v1639 = vunpack.c.h.b16 %v516
    %v1640 = vunpack.c.l.b16 %v517
    %v1641 = vunpack.c.h.b16 %v517
    %v1642 = vunpack.c.l.b16 %v518
    %v1643 = vunpack.c.h.b16 %v518
    %v1644 = vunpack.c.l.b16 %v519
    %v1645 = vunpack.c.h.b16 %v519
    %v1646 = vunpack.c.l.b16 %v520
    %v1647 = vunpack.c.h.b16 %v520
    %v1648 = vunpack.c.l.b16 %v521
    %v1649 = vunpack.c.h.b16 %v521
    %v1650 = vunpack.c.l.b16 %v522
    %v1651 = vunpack.c.h.b16 %v522
    %v1652 = vunpack.c.l.b16 %v523
    %v1653 = vunpack.c.h.b16 %v523
    %v1654 = vunpack.c.l.b16 %v524
    %v1655 = vunpack.c.h.b16 %v524
    %v1656 = vunpack.c.l.b16 %v525
    %v1657 = vunpack.c.h.b16 %v525
    %v1658 = vunpack.c.l.b16 %v526
    %v1659 = vunpack.c.h.b16 %v526
    %v1660 = vunpack.c.l.b16 %v527
    %v1661 = vunpack.c.h.b16 %v527
    %v1662 = vunpack.c.l.b16 %v528
    %v1663 = vunpack.c.h.b16 %v528
    %v1664 = vunpack.c.l.b16 %v529
    %v1665 = vunpack.c.h.b16 %v529
    %v1666 = vunpack.c.l.b16 %v530
    %v1667 = vunpack.c.h.b16 %v530
    %v1668 = vunpack.c.l.b16 %v531
    %v1669 = vunpack.c.h.b16 %v531
    %v1670 = vunpack.c.l.b16 %v532
    %v1671 = vunpack.c.h.b16 %v532
    %v1672 = vunpack.c.l.b16 %v533
    %v1673 = vunpack.c.h.b16 %v533
    %v1674 = vunpack.c.l.b16 %v534
    %v1675 = vunpack.c.h.b16 %v534
    %v1676 = vunpack.c.l.b16 %v535
    %v1677 = vunpack.c.h.b16 %v535
    %v1678 = vunpack.c.l.b16 %v536
    %v1679 = vunpack.c.h.b16 %v536
    %v1680 = vunpack.c.l.b16 %v537
    %v1681 = vunpack.c.h.b16 %v537
    %v1682 = vunpack.c.l.b16 %v538
    %v1683 = vunpack.c.h.b16 %v538
    %v1684 = vunpack.c.l.b16 %v539
    %v1685 = vunpack.c.h.b16 %v539
    %v1686 = vunpack.c.l.b16 %v540
    %v1687 = vunpack.c.h.b16 %v540
    %v1688 = vunpack.c.l.b16 %v541
    %v1689 = vunpack.c.h.b16 %v541
    %v1690 = vunpack.c.l.b16 %v542
    %v1691 = vunpack.c.h.b16 %v542
    %v1692 = vunpack.c.l.b16 %v543
    %v1693 = vunpack.c.h.b16 %v543
    %v1694 = vunpack.c.l.b16 %v544
    %v1695 = vunpack.c.h.b16 %v544
    %v1696 = vunpack.c.l.b16 %v545
    %v1697 = vunpack.c.h.b16 %v545
    %v1698 = vunpack.c.l.b16 %v546
    %v1699 = vunpack.c.h.b16 %v546
    %v1700 = vunpack.c.l.b16 %v547
    %v1701 = vunpack.c.h.b16 %v547
    %v1702 = vunpack.c.l.b16 %v548
    %v1703 = vunpack.c.h.b16 %v548
    %v1704 = vunpack.c.l.b16 %v549
    %v1705 = vunpack.c.h.b16 %v549
    %v1706 = vunpack.c.l.b16 %v550
    %v1707 = vunpack.c.h.b16 %v550
    %v1708 = vunpack.c.l.b16 %v551
    %v1709 = vunpack.c.h.b16 %v551
    %v1710 = vunpack.c.l.b16 %v552
    %v1711 = vunpack.c.h.b16 %v552
    %v1712 = vunpack.c.l.b16 %v553
    %v1713 = vunpack.c.h.b16 %v553
    %v1714 = vunpack.c.l.b16 %v554
    %v1715 = vunpack.c.h.b16 %v554
    %v1716 = vunpack.c.l.b16 %v555
    %v1717 = vunpack.c.h.b16 %v555
    %v1718 = vunpack.c.l.b16 %v556
    %v1719 = vunpack.c.h.b16 %v556
    %v1720 = vunpack.c.l.b16 %v557
    %v1721 = vunpack.c.h.b16 %v557
    %v1722 = vunpack.c.l.b16 %v558
    %v1723 = vunpack.c.h.b16 %v558
    %v1724 = vunpack.c.l.b16 %v559
    %v1725 = vunpack.c.h.b16 %v559
    %v1726 = vunpack.c.l.b16 %v560
    %v1727 = vunpack.c.h.b16 %v560
    %v1728 = vunpack.c.l.b16 %v561
    %v1729 = vunpack.c.h.b16 %v561
    %v1730 = vunpack.c.l.b16 %v562
    %v1731 = vunpack.c.h.b16 %v562
    %v1732 = vunpack.c.l.b16 %v563
    %v1733 = vunpack.c.h.b16 %v563
    %v1734 = vunpack.c.l.b16 %v564
    %v1735 = vunpack.c.h.b16 %v564
    %v1736 = vunpack.c.l.b16 %v565
    %v1737 = vunpack.c.h.b16 %v565
    %v1738 = vunpack.c.l.b16 %v566
    %v1739 = vunpack.c.h.b16 %v566
    %v1740 = vunpack.c.l.b16 %v567
    %v1741 = vunpack.c.h.b16 %v567
    %v1742 = vunpack.c.l.b16 %v568
    %v1743 = vunpack.c.h.b16 %v568
    %v1744 = vunpack.c.l.b16 %v569
    %v1745 = vunpack.c.h.b16 %v569
    %v1746 = vunpack.c.l.b16 %v570
    %v1747 = vunpack.c.h.b16 %v570
    %v1748 = vunpack.c.l.b16 %v571
    %v1749 = vunpack.c.h.b16 %v571
    %v1750 = vunpack.c.l.b16 %v572
    %v1751 = vunpack.c.h.b16 %v572
    %v1752 = vunpack.c.l.b16 %v573
    %v1753 = vunpack.c.h.b16 %v573
    %v1754 = vunpack.c.l.b16 %v574
    %v1755 = vunpack.c.h.b16 %v574
    %v1756 = vunpack.c.l.b16 %v575
    %v1757 = vunpack.c.h.b16 %v575
    %v1758 = vunpack.c.l.b16 %v576
    %v1759 = vunpack.c.h.b16 %v576
    %v1760 = vunpack.c.l.b16 %v577
    %v1761 = vunpack.c.h.b16 %v577
    %v1762 = vunpack.c.l.b16 %v578
    %v1763 = vunpack.c.h.b16 %v578
    %v1764 = vunpack.c.l.b16 %v579
    %v1765 = vunpack.c.h.b16 %v579
    %v1766 = vunpack.c.l.b16 %v580
    %v1767 = vunpack.c.h.b16 %v580
    %v1768 = vunpack.c.l.b16 %v581
    %v1769 = vunpack.c.h.b16 %v581
    %v1770 = vunpack.c.l.b16 %v582
    %v1771 = vunpack.c.h.b16 %v582
    %v1772 = vunpack.c.l.b16 %v583
    %v1773 = vunpack.c.h.b16 %v583
    %v1774 = vunpack.c.l.b16 %v584
    %v1775 = vunpack.c.h.b16 %v584
    %v1776 = vpack.c.b16 %v1016, %v1008
    %v1777 = vpack.c.b16 %v1017, %v1009
    %v1778 = vpack.c.b16 %v1018, %v1010
    %v1779 = vpack.c.b16 %v1019, %v1011
    %v1780 = vpack.c.b16 %v1020, %v1012
    %v1781 = vpack.c.b16 %v1021, %v1013
    %v1782 = vpack.c.b16 %v1022, %v1014
    %v1783 = vpack.c.b16 %v1023, %v1015
    %v1784 = vpack.c.b16 %v1032, %v1024
    %v1785 = vpack.c.b16 %v1033, %v1025
    %v1786 = vpack.c.b16 %v1034, %v1026
    %v1787 = vpack.c.b16 %v1035, %v1027
    %v1788 = vpack.c.b16 %v1036, %v1028
    %v1789 = vpack.c.b16 %v1037, %v1029
    %v1790 = vpack.c.b16 %v1038, %v1030
    %v1791 = vpack.c.b16 %v1039, %v1031
    %v1792 = vpack.c.b16 %v1048, %v1040
    %v1793 = vpack.c.b16 %v1049, %v1041
    %v1794 = vpack.c.b16 %v1050, %v1042
    %v1795 = vpack.c.b16 %v1051, %v1043
    %v1796 = vpack.c.b16 %v1052, %v1044
    %v1797 = vpack.c.b16 %v1053, %v1045
    %v1798 = vpack.c.b16 %v1054, %v1046
    %v1799 = vpack.c.b16 %v1055, %v1047
    %v1800 = vpack.c.b16 %v1064, %v1056
    %v1801 = vpack.c.b16 %v1065, %v1057
    %v1802 = vpack.c.b16 %v1066, %v1058
    %v1803 = vpack.c.b16 %v1067, %v1059
    %v1804 = vpack.c.b16 %v1068, %v1060
    %v1805 = vpack.c.b16 %v1069, %v1061
    %v1806 = vpack.c.b16 %v1070, %v1062
    %v1807 = vpack.c.b16 %v1071, %v1063
    %v1808 = vpack.c.b16 %v1080, %v1072
    %v1809 = vpack.c.b16 %v1081, %v1073
    %v1810 = vpack.c.b16 %v1082, %v1074
    %v1811 = vpack.c.b16 %v1083, %v1075
    %v1812 = vpack.c.b16 %v1084, %v1076
    %v1813 = vpack.c.b16 %v1085, %v1077
    %v1814 = vpack.c.b16 %v1086, %v1078
    %v1815 = vpack.c.b16 %v1087, %v1079
    %v1816 = vpack.c.b16 %v1096, %v1088
    %v1817 = vpack.c.b16 %v1097, %v1089
    %v1818 = vpack.c.b16 %v1098, %v1090
    %v1819 = vpack.c.b16 %v1099, %v1091
    %v1820 = vpack.c.b16 %v1100, %v1092
    %v1821 = vpack.c.b16 %v1101, %v1093
    %v1822 = vpack.c.b16 %v1102, %v1094
    %v1823 = vpack.c.b16 %v1103, %v1095
    %v1824 = vpack.c.b16 %v1112, %v1104
    %v1825 = vpack.c.b16 %v1113, %v1105
    %v1826 = vpack.c.b16 %v1114, %v1106
    %v1827 = vpack.c.b16 %v1115, %v1107
    %v1828 = vpack.c.b16 %v1116, %v1108
    %v1829 = vpack.c.b16 %v1117, %v1109
    %v1830 = vpack.c.b16 %v1118, %v1110
    %v1831 = vpack.c.b16 %v1119, %v1111
    %v1832 = vpack.c.b16 %v1128, %v1120
    %v1833 = vpack.c.b16 %v1129, %v1121
    %v1834 = vpack.c.b16 %v1130, %v1122
    %v1835 = vpack.c.b16 %v1131, %v1123
    %v1836 = vpack.c.b16 %v1132, %v1124
    %v1837 = vpack.c.b16 %v1133, %v1125
    %v1838 = vpack.c.b16 %v1134, %v1126
    %v1839 = vpack.c.b16 %v1135, %v1127
    %v1840 = vpack.c.b16 %v1144, %v1136
    %v1841 = vpack.c.b16 %v1145, %v1137
    %v1842 = vpack.c.b16 %v1146, %v1138
    %v1843 = vpack.c.b16 %v1147, %v1139
    %v1844 = vpack.c.b16 %v1148, %v1140
    %v1845 = vpack.c.b16 %v1149, %v1141
    %v1846 = vpack.c.b16 %v1150, %v1142
    %v1847 = vpack.c.b16 %v1151, %v1143
    %v1848 = vpack.c.b16 %v1160, %v1152
    %v1849 = vpack.c.b16 %v1161, %v1153
    %v1850 = vpack.c.b16 %v1162, %v1154
    %v1851 = vpack.c.b16 %v1163, %v1155
    %v1852 = vpack.c.b16 %v1164, %v1156
    %v1853 = vpack.c.b16 %v1165, %v1157
    %v1854 = vpack.c.b16 %v1166, %v1158
    %v1855 = vpack.c.b16 %v1167, %v1159
    %v1856 = vpack.c.b16 %v1176, %v1168
    %v1857 = vpack.c.b16 %v1177, %v1169
    %v1858 = vpack.c.b16 %v1178, %v1170
    %v1859 = vpack.c.b16 %v1179, %v1171
    %v1860 = vpack.c.b16 %v1180, %v1172
    %v1861 = vpack.c.b16 %v1181, %v1173
    %v1862 = vpack.c.b16 %v1182, %v1174
    %v1863 = vpack.c.b16 %v1183, %v1175
    %v1864 = vpack.c.b16 %v1192, %v1184
    %v1865 = vpack.c.b16 %v1193, %v1185
    %v1866 = vpack.c.b16 %v1194, %v1186
    %v1867 = vpack.c.b16 %v1195, %v1187
    %v1868 = vpack.c.b16 %v1196, %v1188
    %v1869 = vpack.c.b16 %v1197, %v1189
    %v1870 = vpack.c.b16 %v1198, %v1190
    %v1871 = vpack.c.b16 %v1199, %v1191
    %v1872 = vpack.c.b16 %v1208, %v1200
    %v1873 = vpack.c.b16 %v1209, %v1201
    %v1874 = vpack.c.b16 %v1210, %v1202
    %v1875 = vpack.c.b16 %v1211, %v1203
    %v1876 = vpack.c.b16 %v1212, %v1204
    %v1877 = vpack.c.b16 %v1213, %v1205
    %v1878 = vpack.c.b16 %v1214, %v1206
    %v1879 = vpack.c.b16 %v1215, %v1207
    %v1880 = vpack.c.b16 %v1224, %v1216
    %v1881 = vpack.c.b16 %v1225, %v1217
    %v1882 = vpack.c.b16 %v1226, %v1218
    %v1883 = vpack.c.b16 %v1227, %v1219
    %v1884 = vpack.c.b16 %v1228, %v1220
    %v1885 = vpack.c.b16 %v1229, %v1221
    %v1886 = vpack.c.b16 %v1230, %v1222
    %v1887 = vpack.c.b16 %v1231, %v1223
    %v1888 = vpack.c.b16 %v1240, %v1232
    %v1889 = vpack.c.b16 %v1241, %v1233
    %v1890 = vpack.c.b16 %v1242, %v1234
    %v1891 = vpack.c.b16 %v1243, %v1235
    %v1892 = vpack.c.b16 %v1244, %v1236
    %v1893 = vpack.c.b16 %v1245, %v1237
    %v1894 = vpack.c.b16 %v1246, %v1238
    %v1895 = vpack.c.b16 %v1247, %v1239
    %v1896 = vpack.c.b16 %v1256, %v1248
    %v1897 = vpack.c.b16 %v1257, %v1249
    %v1898 = vpack.c.b16 %v1258, %v1250
    %v1899 = vpack.c.b16 %v1259, %v1251
    %v1900 = vpack.c.b16 %v1260, %v1252
    %v1901 = vpack.c.b16 %v1261, %v1253
    %v1902 = vpack.c.b16 %v1262, %v1254
    %v1903 = vpack.c.b16 %v1263, %v1255
    %v1904 = vpack.c.b16 %v1272, %v1264
    %v1905 = vpack.c.b16 %v1273, %v1265
    %v1906 = vpack.c.b16 %v1274, %v1266
    %v1907 = vpack.c.b16 %v1275, %v1267
    %v1908 = vpack.c.b16 %v1276, %v1268
    %v1909 = vpack.c.b16 %v1277, %v1269
    %v1910 = vpack.c.b16 %v1278, %v1270
    %v1911 = vpack.c.b16 %v1279, %v1271
    %v1912 = vpack.c.b16 %v1288, %v1280
    %v1913 = vpack.c.b16 %v1289, %v1281
    %v1914 = vpack.c.b16 %v1290, %v1282
    %v1915 = vpack.c.b16 %v1291, %v1283
    %v1916 = vpack.c.b16 %v1292, %v1284
    %v1917 = vpack.c.b16 %v1293, %v1285
    %v1918 = vpack.c.b16 %v1294, %v1286
    %v1919 = vpack.c.b16 %v1295, %v1287
    %v1920 = vpack.c.b16 %v1304, %v1296
    %v1921 = vpack.c.b16 %v1305, %v1297
    %v1922 = vpack.c.b16 %v1306, %v1298
    %v1923 = vpack.c.b16 %v1307, %v1299
    %v1924 = vpack.c.b16 %v1308, %v1300
    %v1925 = vpack.c.b16 %v1309, %v1301
    %v1926 = vpack.c.b16 %v1310, %v1302
    %v1927 = vpack.c.b16 %v1311, %v1303
    %v1928 = vpack.c.b16 %v1320, %v1312
    %v1929 = vpack.c.b16 %v1321, %v1313
    %v1930 = vpack.c.b16 %v1322, %v1314
    %v1931 = vpack.c.b16 %v1323, %v1315
    %v1932 = vpack.c.b16 %v1324, %v1316
    %v1933 = vpack.c.b16 %v1325, %v1317
    %v1934 = vpack.c.b16 %v1326, %v1318
    %v1935 = vpack.c.b16 %v1327, %v1319
    %v1936 = vpack.c.b16 %v1336, %v1328
    %v1937 = vpack.c.b16 %v1337, %v1329
    %v1938 = vpack.c.b16 %v1338, %v1330
    %v1939 = vpack.c.b16 %v1339, %v1331
    %v1940 = vpack.c.b16 %v1340, %v1332
    %v1941 = vpack.c.b16 %v1341, %v1333
    %v1942 = vpack.c.b16 %v1342, %v1334
    %v1943 = vpack.c.b16 %v1343, %v1335
    %v1944 = vpack.c.b16 %v1352, %v1344
    %v1945 = vpack.c.b16 %v1353, %v1345
    %v1946 = vpack.c.b16 %v1354, %v1346
    %v1947 = vpack.c.b16 %v1355, %v1347
    %v1948 = vpack.c.b16 %v1356, %v1348
    %v1949 = vpack.c.b16 %v1357, %v1349
    %v1950 = vpack.c.b16 %v1358, %v1350
    %v1951 = vpack.c.b16 %v1359, %v1351
    %v1952 = vpack.c.b16 %v1368, %v1360
    %v1953 = vpack.c.b16 %v1369, %v1361
    %v1954 = vpack.c.b16 %v1370, %v1362
    %v1955 = vpack.c.b16 %v1371, %v1363
    %v1956 = vpack.c.b16 %v1372, %v1364
    %v1957 = vpack.c.b16 %v1373, %v1365
    %v1958 = vpack.c.b16 %v1374, %v1366
    %v1959 = vpack.c.b16 %v1375, %v1367
    %v1960 = vpack.c.b16 %v1384, %v1376
    %v1961 = vpack.c.b16 %v1385, %v1377
    %v1962 = vpack.c.b16 %v1386, %v1378
    %v1963 = vpack.c.b16 %v1387, %v1379
    %v1964 = vpack.c.b16 %v1388, %v1380
    %v1965 = vpack.c.b16 %v1389, %v1381
    %v1966 = vpack.c.b16 %v1390, %v1382
    %v1967 = vpack.c.b16 %v1391, %v1383
    %v1968 = vpack.c.b16 %v1400, %v1392
    %v1969 = vpack.c.b16 %v1401, %v1393
    %v1970 = vpack.c.b16 %v1402, %v1394
    %v1971 = vpack.c.b16 %v1403, %v1395
    %v1972 = vpack.c.b16 %v1404, %v1396
    %v1973 = vpack.c.b16 %v1405, %v1397
    %v1974 = vpack.c.b16 %v1406, %v1398
    %v1975 = vpack.c.b16 %v1407, %v1399
    %v1976 = vpack.c.b16 %v1416, %v1408
    %v1977 = vpack.c.b16 %v1417, %v1409
    %v1978 = vpack.c.b16 %v1418, %v1410
    %v1979 = vpack.c.b16 %v1419, %v1411
    %v1980 = vpack.c.b16 %v1420, %v1412
    %v1981 = vpack.c.b16 %v1421, %v1413
    %v1982 = vpack.c.b16 %v1422, %v1414
    %v1983 = vpack.c.b16 %v1423, %v1415
    %v1984 = vpack.c.b16 %v1432, %v1424
    %v1985 = vpack.c.b16 %v1433, %v1425
    %v1986 = vpack.c.b16 %v1434, %v1426
    %v1987 = vpack.c.b16 %v1435, %v1427
    %v1988 = vpack.c.b16 %v1436, %v1428
    %v1989 = vpack.c.b16 %v1437, %v1429
    %v1990 = vpack.c.b16 %v1438, %v1430
    %v1991 = vpack.c.b16 %v1439, %v1431
    %v1992 = vpack.c.b16 %v1448, %v1440
    %v1993 = vpack.c.b16 %v1449, %v1441
    %v1994 = vpack.c.b16 %v1450, %v1442
    %v1995 = vpack.c.b16 %v1451, %v1443
    %v1996 = vpack.c.b16 %v1452, %v1444
    %v1997 = vpack.c.b16 %v1453, %v1445
    %v1998 = vpack.c.b16 %v1454, %v1446
    %v1999 = vpack.c.b16 %v1455, %v1447
    %v2000 = vpack.c.b16 %v1464, %v1456
    %v2001 = vpack.c.b16 %v1465, %v1457
    %v2002 = vpack.c.b16 %v1466, %v1458
    %v2003 = vpack.c.b16 %v1467, %v1459
    %v2004 = vpack.c.b16 %v1468, %v1460
    %v2005 = vpack.c.b16 %v1469, %v1461
    %v2006 = vpack.c.b16 %v1470, %v1462
    %v2007 = vpack.c.b16 %v1471, %v1463
    %v2008 = vpack.c.b16 %v1480, %v1472
    %v2009 = vpack.c.b16 %v1481, %v1473
    %v2010 = vpack.c.b16 %v1482, %v1474
    %v2011 = vpack.c.b16 %v1483, %v1475
    %v2012 = vpack.c.b16 %v1484, %v1476
    %v2013 = vpack.c.b16 %v1485, %v1477
    %v2014 = vpack.c.b16 %v1486, %v1478
    %v2015 = vpack.c.b16 %v1487, %v1479
    %v2016 = vpack.c.b16 %v1496, %v1488
    %v2017 = vpack.c.b16 %v1497, %v1489
    %v2018 = vpack.c.b16 %v1498, %v1490
    %v2019 = vpack.c.b16 %v1499, %v1491
    %v2020 = vpack.c.b16 %v1500, %v1492
    %v2021 = vpack.c.b16 %v1501, %v1493
    %v2022 = vpack.c.b16 %v1502, %v1494
    %v2023 = vpack.c.b16 %v1503, %v1495
    %v2024 = vpack.c.b16 %v1512, %v1504
    %v2025 = vpack.c.b16 %v1513, %v1505
    %v2026 = vpack.c.b16 %v1514, %v1506
    %v2027 = vpack.c.b16 %v1515, %v1507
    %v2028 = vpack.c.b16 %v1516, %v1508
    %v2029 = vpack.c.b16 %v1517, %v1509
    %v2030 = vpack.c.b16 %v1518, %v1510
    %v2031 = vpack.c.b16 %v1519, %v1511
    %v2032 = vpack.c.b16 %v1528, %v1520
    %v2033 = vpack.c.b16 %v1529, %v1521
    %v2034 = vpack.c.b16 %v1530, %v1522
    %v2035 = vpack.c.b16 %v1531, %v1523
    %v2036 = vpack.c.b16 %v1532, %v1524
    %v2037 = vpack.c.b16 %v1533, %v1525
    %v2038 = vpack.c.b16 %v1534, %v1526
    %v2039 = vpack.c.b16 %v1535, %v1527
    %v2040 = vpack.c.b16 %v1544, %v1536
    %v2041 = vpack.c.b16 %v1545, %v1537
    %v2042 = vpack.c.b16 %v1546, %v1538
    %v2043 = vpack.c.b16 %v1547, %v1539
    %v2044 = vpack.c.b16 %v1548, %v1540
    %v2045 = vpack.c.b16 %v1549, %v1541
    %v2046 = vpack.c.b16 %v1550, %v1542
    %v2047 = vpack.c.b16 %v1551, %v1543
    %v2048 = vpack.c.b16 %v1560, %v1552
    %v2049 = vpack.c.b16 %v1561, %v1553
    %v2050 = vpack.c.b16 %v1562, %v1554
    %v2051 = vpack.c.b16 %v1563, %v1555
    %v2052 = vpack.c.b16 %v1564, %v1556
    %v2053 = vpack.c.b16 %v1565, %v1557
    %v2054 = vpack.c.b16 %v1566, %v1558
    %v2055 = vpack.c.b16 %v1567, %v1559
    %v2056 = vpack.c.b16 %v1576, %v1568
    %v2057 = vpack.c.b16 %v1577, %v1569
    %v2058 = vpack.c.b16 %v1578, %v1570
    %v2059 = vpack.c.b16 %v1579, %v1571
    %v2060 = vpack.c.b16 %v1580, %v1572
    %v2061 = vpack.c.b16 %v1581, %v1573
    %v2062 = vpack.c.b16 %v1582, %v1574
    %v2063 = vpack.c.b16 %v1583, %v1575
    %v2064 = vpack.c.b16 %v1592, %v1584
    %v2065 = vpack.c.b16 %v1593, %v1585
    %v2066 = vpack.c.b16 %v1594, %v1586
    %v2067 = vpack.c.b16 %v1595, %v1587
    %v2068 = vpack.c.b16 %v1596, %v1588
    %v2069 = vpack.c.b16 %v1597, %v1589
    %v2070 = vpack.c.b16 %v1598, %v1590
    %v2071 = vpack.c.b16 %v1599, %v1591
    %v2072 = vpack.c.b16 %v1608, %v1600
    %v2073 = vpack.c.b16 %v1609, %v1601
    %v2074 = vpack.c.b16 %v1610, %v1602
    %v2075 = vpack.c.b16 %v1611, %v1603
    %v2076 = vpack.c.b16 %v1612, %v1604
    %v2077 = vpack.c.b16 %v1613, %v1605
    %v2078 = vpack.c.b16 %v1614, %v1606
    %v2079 = vpack.c.b16 %v1615, %v1607
    %v2080 = vpack.c.b16 %v1624, %v1616
    %v2081 = vpack.c.b16 %v1625, %v1617
    %v2082 = vpack.c.b16 %v1626, %v1618
    %v2083 = vpack.c.b16 %v1627, %v1619
    %v2084 = vpack.c.b16 %v1628, %v1620
    %v2085 = vpack.c.b16 %v1629, %v1621
    %v2086 = vpack.c.b16 %v1630, %v1622
    %v2087 = vpack.c.b16 %v1631, %v1623
    %v2088 = vpack.c.b16 %v1640, %v1632
    %v2089 = vpack.c.b16 %v1641, %v1633
    %v2090 = vpack.c.b16 %v1642, %v1634
    %v2091 = vpack.c.b16 %v1643, %v1635
    %v2092 = vpack.c.b16 %v1644, %v1636
    %v2093 = vpack.c.b16 %v1645, %v1637
    %v2094 = vpack.c.b16 %v1646, %v1638
    %v2095 = vpack.c.b16 %v1647, %v1639
    %v2096 = vpack.c.b16 %v1656, %v1648
    %v2097 = vpack.c.b16 %v1657, %v1649
    %v2098 = vpack.c.b16 %v1658, %v1650
    %v2099 = vpack.c.b16 %v1659, %v1651
    %v2100 = vpack.c.b16 %v1660, %v1652
    %v2101 = vpack.c.b16 %v1661, %v1653
    %v2102 = vpack.c.b16 %v1662, %v1654
    %v2103 = vpack.c.b16 %v1663, %v1655
    %v2104 = vpack.c.b16 %v1672, %v1664
    %v2105 = vpack.c.b16 %v1673, %v1665
    %v2106 = vpack.c.b16 %v1674, %v1666
    %v2107 = vpack.c.b16 %v1675, %v1667
    %v2108 = vpack.c.b16 %v1676, %v1668
    %v2109 = vpack.c.b16 %v1677, %v1669
    %v2110 = vpack.c.b16 %v1678, %v1670
    %v2111 = vpack.c.b16 %v1679, %v1671
    %v2112 = vpack.c.b16 %v1688, %v1680
    %v2113 = vpack.c.b16 %v1689, %v1681
    %v2114 = vpack.c.b16 %v1690, %v1682
    %v2115 = vpack.c.b16 %v1691, %v1683
    %v2116 = vpack.c.b16 %v1692, %v1684
    %v2117 = vpack.c.b16 %v1693, %v1685
    %v2118 = vpack.c.b16 %v1694, %v1686
    %v2119 = vpack.c.b16 %v1695, %v1687
    %v2120 = vpack.c.b16 %v1704, %v1696
    %v2121 = vpack.c.b16 %v1705, %v1697
    %v2122 = vpack.c.b16 %v1706, %v1698
    %v2123 = vpack.c.b16 %v1707, %v1699
    %v2124 = vpack.c.b16 %v1708, %v1700
    %v2125 = vpack.c.b16 %v1709, %v1701
    %v2126 = vpack.c.b16 %v1710, %v1702
    %v2127 = vpack.c.b16 %v1711, %v1703
    %v2128 = vpack.c.b16 %v1720, %v1712
    %v2129 = vpack.c.b16 %v1721, %v1713
    %v2130 = vpack.c.b16 %v1722, %v1714
    %v2131 = vpack.c.b16 %v1723, %v1715
    %v2132 = vpack.c.b16 %v1724, %v1716
    %v2133 = vpack.c.b16 %v1725, %v1717
    %v2134 = vpack.c.b16 %v1726, %v1718
    %v2135 = vpack.c.b16 %v1727, %v1719
    %v2136 = vpack.c.b16 %v1736, %v1728
    %v2137 = vpack.c.b16 %v1737, %v1729
    %v2138 = vpack.c.b16 %v1738, %v1730
    %v2139 = vpack.c.b16 %v1739, %v1731
    %v2140 = vpack.c.b16 %v1740, %v1732
    %v2141 = vpack.c.b16 %v1741, %v1733
    %v2142 = vpack.c.b16 %v1742, %v1734
    %v2143 = vpack.c.b16 %v1743, %v1735
    %v2144 = vpack.c.b16 %v1752, %v1744
    %v2145 = vpack.c.b16 %v1753, %v1745
    %v2146 = vpack.c.b16 %v1754, %v1746
    %v2147 = vpack.c.b16 %v1755, %v1747
    %v2148 = vpack.c.b16 %v1756, %v1748
    %v2149 = vpack.c.b16 %v1757, %v1749
    %v2150 = vpack.c.b16 %v1758, %v1750
    %v2151 = vpack.c.b16 %v1759, %v1751
    %v2152 = vpack.c.b16 %v1768, %v1760
    %v2153 = vpack.c.b16 %v1769, %v1761
    %v2154 = vpack.c.b16 %v1770, %v1762
    %v2155 = vpack.c.b16 %v1771, %v1763
    %v2156 = vpack.c.b16 %v1772, %v1764
    %v2157 = vpack.c.b16 %v1773, %v1765
    %v2158 = vpack.c.b16 %v1774, %v1766
    %v2159 = vpack.c.b16 %v1775, %v1767
    %2544 = vmatpush.bf16.msra.mxu0 %v1832
    %2545 = vmatpush.bf16.msra.mxu0 %v1824
    %2546 = vmatpush.bf16.msra.mxu0 %v1816
    %2547 = vmatpush.bf16.msra.mxu0 %v1808
    %2548 = vmatpush.bf16.msra.mxu0 %v1800
    %2549 = vmatpush.bf16.msra.mxu0 %v1792
    %2550 = vmatpush.bf16.msra.mxu0 %v1784
    %2551 = vmatpush.bf16.msra.mxu0 %v1776
    %2552 = vmatmul.bf16.gmra.mxu0 %v612
    %v2553 = vpop.f32.mrf.mxu0
    %v2554 = vadd.f32 %v587, %v2553
    %v2555 = vpop.f32.mrf.mxu0
    %2556 = vdwg.mxu0
    %2557 = vmatpush.bf16.msra.mxu0 %v1896
    %2558 = vmatpush.bf16.msra.mxu0 %v1888
    %2559 = vmatpush.bf16.msra.mxu0 %v1880
    %2560 = vmatpush.bf16.msra.mxu0 %v1872
    %2561 = vmatpush.bf16.msra.mxu0 %v1864
    %2562 = vmatpush.bf16.msra.mxu0 %v1856
    %2563 = vmatpush.bf16.msra.mxu0 %v1848
    %2564 = vmatpush.bf16.msra.mxu0 %v1840
    %2565 = vmatmul.bf16.gmra.mxu0 %v613
    %v2566 = vpop.f32.mrf.mxu0
    %v2567 = vadd.f32 %v2554, %v2566
    %v2568 = vpop.f32.mrf.mxu0
    %2569 = vdwg.mxu0
    %2570 = vmatpush.bf16.msra.mxu0 %v1960
    %2571 = vmatpush.bf16.msra.mxu0 %v1952
    %2572 = vmatpush.bf16.msra.mxu0 %v1944
    %2573 = vmatpush.bf16.msra.mxu0 %v1936
    %2574 = vmatpush.bf16.msra.mxu0 %v1928
    %2575 = vmatpush.bf16.msra.mxu0 %v1920
    %2576 = vmatpush.bf16.msra.mxu0 %v1912
    %2577 = vmatpush.bf16.msra.mxu0 %v1904
    %2578 = vmatmul.bf16.gmra.mxu0 %v614
    %v2579 = vpop.f32.mrf.mxu0
    %v2580 = vadd.f32 %v2567, %v2579
    %v2581 = vpop.f32.mrf.mxu0
    %2582 = vdwg.mxu0
    %2583 = vmatpush.bf16.msra.mxu0 %v2024
    %2584 = vmatpush.bf16.msra.mxu0 %v2016
    %2585 = vmatpush.bf16.msra.mxu0 %v2008
    %2586 = vmatpush.bf16.msra.mxu0 %v2000
    %2587 = vmatpush.bf16.msra.mxu0 %v1992
    %2588 = vmatpush.bf16.msra.mxu0 %v1984
    %2589 = vmatpush.bf16.msra.mxu0 %v1976
    %2590 = vmatpush.bf16.msra.mxu0 %v1968
    %2591 = vmatmul.bf16.gmra.mxu0 %v615
    %v2592 = vpop.f32.mrf.mxu0
    %v2593 = vadd.f32 %v2580, %v2592
    %v2594 = vpop.f32.mrf.mxu0
    %2595 = vdwg.mxu0
    %2596 = vmatpush.bf16.msra.mxu0 %v2088
    %2597 = vmatpush.bf16.msra.mxu0 %v2080
    %2598 = vmatpush.bf16.msra.mxu0 %v2072
    %2599 = vmatpush.bf16.msra.mxu0 %v2064
    %2600 = vmatpush.bf16.msra.mxu0 %v2056
    %2601 = vmatpush.bf16.msra.mxu0 %v2048
    %2602 = vmatpush.bf16.msra.mxu0 %v2040
    %2603 = vmatpush.bf16.msra.mxu0 %v2032
    %2604 = vmatmul.bf16.gmra.mxu0 %v616
    %v2605 = vpop.f32.mrf.mxu0
    %v2606 = vadd.f32 %v2593, %v2605
    %v2607 = vpop.f32.mrf.mxu0
    %2608 = vdwg.mxu0
    %2609 = vmatpush.bf16.msra.mxu0 %v2152
    %2610 = vmatpush.bf16.msra.mxu0 %v2144
    %2611 = vmatpush.bf16.msra.mxu0 %v2136
    %2612 = vmatpush.bf16.msra.mxu0 %v2128
    %2613 = vmatpush.bf16.msra.mxu0 %v2120
    %2614 = vmatpush.bf16.msra.mxu0 %v2112
    %2615 = vmatpush.bf16.msra.mxu0 %v2104
    %2616 = vmatpush.bf16.msra.mxu0 %v2096
    %2617 = vmatmul.bf16.gmra.mxu0 %v617
    %v2618 = vpop.f32.mrf.mxu0
    %v2619 = vadd.f32 %v2606, %v2618
    %v2620 = vpop.f32.mrf.mxu0
    %2621 = vdwg.mxu0
    %2622 = vmatpush.bf16.msra.mxu0 %v1833
    %2623 = vmatpush.bf16.msra.mxu0 %v1825
    %2624 = vmatpush.bf16.msra.mxu0 %v1817
    %2625 = vmatpush.bf16.msra.mxu0 %v1809
    %2626 = vmatpush.bf16.msra.mxu0 %v1801
    %2627 = vmatpush.bf16.msra.mxu0 %v1793
    %2628 = vmatpush.bf16.msra.mxu0 %v1785
    %2629 = vmatpush.bf16.msra.mxu0 %v1777
    %2630 = vmatmul.bf16.gmra.mxu0 %v612
    %v2631 = vpop.f32.mrf.mxu0
    %v2632 = vadd.f32 %v588, %v2631
    %v2633 = vpop.f32.mrf.mxu0
    %2634 = vdwg.mxu0
    %2635 = vmatpush.bf16.msra.mxu0 %v1897
    %2636 = vmatpush.bf16.msra.mxu0 %v1889
    %2637 = vmatpush.bf16.msra.mxu0 %v1881
    %2638 = vmatpush.bf16.msra.mxu0 %v1873
    %2639 = vmatpush.bf16.msra.mxu0 %v1865
    %2640 = vmatpush.bf16.msra.mxu0 %v1857
    %2641 = vmatpush.bf16.msra.mxu0 %v1849
    %2642 = vmatpush.bf16.msra.mxu0 %v1841
    %2643 = vmatmul.bf16.gmra.mxu0 %v613
    %v2644 = vpop.f32.mrf.mxu0
    %v2645 = vadd.f32 %v2632, %v2644
    %v2646 = vpop.f32.mrf.mxu0
    %2647 = vdwg.mxu0
    %2648 = vmatpush.bf16.msra.mxu0 %v1961
    %2649 = vmatpush.bf16.msra.mxu0 %v1953
    %2650 = vmatpush.bf16.msra.mxu0 %v1945
    %2651 = vmatpush.bf16.msra.mxu0 %v1937
    %2652 = vmatpush.bf16.msra.mxu0 %v1929
    %2653 = vmatpush.bf16.msra.mxu0 %v1921
    %2654 = vmatpush.bf16.msra.mxu0 %v1913
    %2655 = vmatpush.bf16.msra.mxu0 %v1905
    %2656 = vmatmul.bf16.gmra.mxu0 %v614
    %v2657 = vpop.f32.mrf.mxu0
    %v2658 = vadd.f32 %v2645, %v2657
    %v2659 = vpop.f32.mrf.mxu0
    %2660 = vdwg.mxu0
    %2661 = vmatpush.bf16.msra.mxu0 %v2025
    %2662 = vmatpush.bf16.msra.mxu0 %v2017
    %2663 = vmatpush.bf16.msra.mxu0 %v2009
    %2664 = vmatpush.bf16.msra.mxu0 %v2001
    %2665 = vmatpush.bf16.msra.mxu0 %v1993
    %2666 = vmatpush.bf16.msra.mxu0 %v1985
    %2667 = vmatpush.bf16.msra.mxu0 %v1977
    %2668 = vmatpush.bf16.msra.mxu0 %v1969
    %2669 = vmatmul.bf16.gmra.mxu0 %v615
    %v2670 = vpop.f32.mrf.mxu0
    %v2671 = vadd.f32 %v2658, %v2670
    %v2672 = vpop.f32.mrf.mxu0
    %2673 = vdwg.mxu0
    %2674 = vmatpush.bf16.msra.mxu0 %v2089
    %2675 = vmatpush.bf16.msra.mxu0 %v2081
    %2676 = vmatpush.bf16.msra.mxu0 %v2073
    %2677 = vmatpush.bf16.msra.mxu0 %v2065
    %2678 = vmatpush.bf16.msra.mxu0 %v2057
    %2679 = vmatpush.bf16.msra.mxu0 %v2049
    %2680 = vmatpush.bf16.msra.mxu0 %v2041
    %2681 = vmatpush.bf16.msra.mxu0 %v2033
    %2682 = vmatmul.bf16.gmra.mxu0 %v616
    %v2683 = vpop.f32.mrf.mxu0
    %v2684 = vadd.f32 %v2671, %v2683
    %v2685 = vpop.f32.mrf.mxu0
    %2686 = vdwg.mxu0
    %2687 = vmatpush.bf16.msra.mxu0 %v2153
    %2688 = vmatpush.bf16.msra.mxu0 %v2145
    %2689 = vmatpush.bf16.msra.mxu0 %v2137
    %2690 = vmatpush.bf16.msra.mxu0 %v2129
    %2691 = vmatpush.bf16.msra.mxu0 %v2121
    %2692 = vmatpush.bf16.msra.mxu0 %v2113
    %2693 = vmatpush.bf16.msra.mxu0 %v2105
    %2694 = vmatpush.bf16.msra.mxu0 %v2097
    %2695 = vmatmul.bf16.gmra.mxu0 %v617
    %v2696 = vpop.f32.mrf.mxu0
    %v2697 = vadd.f32 %v2684, %v2696
    %v2698 = vpop.f32.mrf.mxu0
    %2699 = vdwg.mxu0
    %2700 = vmatpush.bf16.msra.mxu0 %v1834
    %2701 = vmatpush.bf16.msra.mxu0 %v1826
    %2702 = vmatpush.bf16.msra.mxu0 %v1818
    %2703 = vmatpush.bf16.msra.mxu0 %v1810
    %2704 = vmatpush.bf16.msra.mxu0 %v1802
    %2705 = vmatpush.bf16.msra.mxu0 %v1794
    %2706 = vmatpush.bf16.msra.mxu0 %v1786
    %2707 = vmatpush.bf16.msra.mxu0 %v1778
    %2708 = vmatmul.bf16.gmra.mxu0 %v612
    %v2709 = vpop.f32.mrf.mxu0
    %v2710 = vadd.f32 %v589, %v2709
    %v2711 = vpop.f32.mrf.mxu0
    %2712 = vdwg.mxu0
    %2713 = vmatpush.bf16.msra.mxu0 %v1898
    %2714 = vmatpush.bf16.msra.mxu0 %v1890
    %2715 = vmatpush.bf16.msra.mxu0 %v1882
    %2716 = vmatpush.bf16.msra.mxu0 %v1874
    %2717 = vmatpush.bf16.msra.mxu0 %v1866
    %2718 = vmatpush.bf16.msra.mxu0 %v1858
    %2719 = vmatpush.bf16.msra.mxu0 %v1850
    %2720 = vmatpush.bf16.msra.mxu0 %v1842
    %2721 = vmatmul.bf16.gmra.mxu0 %v613
    %v2722 = vpop.f32.mrf.mxu0
    %v2723 = vadd.f32 %v2710, %v2722
    %v2724 = vpop.f32.mrf.mxu0
    %2725 = vdwg.mxu0
    %2726 = vmatpush.bf16.msra.mxu0 %v1962
    %2727 = vmatpush.bf16.msra.mxu0 %v1954
    %2728 = vmatpush.bf16.msra.mxu0 %v1946
    %2729 = vmatpush.bf16.msra.mxu0 %v1938
    %2730 = vmatpush.bf16.msra.mxu0 %v1930
    %2731 = vmatpush.bf16.msra.mxu0 %v1922
    %2732 = vmatpush.bf16.msra.mxu0 %v1914
    %2733 = vmatpush.bf16.msra.mxu0 %v1906
    %2734 = vmatmul.bf16.gmra.mxu0 %v614
    %v2735 = vpop.f32.mrf.mxu0
    %v2736 = vadd.f32 %v2723, %v2735
    %v2737 = vpop.f32.mrf.mxu0
    %2738 = vdwg.mxu0
    %2739 = vmatpush.bf16.msra.mxu0 %v2026
    %2740 = vmatpush.bf16.msra.mxu0 %v2018
    %2741 = vmatpush.bf16.msra.mxu0 %v2010
    %2742 = vmatpush.bf16.msra.mxu0 %v2002
    %2743 = vmatpush.bf16.msra.mxu0 %v1994
    %2744 = vmatpush.bf16.msra.mxu0 %v1986
    %2745 = vmatpush.bf16.msra.mxu0 %v1978
    %2746 = vmatpush.bf16.msra.mxu0 %v1970
    %2747 = vmatmul.bf16.gmra.mxu0 %v615
    %v2748 = vpop.f32.mrf.mxu0
    %v2749 = vadd.f32 %v2736, %v2748
    %v2750 = vpop.f32.mrf.mxu0
    %2751 = vdwg.mxu0
    %2752 = vmatpush.bf16.msra.mxu0 %v2090
    %2753 = vmatpush.bf16.msra.mxu0 %v2082
    %2754 = vmatpush.bf16.msra.mxu0 %v2074
    %2755 = vmatpush.bf16.msra.mxu0 %v2066
    %2756 = vmatpush.bf16.msra.mxu0 %v2058
    %2757 = vmatpush.bf16.msra.mxu0 %v2050
    %2758 = vmatpush.bf16.msra.mxu0 %v2042
    %2759 = vmatpush.bf16.msra.mxu0 %v2034
    %2760 = vmatmul.bf16.gmra.mxu0 %v616
    %v2761 = vpop.f32.mrf.mxu0
    %v2762 = vadd.f32 %v2749, %v2761
    %v2763 = vpop.f32.mrf.mxu0
    %2764 = vdwg.mxu0
    %2765 = vmatpush.bf16.msra.mxu0 %v2154
    %2766 = vmatpush.bf16.msra.mxu0 %v2146
    %2767 = vmatpush.bf16.msra.mxu0 %v2138
    %2768 = vmatpush.bf16.msra.mxu0 %v2130
    %2769 = vmatpush.bf16.msra.mxu0 %v2122
    %2770 = vmatpush.bf16.msra.mxu0 %v2114
    %2771 = vmatpush.bf16.msra.mxu0 %v2106
    %2772 = vmatpush.bf16.msra.mxu0 %v2098
    %2773 = vmatmul.bf16.gmra.mxu0 %v617
    %v2774 = vpop.f32.mrf.mxu0
    %v2775 = vadd.f32 %v2762, %v2774
    %v2776 = vpop.f32.mrf.mxu0
    %2777 = vdwg.mxu0
    %2778 = vmatpush.bf16.msra.mxu0 %v1835
    %2779 = vmatpush.bf16.msra.mxu0 %v1827
    %2780 = vmatpush.bf16.msra.mxu0 %v1819
    %2781 = vmatpush.bf16.msra.mxu0 %v1811
    %2782 = vmatpush.bf16.msra.mxu0 %v1803
    %2783 = vmatpush.bf16.msra.mxu0 %v1795
    %2784 = vmatpush.bf16.msra.mxu0 %v1787
    %2785 = vmatpush.bf16.msra.mxu0 %v1779
    %2786 = vmatmul.bf16.gmra.mxu0 %v612
    %v2787 = vpop.f32.mrf.mxu0
    %v2788 = vadd.f32 %v590, %v2787
    %v2789 = vpop.f32.mrf.mxu0
    %2790 = vdwg.mxu0
    %2791 = vmatpush.bf16.msra.mxu0 %v1899
    %2792 = vmatpush.bf16.msra.mxu0 %v1891
    %2793 = vmatpush.bf16.msra.mxu0 %v1883
    %2794 = vmatpush.bf16.msra.mxu0 %v1875
    %2795 = vmatpush.bf16.msra.mxu0 %v1867
    %2796 = vmatpush.bf16.msra.mxu0 %v1859
    %2797 = vmatpush.bf16.msra.mxu0 %v1851
    %2798 = vmatpush.bf16.msra.mxu0 %v1843
    %2799 = vmatmul.bf16.gmra.mxu0 %v613
    %v2800 = vpop.f32.mrf.mxu0
    %v2801 = vadd.f32 %v2788, %v2800
    %v2802 = vpop.f32.mrf.mxu0
    %2803 = vdwg.mxu0
    %2804 = vmatpush.bf16.msra.mxu0 %v1963
    %2805 = vmatpush.bf16.msra.mxu0 %v1955
    %2806 = vmatpush.bf16.msra.mxu0 %v1947
    %2807 = vmatpush.bf16.msra.mxu0 %v1939
    %2808 = vmatpush.bf16.msra.mxu0 %v1931
    %2809 = vmatpush.bf16.msra.mxu0 %v1923
    %2810 = vmatpush.bf16.msra.mxu0 %v1915
    %2811 = vmatpush.bf16.msra.mxu0 %v1907
    %2812 = vmatmul.bf16.gmra.mxu0 %v614
    %v2813 = vpop.f32.mrf.mxu0
    %v2814 = vadd.f32 %v2801, %v2813
    %v2815 = vpop.f32.mrf.mxu0
    %2816 = vdwg.mxu0
    %2817 = vmatpush.bf16.msra.mxu0 %v2027
    %2818 = vmatpush.bf16.msra.mxu0 %v2019
    %2819 = vmatpush.bf16.msra.mxu0 %v2011
    %2820 = vmatpush.bf16.msra.mxu0 %v2003
    %2821 = vmatpush.bf16.msra.mxu0 %v1995
    %2822 = vmatpush.bf16.msra.mxu0 %v1987
    %2823 = vmatpush.bf16.msra.mxu0 %v1979
    %2824 = vmatpush.bf16.msra.mxu0 %v1971
    %2825 = vmatmul.bf16.gmra.mxu0 %v615
    %v2826 = vpop.f32.mrf.mxu0
    %v2827 = vadd.f32 %v2814, %v2826
    %v2828 = vpop.f32.mrf.mxu0
    %2829 = vdwg.mxu0
    %2830 = vmatpush.bf16.msra.mxu0 %v2091
    %2831 = vmatpush.bf16.msra.mxu0 %v2083
    %2832 = vmatpush.bf16.msra.mxu0 %v2075
    %2833 = vmatpush.bf16.msra.mxu0 %v2067
    %2834 = vmatpush.bf16.msra.mxu0 %v2059
    %2835 = vmatpush.bf16.msra.mxu0 %v2051
    %2836 = vmatpush.bf16.msra.mxu0 %v2043
    %2837 = vmatpush.bf16.msra.mxu0 %v2035
    %2838 = vmatmul.bf16.gmra.mxu0 %v616
    %v2839 = vpop.f32.mrf.mxu0
    %v2840 = vadd.f32 %v2827, %v2839
    %v2841 = vpop.f32.mrf.mxu0
    %2842 = vdwg.mxu0
    %2843 = vmatpush.bf16.msra.mxu0 %v2155
    %2844 = vmatpush.bf16.msra.mxu0 %v2147
    %2845 = vmatpush.bf16.msra.mxu0 %v2139
    %2846 = vmatpush.bf16.msra.mxu0 %v2131
    %2847 = vmatpush.bf16.msra.mxu0 %v2123
    %2848 = vmatpush.bf16.msra.mxu0 %v2115
    %2849 = vmatpush.bf16.msra.mxu0 %v2107
    %2850 = vmatpush.bf16.msra.mxu0 %v2099
    %2851 = vmatmul.bf16.gmra.mxu0 %v617
    %v2852 = vpop.f32.mrf.mxu0
    %v2853 = vadd.f32 %v2840, %v2852
    %v2854 = vpop.f32.mrf.mxu0
    %2855 = vdwg.mxu0
    %2856 = vmatpush.bf16.msra.mxu0 %v1836
    %2857 = vmatpush.bf16.msra.mxu0 %v1828
    %2858 = vmatpush.bf16.msra.mxu0 %v1820
    %2859 = vmatpush.bf16.msra.mxu0 %v1812
    %2860 = vmatpush.bf16.msra.mxu0 %v1804
    %2861 = vmatpush.bf16.msra.mxu0 %v1796
    %2862 = vmatpush.bf16.msra.mxu0 %v1788
    %2863 = vmatpush.bf16.msra.mxu0 %v1780
    %2864 = vmatmul.bf16.gmra.mxu0 %v612
    %v2865 = vpop.f32.mrf.mxu0
    %v2866 = vadd.f32 %v591, %v2865
    %v2867 = vpop.f32.mrf.mxu0
    %2868 = vdwg.mxu0
    %2869 = vmatpush.bf16.msra.mxu0 %v1900
    %2870 = vmatpush.bf16.msra.mxu0 %v1892
    %2871 = vmatpush.bf16.msra.mxu0 %v1884
    %2872 = vmatpush.bf16.msra.mxu0 %v1876
    %2873 = vmatpush.bf16.msra.mxu0 %v1868
    %2874 = vmatpush.bf16.msra.mxu0 %v1860
    %2875 = vmatpush.bf16.msra.mxu0 %v1852
    %2876 = vmatpush.bf16.msra.mxu0 %v1844
    %2877 = vmatmul.bf16.gmra.mxu0 %v613
    %v2878 = vpop.f32.mrf.mxu0
    %v2879 = vadd.f32 %v2866, %v2878
    %v2880 = vpop.f32.mrf.mxu0
    %2881 = vdwg.mxu0
    %2882 = vmatpush.bf16.msra.mxu0 %v1964
    %2883 = vmatpush.bf16.msra.mxu0 %v1956
    %2884 = vmatpush.bf16.msra.mxu0 %v1948
    %2885 = vmatpush.bf16.msra.mxu0 %v1940
    %2886 = vmatpush.bf16.msra.mxu0 %v1932
    %2887 = vmatpush.bf16.msra.mxu0 %v1924
    %2888 = vmatpush.bf16.msra.mxu0 %v1916
    %2889 = vmatpush.bf16.msra.mxu0 %v1908
    %2890 = vmatmul.bf16.gmra.mxu0 %v614
    %v2891 = vpop.f32.mrf.mxu0
    %v2892 = vadd.f32 %v2879, %v2891
    %v2893 = vpop.f32.mrf.mxu0
    %2894 = vdwg.mxu0
    %2895 = vmatpush.bf16.msra.mxu0 %v2028
    %2896 = vmatpush.bf16.msra.mxu0 %v2020
    %2897 = vmatpush.bf16.msra.mxu0 %v2012
    %2898 = vmatpush.bf16.msra.mxu0 %v2004
    %2899 = vmatpush.bf16.msra.mxu0 %v1996
    %2900 = vmatpush.bf16.msra.mxu0 %v1988
    %2901 = vmatpush.bf16.msra.mxu0 %v1980
    %2902 = vmatpush.bf16.msra.mxu0 %v1972
    %2903 = vmatmul.bf16.gmra.mxu0 %v615
    %v2904 = vpop.f32.mrf.mxu0
    %v2905 = vadd.f32 %v2892, %v2904
    %v2906 = vpop.f32.mrf.mxu0
    %2907 = vdwg.mxu0
    %2908 = vmatpush.bf16.msra.mxu0 %v2092
    %2909 = vmatpush.bf16.msra.mxu0 %v2084
    %2910 = vmatpush.bf16.msra.mxu0 %v2076
    %2911 = vmatpush.bf16.msra.mxu0 %v2068
    %2912 = vmatpush.bf16.msra.mxu0 %v2060
    %2913 = vmatpush.bf16.msra.mxu0 %v2052
    %2914 = vmatpush.bf16.msra.mxu0 %v2044
    %2915 = vmatpush.bf16.msra.mxu0 %v2036
    %2916 = vmatmul.bf16.gmra.mxu0 %v616
    %v2917 = vpop.f32.mrf.mxu0
    %v2918 = vadd.f32 %v2905, %v2917
    %v2919 = vpop.f32.mrf.mxu0
    %2920 = vdwg.mxu0
    %2921 = vmatpush.bf16.msra.mxu0 %v2156
    %2922 = vmatpush.bf16.msra.mxu0 %v2148
    %2923 = vmatpush.bf16.msra.mxu0 %v2140
    %2924 = vmatpush.bf16.msra.mxu0 %v2132
    %2925 = vmatpush.bf16.msra.mxu0 %v2124
    %2926 = vmatpush.bf16.msra.mxu0 %v2116
    %2927 = vmatpush.bf16.msra.mxu0 %v2108
    %2928 = vmatpush.bf16.msra.mxu0 %v2100
    %2929 = vmatmul.bf16.gmra.mxu0 %v617
    %v2930 = vpop.f32.mrf.mxu0
    %v2931 = vadd.f32 %v2918, %v2930
    %v2932 = vpop.f32.mrf.mxu0
    %2933 = vdwg.mxu0
    %2934 = vmatpush.bf16.msra.mxu0 %v1837
    %2935 = vmatpush.bf16.msra.mxu0 %v1829
    %2936 = vmatpush.bf16.msra.mxu0 %v1821
    %2937 = vmatpush.bf16.msra.mxu0 %v1813
    %2938 = vmatpush.bf16.msra.mxu0 %v1805
    %2939 = vmatpush.bf16.msra.mxu0 %v1797
    %2940 = vmatpush.bf16.msra.mxu0 %v1789
    %2941 = vmatpush.bf16.msra.mxu0 %v1781
    %2942 = vmatmul.bf16.gmra.mxu0 %v612
    %v2943 = vpop.f32.mrf.mxu0
    %v2944 = vadd.f32 %v592, %v2943
    %v2945 = vpop.f32.mrf.mxu0
    %2946 = vdwg.mxu0
    %2947 = vmatpush.bf16.msra.mxu0 %v1901
    %2948 = vmatpush.bf16.msra.mxu0 %v1893
    %2949 = vmatpush.bf16.msra.mxu0 %v1885
    %2950 = vmatpush.bf16.msra.mxu0 %v1877
    %2951 = vmatpush.bf16.msra.mxu0 %v1869
    %2952 = vmatpush.bf16.msra.mxu0 %v1861
    %2953 = vmatpush.bf16.msra.mxu0 %v1853
    %2954 = vmatpush.bf16.msra.mxu0 %v1845
    %2955 = vmatmul.bf16.gmra.mxu0 %v613
    %v2956 = vpop.f32.mrf.mxu0
    %v2957 = vadd.f32 %v2944, %v2956
    %v2958 = vpop.f32.mrf.mxu0
    %2959 = vdwg.mxu0
    %2960 = vmatpush.bf16.msra.mxu0 %v1965
    %2961 = vmatpush.bf16.msra.mxu0 %v1957
    %2962 = vmatpush.bf16.msra.mxu0 %v1949
    %2963 = vmatpush.bf16.msra.mxu0 %v1941
    %2964 = vmatpush.bf16.msra.mxu0 %v1933
    %2965 = vmatpush.bf16.msra.mxu0 %v1925
    %2966 = vmatpush.bf16.msra.mxu0 %v1917
    %2967 = vmatpush.bf16.msra.mxu0 %v1909
    %2968 = vmatmul.bf16.gmra.mxu0 %v614
    %v2969 = vpop.f32.mrf.mxu0
    %v2970 = vadd.f32 %v2957, %v2969
    %v2971 = vpop.f32.mrf.mxu0
    %2972 = vdwg.mxu0
    %2973 = vmatpush.bf16.msra.mxu0 %v2029
    %2974 = vmatpush.bf16.msra.mxu0 %v2021
    %2975 = vmatpush.bf16.msra.mxu0 %v2013
    %2976 = vmatpush.bf16.msra.mxu0 %v2005
    %2977 = vmatpush.bf16.msra.mxu0 %v1997
    %2978 = vmatpush.bf16.msra.mxu0 %v1989
    %2979 = vmatpush.bf16.msra.mxu0 %v1981
    %2980 = vmatpush.bf16.msra.mxu0 %v1973
    %2981 = vmatmul.bf16.gmra.mxu0 %v615
    %v2982 = vpop.f32.mrf.mxu0
    %v2983 = vadd.f32 %v2970, %v2982
    %v2984 = vpop.f32.mrf.mxu0
    %2985 = vdwg.mxu0
    %2986 = vmatpush.bf16.msra.mxu0 %v2093
    %2987 = vmatpush.bf16.msra.mxu0 %v2085
    %2988 = vmatpush.bf16.msra.mxu0 %v2077
    %2989 = vmatpush.bf16.msra.mxu0 %v2069
    %2990 = vmatpush.bf16.msra.mxu0 %v2061
    %2991 = vmatpush.bf16.msra.mxu0 %v2053
    %2992 = vmatpush.bf16.msra.mxu0 %v2045
    %2993 = vmatpush.bf16.msra.mxu0 %v2037
    %2994 = vmatmul.bf16.gmra.mxu0 %v616
    %v2995 = vpop.f32.mrf.mxu0
    %v2996 = vadd.f32 %v2983, %v2995
    %v2997 = vpop.f32.mrf.mxu0
    %2998 = vdwg.mxu0
    %2999 = vmatpush.bf16.msra.mxu0 %v2157
    %3000 = vmatpush.bf16.msra.mxu0 %v2149
    %3001 = vmatpush.bf16.msra.mxu0 %v2141
    %3002 = vmatpush.bf16.msra.mxu0 %v2133
    %3003 = vmatpush.bf16.msra.mxu0 %v2125
    %3004 = vmatpush.bf16.msra.mxu0 %v2117
    %3005 = vmatpush.bf16.msra.mxu0 %v2109
    %3006 = vmatpush.bf16.msra.mxu0 %v2101
    %3007 = vmatmul.bf16.gmra.mxu0 %v617
    %v3008 = vpop.f32.mrf.mxu0
    %v3009 = vadd.f32 %v2996, %v3008
    %v3010 = vpop.f32.mrf.mxu0
    %3011 = vdwg.mxu0
    %3012 = vmatpush.bf16.msra.mxu0 %v1838
    %3013 = vmatpush.bf16.msra.mxu0 %v1830
    %3014 = vmatpush.bf16.msra.mxu0 %v1822
    %3015 = vmatpush.bf16.msra.mxu0 %v1814
    %3016 = vmatpush.bf16.msra.mxu0 %v1806
    %3017 = vmatpush.bf16.msra.mxu0 %v1798
    %3018 = vmatpush.bf16.msra.mxu0 %v1790
    %3019 = vmatpush.bf16.msra.mxu0 %v1782
    %3020 = vmatmul.bf16.gmra.mxu0 %v612
    %v3021 = vpop.f32.mrf.mxu0
    %v3022 = vadd.f32 %v593, %v3021
    %v3023 = vpop.f32.mrf.mxu0
    %3024 = vdwg.mxu0
    %3025 = vmatpush.bf16.msra.mxu0 %v1902
    %3026 = vmatpush.bf16.msra.mxu0 %v1894
    %3027 = vmatpush.bf16.msra.mxu0 %v1886
    %3028 = vmatpush.bf16.msra.mxu0 %v1878
    %3029 = vmatpush.bf16.msra.mxu0 %v1870
    %3030 = vmatpush.bf16.msra.mxu0 %v1862
    %3031 = vmatpush.bf16.msra.mxu0 %v1854
    %3032 = vmatpush.bf16.msra.mxu0 %v1846
    %3033 = vmatmul.bf16.gmra.mxu0 %v613
    %v3034 = vpop.f32.mrf.mxu0
    %v3035 = vadd.f32 %v3022, %v3034
    %v3036 = vpop.f32.mrf.mxu0
    %3037 = vdwg.mxu0
    %3038 = vmatpush.bf16.msra.mxu0 %v1966
    %3039 = vmatpush.bf16.msra.mxu0 %v1958
    %3040 = vmatpush.bf16.msra.mxu0 %v1950
    %3041 = vmatpush.bf16.msra.mxu0 %v1942
    %3042 = vmatpush.bf16.msra.mxu0 %v1934
    %3043 = vmatpush.bf16.msra.mxu0 %v1926
    %3044 = vmatpush.bf16.msra.mxu0 %v1918
    %3045 = vmatpush.bf16.msra.mxu0 %v1910
    %3046 = vmatmul.bf16.gmra.mxu0 %v614
    %v3047 = vpop.f32.mrf.mxu0
    %v3048 = vadd.f32 %v3035, %v3047
    %v3049 = vpop.f32.mrf.mxu0
    %3050 = vdwg.mxu0
    %3051 = vmatpush.bf16.msra.mxu0 %v2030
    %3052 = vmatpush.bf16.msra.mxu0 %v2022
    %3053 = vmatpush.bf16.msra.mxu0 %v2014
    %3054 = vmatpush.bf16.msra.mxu0 %v2006
    %3055 = vmatpush.bf16.msra.mxu0 %v1998
    %3056 = vmatpush.bf16.msra.mxu0 %v1990
    %3057 = vmatpush.bf16.msra.mxu0 %v1982
    %3058 = vmatpush.bf16.msra.mxu0 %v1974
    %3059 = vmatmul.bf16.gmra.mxu0 %v615
    %v3060 = vpop.f32.mrf.mxu0
    %v3061 = vadd.f32 %v3048, %v3060
    %v3062 = vpop.f32.mrf.mxu0
    %3063 = vdwg.mxu0
    %3064 = vmatpush.bf16.msra.mxu0 %v2094
    %3065 = vmatpush.bf16.msra.mxu0 %v2086
    %3066 = vmatpush.bf16.msra.mxu0 %v2078
    %3067 = vmatpush.bf16.msra.mxu0 %v2070
    %3068 = vmatpush.bf16.msra.mxu0 %v2062
    %3069 = vmatpush.bf16.msra.mxu0 %v2054
    %3070 = vmatpush.bf16.msra.mxu0 %v2046
    %3071 = vmatpush.bf16.msra.mxu0 %v2038
    %3072 = vmatmul.bf16.gmra.mxu0 %v616
    %v3073 = vpop.f32.mrf.mxu0
    %v3074 = vadd.f32 %v3061, %v3073
    %v3075 = vpop.f32.mrf.mxu0
    %3076 = vdwg.mxu0
    %3077 = vmatpush.bf16.msra.mxu0 %v2158
    %3078 = vmatpush.bf16.msra.mxu0 %v2150
    %3079 = vmatpush.bf16.msra.mxu0 %v2142
    %3080 = vmatpush.bf16.msra.mxu0 %v2134
    %3081 = vmatpush.bf16.msra.mxu0 %v2126
    %3082 = vmatpush.bf16.msra.mxu0 %v2118
    %3083 = vmatpush.bf16.msra.mxu0 %v2110
    %3084 = vmatpush.bf16.msra.mxu0 %v2102
    %3085 = vmatmul.bf16.gmra.mxu0 %v617
    %v3086 = vpop.f32.mrf.mxu0
    %v3087 = vadd.f32 %v3074, %v3086
    %v3088 = vpop.f32.mrf.mxu0
    %3089 = vdwg.mxu0
    %3090 = vmatpush.bf16.msra.mxu0 %v1839
    %3091 = vmatpush.bf16.msra.mxu0 %v1831
    %3092 = vmatpush.bf16.msra.mxu0 %v1823
    %3093 = vmatpush.bf16.msra.mxu0 %v1815
    %3094 = vmatpush.bf16.msra.mxu0 %v1807
    %3095 = vmatpush.bf16.msra.mxu0 %v1799
    %3096 = vmatpush.bf16.msra.mxu0 %v1791
    %3097 = vmatpush.bf16.msra.mxu0 %v1783
    %3098 = vmatmul.bf16.gmra.mxu0 %v612
    %v3099 = vpop.f32.mrf.mxu0
    %v3100 = vadd.f32 %v594, %v3099
    %v3101 = vpop.f32.mrf.mxu0
    %3102 = vdwg.mxu0
    %3103 = vmatpush.bf16.msra.mxu0 %v1903
    %3104 = vmatpush.bf16.msra.mxu0 %v1895
    %3105 = vmatpush.bf16.msra.mxu0 %v1887
    %3106 = vmatpush.bf16.msra.mxu0 %v1879
    %3107 = vmatpush.bf16.msra.mxu0 %v1871
    %3108 = vmatpush.bf16.msra.mxu0 %v1863
    %3109 = vmatpush.bf16.msra.mxu0 %v1855
    %3110 = vmatpush.bf16.msra.mxu0 %v1847
    %3111 = vmatmul.bf16.gmra.mxu0 %v613
    %v3112 = vpop.f32.mrf.mxu0
    %v3113 = vadd.f32 %v3100, %v3112
    %v3114 = vpop.f32.mrf.mxu0
    %3115 = vdwg.mxu0
    %3116 = vmatpush.bf16.msra.mxu0 %v1967
    %3117 = vmatpush.bf16.msra.mxu0 %v1959
    %3118 = vmatpush.bf16.msra.mxu0 %v1951
    %3119 = vmatpush.bf16.msra.mxu0 %v1943
    %3120 = vmatpush.bf16.msra.mxu0 %v1935
    %3121 = vmatpush.bf16.msra.mxu0 %v1927
    %3122 = vmatpush.bf16.msra.mxu0 %v1919
    %3123 = vmatpush.bf16.msra.mxu0 %v1911
    %3124 = vmatmul.bf16.gmra.mxu0 %v614
    %v3125 = vpop.f32.mrf.mxu0
    %v3126 = vadd.f32 %v3113, %v3125
    %v3127 = vpop.f32.mrf.mxu0
    %3128 = vdwg.mxu0
    %3129 = vmatpush.bf16.msra.mxu0 %v2031
    %3130 = vmatpush.bf16.msra.mxu0 %v2023
    %3131 = vmatpush.bf16.msra.mxu0 %v2015
    %3132 = vmatpush.bf16.msra.mxu0 %v2007
    %3133 = vmatpush.bf16.msra.mxu0 %v1999
    %3134 = vmatpush.bf16.msra.mxu0 %v1991
    %3135 = vmatpush.bf16.msra.mxu0 %v1983
    %3136 = vmatpush.bf16.msra.mxu0 %v1975
    %3137 = vmatmul.bf16.gmra.mxu0 %v615
    %v3138 = vpop.f32.mrf.mxu0
    %v3139 = vadd.f32 %v3126, %v3138
    %v3140 = vpop.f32.mrf.mxu0
    %3141 = vdwg.mxu0
    %3142 = vmatpush.bf16.msra.mxu0 %v2095
    %3143 = vmatpush.bf16.msra.mxu0 %v2087
    %3144 = vmatpush.bf16.msra.mxu0 %v2079
    %3145 = vmatpush.bf16.msra.mxu0 %v2071
    %3146 = vmatpush.bf16.msra.mxu0 %v2063
    %3147 = vmatpush.bf16.msra.mxu0 %v2055
    %3148 = vmatpush.bf16.msra.mxu0 %v2047
    %3149 = vmatpush.bf16.msra.mxu0 %v2039
    %3150 = vmatmul.bf16.gmra.mxu0 %v616
    %v3151 = vpop.f32.mrf.mxu0
    %v3152 = vadd.f32 %v3139, %v3151
    %v3153 = vpop.f32.mrf.mxu0
    %3154 = vdwg.mxu0
    %3155 = vmatpush.bf16.msra.mxu0 %v2159
    %3156 = vmatpush.bf16.msra.mxu0 %v2151
    %3157 = vmatpush.bf16.msra.mxu0 %v2143
    %3158 = vmatpush.bf16.msra.mxu0 %v2135
    %3159 = vmatpush.bf16.msra.mxu0 %v2127
    %3160 = vmatpush.bf16.msra.mxu0 %v2119
    %3161 = vmatpush.bf16.msra.mxu0 %v2111
    %3162 = vmatpush.bf16.msra.mxu0 %v2103
    %3163 = vmatmul.bf16.gmra.mxu0 %v617
    %v3164 = vpop.f32.mrf.mxu0
    %v3165 = vadd.f32 %v3152, %v3164
    %v3166 = vpop.f32.mrf.mxu0
    %3167 = vdwg.mxu0
    %v3168 = vmax.f32 %v2619, 0.0
    %v3169 = vmax.f32 %v2697, 0.0
    %v3170 = vmax.f32 %v2775, 0.0
    %v3171 = vmax.f32 %v2853, 0.0
    %v3172 = vmax.f32 %v2931, 0.0
    %v3173 = vmax.f32 %v3009, 0.0
    %v3174 = vmax.f32 %v3087, 0.0
    %v3175 = vmax.f32 %v3165, 0.0
    %v3176 = vpack.c.bf16 %v3168, %v3168
    %v3177 = vpack.c.bf16 %v3169, %v3169
    %v3178 = vpack.c.bf16 %v3170, %v3170
    %v3179 = vpack.c.bf16 %v3171, %v3171
    %v3180 = vpack.c.bf16 %v3172, %v3172
    %v3181 = vpack.c.bf16 %v3173, %v3173
    %v3182 = vpack.c.bf16 %v3174, %v3174
    %v3183 = vpack.c.bf16 %v3175, %v3175
    %v3184 = vld [vmem:[#allocation8] sm:$0xff]
    %v3185 = vld [vmem:[#allocation8 + $0x8] sm:$0xff]
    %v3186 = vld [vmem:[#allocation8 + $0x10] sm:$0xff]
    %v3187 = vld [vmem:[#allocation8 + $0x18] sm:$0xff]
    %v3188 = vld [vmem:[#allocation8 + $0x20] sm:$0xff]
    %v3189 = vld [vmem:[#allocation8 + $0x28] sm:$0xff]
    %v3190 = vld [vmem:[#allocation8 + $0x30] sm:$0xff]
    %v3191 = vld [vmem:[#allocation8 + $0x38] sm:$0xff]
    %v3192 = vld [vmem:[#allocation8 + $0x40] sm:$0xff]
    %v3193 = vld [vmem:[#allocation8 + $0x48] sm:$0xff]
    %v3194 = vld [vmem:[#allocation8 + $0x50] sm:$0xff]
    %v3195 = vld [vmem:[#allocation8 + $0x58] sm:$0xff]
    %v3196 = vld [vmem:[#allocation8 + $0x60] sm:$0xff]
    %v3197 = vld [vmem:[#allocation8 + $0x68] sm:$0xff]
    %v3198 = vld [vmem:[#allocation8 + $0x70] sm:$0xff]
    %v3199 = vld [vmem:[#allocation8 + $0x78] sm:$0xff]
    %v3200 = vld [vmem:[#allocation8 + $0x80] sm:$0xff]
    %v3201 = vld [vmem:[#allocation8 + $0x88] sm:$0xff]
    %v3202 = vld [vmem:[#allocation8 + $0x90] sm:$0xff]
    %v3203 = vld [vmem:[#allocation8 + $0x98] sm:$0xff]
    %v3204 = vld [vmem:[#allocation8 + $0xa0] sm:$0xff]
    %v3205 = vld [vmem:[#allocation8 + $0xa8] sm:$0xff]
    %v3206 = vld [vmem:[#allocation8 + $0xb0] sm:$0xff]
    %v3207 = vld [vmem:[#allocation8 + $0xb8] sm:$0xff]
    %v3208 = vld [vmem:[#allocation8 + $0xc0] sm:$0xff]
    %v3209 = vld [vmem:[#allocation8 + $0xc8] sm:$0xff]
    %v3210 = vld [vmem:[#allocation8 + $0xd0] sm:$0xff]
    %v3211 = vld [vmem:[#allocation8 + $0xd8] sm:$0xff]
    %v3212 = vld [vmem:[#allocation8 + $0xe0] sm:$0xff]
    %v3213 = vld [vmem:[#allocation8 + $0xe8] sm:$0xff]
    %v3214 = vld [vmem:[#allocation8 + $0xf0] sm:$0xff]
    %v3215 = vld [vmem:[#allocation8 + $0xf8] sm:$0xff]
    %v3216 = vld [vmem:[#allocation8 + $0x100] sm:$0xff]
    %v3217 = vld [vmem:[#allocation8 + $0x108] sm:$0xff]
    %v3218 = vld [vmem:[#allocation8 + $0x110] sm:$0xff]
    %v3219 = vld [vmem:[#allocation8 + $0x118] sm:$0xff]
    %v3220 = vld [vmem:[#allocation8 + $0x120] sm:$0xff]
    %v3221 = vld [vmem:[#allocation8 + $0x128] sm:$0xff]
    %v3222 = vld [vmem:[#allocation8 + $0x130] sm:$0xff]
    %v3223 = vld [vmem:[#allocation8 + $0x138] sm:$0xff]
    %v3224 = vld [vmem:[#allocation8 + $0x140] sm:$0xff]
    %v3225 = vld [vmem:[#allocation8 + $0x148] sm:$0xff]
    %v3226 = vld [vmem:[#allocation8 + $0x150] sm:$0xff]
    %v3227 = vld [vmem:[#allocation8 + $0x158] sm:$0xff]
    %v3228 = vld [vmem:[#allocation8 + $0x160] sm:$0xff]
    %v3229 = vld [vmem:[#allocation8 + $0x168] sm:$0xff]
    %v3230 = vld [vmem:[#allocation8 + $0x170] sm:$0xff]
    %v3231 = vld [vmem:[#allocation8 + $0x178] sm:$0xff]
    %v3232 = vld [vmem:[#allocation8 + $0x180] sm:$0xff]
    %v3233 = vld [vmem:[#allocation8 + $0x188] sm:$0xff]
    %v3234 = vld [vmem:[#allocation8 + $0x190] sm:$0xff]
    %v3235 = vld [vmem:[#allocation8 + $0x198] sm:$0xff]
    %v3236 = vld [vmem:[#allocation8 + $0x1a0] sm:$0xff]
    %v3237 = vld [vmem:[#allocation8 + $0x1a8] sm:$0xff]
    %v3238 = vld [vmem:[#allocation8 + $0x1b0] sm:$0xff]
    %v3239 = vld [vmem:[#allocation8 + $0x1b8] sm:$0xff]
    %v3240 = vld [vmem:[#allocation8 + $0x1c0] sm:$0xff]
    %v3241 = vld [vmem:[#allocation8 + $0x1c8] sm:$0xff]
    %v3242 = vld [vmem:[#allocation8 + $0x1d0] sm:$0xff]
    %v3243 = vld [vmem:[#allocation8 + $0x1d8] sm:$0xff]
    %v3244 = vld [vmem:[#allocation8 + $0x1e0] sm:$0xff]
    %v3245 = vld [vmem:[#allocation8 + $0x1e8] sm:$0xff]
    %v3246 = vld [vmem:[#allocation8 + $0x1f0] sm:$0xff]
    %v3247 = vld [vmem:[#allocation8 + $0x1f8] sm:$0xff]
    %v3248 = vld [vmem:[#allocation8 + $0x200] sm:$0xff]
    %v3249 = vld [vmem:[#allocation8 + $0x208] sm:$0xff]
    %v3250 = vld [vmem:[#allocation8 + $0x210] sm:$0xff]
    %v3251 = vld [vmem:[#allocation8 + $0x218] sm:$0xff]
    %v3252 = vld [vmem:[#allocation8 + $0x220] sm:$0xff]
    %v3253 = vld [vmem:[#allocation8 + $0x228] sm:$0xff]
    %v3254 = vld [vmem:[#allocation8 + $0x230] sm:$0xff]
    %v3255 = vld [vmem:[#allocation8 + $0x238] sm:$0xff]
    %v3256 = vld [vmem:[#allocation8 + $0x240] sm:$0xff]
    %v3257 = vld [vmem:[#allocation8 + $0x248] sm:$0xff]
    %v3258 = vld [vmem:[#allocation8 + $0x250] sm:$0xff]
    %v3259 = vld [vmem:[#allocation8 + $0x258] sm:$0xff]
    %v3260 = vld [vmem:[#allocation8 + $0x260] sm:$0xff]
    %v3261 = vld [vmem:[#allocation8 + $0x268] sm:$0xff]
    %v3262 = vld [vmem:[#allocation8 + $0x270] sm:$0xff]
    %v3263 = vld [vmem:[#allocation8 + $0x278] sm:$0xff]
    %v3264 = vld [vmem:[#allocation8 + $0x280] sm:$0xff]
    %v3265 = vld [vmem:[#allocation8 + $0x288] sm:$0xff]
    %v3266 = vld [vmem:[#allocation8 + $0x290] sm:$0xff]
    %v3267 = vld [vmem:[#allocation8 + $0x298] sm:$0xff]
    %v3268 = vld [vmem:[#allocation8 + $0x2a0] sm:$0xff]
    %v3269 = vld [vmem:[#allocation8 + $0x2a8] sm:$0xff]
    %v3270 = vld [vmem:[#allocation8 + $0x2b0] sm:$0xff]
    %v3271 = vld [vmem:[#allocation8 + $0x2b8] sm:$0xff]
    %v3272 = vld [vmem:[#allocation8 + $0x2c0] sm:$0xff]
    %v3273 = vld [vmem:[#allocation8 + $0x2c8] sm:$0xff]
    %v3274 = vld [vmem:[#allocation8 + $0x2d0] sm:$0xff]
    %v3275 = vld [vmem:[#allocation8 + $0x2d8] sm:$0xff]
    %v3276 = vld [vmem:[#allocation8 + $0x2e0] sm:$0xff]
    %v3277 = vld [vmem:[#allocation8 + $0x2e8] sm:$0xff]
    %v3278 = vld [vmem:[#allocation8 + $0x2f0] sm:$0xff]
    %v3279 = vld [vmem:[#allocation8 + $0x2f8] sm:$0xff]
    %v3280 = vld [vmem:[#allocation8 + $0x300] sm:$0xff]
    %v3281 = vld [vmem:[#allocation8 + $0x308] sm:$0xff]
    %v3282 = vld [vmem:[#allocation8 + $0x310] sm:$0xff]
    %v3283 = vld [vmem:[#allocation8 + $0x318] sm:$0xff]
    %v3284 = vld [vmem:[#allocation8 + $0x320] sm:$0xff]
    %v3285 = vld [vmem:[#allocation8 + $0x328] sm:$0xff]
    %v3286 = vld [vmem:[#allocation8 + $0x330] sm:$0xff]
    %v3287 = vld [vmem:[#allocation8 + $0x338] sm:$0xff]
    %v3288 = vld [vmem:[#allocation8 + $0x340] sm:$0xff]
    %v3289 = vld [vmem:[#allocation8 + $0x348] sm:$0xff]
    %v3290 = vld [vmem:[#allocation8 + $0x350] sm:$0xff]
    %v3291 = vld [vmem:[#allocation8 + $0x358] sm:$0xff]
    %v3292 = vld [vmem:[#allocation8 + $0x360] sm:$0xff]
    %v3293 = vld [vmem:[#allocation8 + $0x368] sm:$0xff]
    %v3294 = vld [vmem:[#allocation8 + $0x370] sm:$0xff]
    %v3295 = vld [vmem:[#allocation8 + $0x378] sm:$0xff]
    %v3296 = vld [vmem:[#allocation8 + $0x380] sm:$0xff]
    %v3297 = vld [vmem:[#allocation8 + $0x388] sm:$0xff]
    %v3298 = vld [vmem:[#allocation8 + $0x390] sm:$0xff]
    %v3299 = vld [vmem:[#allocation8 + $0x398] sm:$0xff]
    %v3300 = vld [vmem:[#allocation8 + $0x3a0] sm:$0xff]
    %v3301 = vld [vmem:[#allocation8 + $0x3a8] sm:$0xff]
    %v3302 = vld [vmem:[#allocation8 + $0x3b0] sm:$0xff]
    %v3303 = vld [vmem:[#allocation8 + $0x3b8] sm:$0xff]
    %v3304 = vld [vmem:[#allocation8 + $0x3c0] sm:$0xff]
    %v3305 = vld [vmem:[#allocation8 + $0x3c8] sm:$0xff]
    %v3306 = vld [vmem:[#allocation8 + $0x3d0] sm:$0xff]
    %v3307 = vld [vmem:[#allocation8 + $0x3d8] sm:$0xff]
    %v3308 = vld [vmem:[#allocation8 + $0x3e0] sm:$0xff]
    %v3309 = vld [vmem:[#allocation8 + $0x3e8] sm:$0xff]
    %v3310 = vld [vmem:[#allocation8 + $0x3f0] sm:$0xff]
    %v3311 = vld [vmem:[#allocation8 + $0x3f8] sm:$0xff]
    %v3312 = vld [vmem:[#allocation8 + $0x400] sm:$0xff]
    %v3313 = vld [vmem:[#allocation8 + $0x408] sm:$0xff]
    %v3314 = vld [vmem:[#allocation8 + $0x410] sm:$0xff]
    %v3315 = vld [vmem:[#allocation8 + $0x418] sm:$0xff]
    %v3316 = vld [vmem:[#allocation8 + $0x420] sm:$0xff]
    %v3317 = vld [vmem:[#allocation8 + $0x428] sm:$0xff]
    %v3318 = vld [vmem:[#allocation8 + $0x430] sm:$0xff]
    %v3319 = vld [vmem:[#allocation8 + $0x438] sm:$0xff]
    %v3320 = vld [vmem:[#allocation8 + $0x440] sm:$0xff]
    %v3321 = vld [vmem:[#allocation8 + $0x448] sm:$0xff]
    %v3322 = vld [vmem:[#allocation8 + $0x450] sm:$0xff]
    %v3323 = vld [vmem:[#allocation8 + $0x458] sm:$0xff]
    %v3324 = vld [vmem:[#allocation8 + $0x460] sm:$0xff]
    %v3325 = vld [vmem:[#allocation8 + $0x468] sm:$0xff]
    %v3326 = vld [vmem:[#allocation8 + $0x470] sm:$0xff]
    %v3327 = vld [vmem:[#allocation8 + $0x478] sm:$0xff]
    %v3328 = vld [vmem:[#allocation8 + $0x480] sm:$0xff]
    %v3329 = vld [vmem:[#allocation8 + $0x488] sm:$0xff]
    %v3330 = vld [vmem:[#allocation8 + $0x490] sm:$0xff]
    %v3331 = vld [vmem:[#allocation8 + $0x498] sm:$0xff]
    %v3332 = vld [vmem:[#allocation8 + $0x4a0] sm:$0xff]
    %v3333 = vld [vmem:[#allocation8 + $0x4a8] sm:$0xff]
    %v3334 = vld [vmem:[#allocation8 + $0x4b0] sm:$0xff]
    %v3335 = vld [vmem:[#allocation8 + $0x4b8] sm:$0xff]
    %v3336 = vld [vmem:[#allocation8 + $0x4c0] sm:$0xff]
    %v3337 = vld [vmem:[#allocation8 + $0x4c8] sm:$0xff]
    %v3338 = vld [vmem:[#allocation8 + $0x4d0] sm:$0xff]
    %v3339 = vld [vmem:[#allocation8 + $0x4d8] sm:$0xff]
    %v3340 = vld [vmem:[#allocation8 + $0x4e0] sm:$0xff]
    %v3341 = vld [vmem:[#allocation8 + $0x4e8] sm:$0xff]
    %v3342 = vld [vmem:[#allocation8 + $0x4f0] sm:$0xff]
    %v3343 = vld [vmem:[#allocation8 + $0x4f8] sm:$0xff]
    %v3344 = vld [vmem:[#allocation8 + $0x500] sm:$0xff]
    %v3345 = vld [vmem:[#allocation8 + $0x508] sm:$0xff]
    %v3346 = vld [vmem:[#allocation8 + $0x510] sm:$0xff]
    %v3347 = vld [vmem:[#allocation8 + $0x518] sm:$0xff]
    %v3348 = vld [vmem:[#allocation8 + $0x520] sm:$0xff]
    %v3349 = vld [vmem:[#allocation8 + $0x528] sm:$0xff]
    %v3350 = vld [vmem:[#allocation8 + $0x530] sm:$0xff]
    %v3351 = vld [vmem:[#allocation8 + $0x538] sm:$0xff]
    %v3352 = vld [vmem:[#allocation8 + $0x540] sm:$0xff]
    %v3353 = vld [vmem:[#allocation8 + $0x548] sm:$0xff]
    %v3354 = vld [vmem:[#allocation8 + $0x550] sm:$0xff]
    %v3355 = vld [vmem:[#allocation8 + $0x558] sm:$0xff]
    %v3356 = vld [vmem:[#allocation8 + $0x560] sm:$0xff]
    %v3357 = vld [vmem:[#allocation8 + $0x568] sm:$0xff]
    %v3358 = vld [vmem:[#allocation8 + $0x570] sm:$0xff]
    %v3359 = vld [vmem:[#allocation8 + $0x578] sm:$0xff]
    %v3360 = vld [vmem:[#allocation8 + $0x580] sm:$0xff]
    %v3361 = vld [vmem:[#allocation8 + $0x588] sm:$0xff]
    %v3362 = vld [vmem:[#allocation8 + $0x590] sm:$0xff]
    %v3363 = vld [vmem:[#allocation8 + $0x598] sm:$0xff]
    %v3364 = vld [vmem:[#allocation8 + $0x5a0] sm:$0xff]
    %v3365 = vld [vmem:[#allocation8 + $0x5a8] sm:$0xff]
    %v3366 = vld [vmem:[#allocation8 + $0x5b0] sm:$0xff]
    %v3367 = vld [vmem:[#allocation8 + $0x5b8] sm:$0xff]
    %v3368 = vld [vmem:[#allocation8 + $0x5c0] sm:$0xff]
    %v3369 = vld [vmem:[#allocation8 + $0x5c8] sm:$0xff]
    %v3370 = vld [vmem:[#allocation8 + $0x5d0] sm:$0xff]
    %v3371 = vld [vmem:[#allocation8 + $0x5d8] sm:$0xff]
    %v3372 = vld [vmem:[#allocation8 + $0x5e0] sm:$0xff]
    %v3373 = vld [vmem:[#allocation8 + $0x5e8] sm:$0xff]
    %v3374 = vld [vmem:[#allocation8 + $0x5f0] sm:$0xff]
    %v3375 = vld [vmem:[#allocation8 + $0x5f8] sm:$0xff]
    %v3376 = vld [vmem:[#allocation8 + $0x600] sm:$0xff]
    %v3377 = vld [vmem:[#allocation8 + $0x608] sm:$0xff]
    %v3378 = vld [vmem:[#allocation8 + $0x610] sm:$0xff]
    %v3379 = vld [vmem:[#allocation8 + $0x618] sm:$0xff]
    %v3380 = vld [vmem:[#allocation8 + $0x620] sm:$0xff]
    %v3381 = vld [vmem:[#allocation8 + $0x628] sm:$0xff]
    %v3382 = vld [vmem:[#allocation8 + $0x630] sm:$0xff]
    %v3383 = vld [vmem:[#allocation8 + $0x638] sm:$0xff]
    %v3384 = vld [vmem:[#allocation8 + $0x640] sm:$0xff]
    %v3385 = vld [vmem:[#allocation8 + $0x648] sm:$0xff]
    %v3386 = vld [vmem:[#allocation8 + $0x650] sm:$0xff]
    %v3387 = vld [vmem:[#allocation8 + $0x658] sm:$0xff]
    %v3388 = vld [vmem:[#allocation8 + $0x660] sm:$0xff]
    %v3389 = vld [vmem:[#allocation8 + $0x668] sm:$0xff]
    %v3390 = vld [vmem:[#allocation8 + $0x670] sm:$0xff]
    %v3391 = vld [vmem:[#allocation8 + $0x678] sm:$0xff]
    %v3392 = vld [vmem:[#allocation8 + $0x680] sm:$0xff]
    %v3393 = vld [vmem:[#allocation8 + $0x688] sm:$0xff]
    %v3394 = vld [vmem:[#allocation8 + $0x690] sm:$0xff]
    %v3395 = vld [vmem:[#allocation8 + $0x698] sm:$0xff]
    %v3396 = vld [vmem:[#allocation8 + $0x6a0] sm:$0xff]
    %v3397 = vld [vmem:[#allocation8 + $0x6a8] sm:$0xff]
    %v3398 = vld [vmem:[#allocation8 + $0x6b0] sm:$0xff]
    %v3399 = vld [vmem:[#allocation8 + $0x6b8] sm:$0xff]
    %v3400 = vld [vmem:[#allocation8 + $0x6c0] sm:$0xff]
    %v3401 = vld [vmem:[#allocation8 + $0x6c8] sm:$0xff]
    %v3402 = vld [vmem:[#allocation8 + $0x6d0] sm:$0xff]
    %v3403 = vld [vmem:[#allocation8 + $0x6d8] sm:$0xff]
    %v3404 = vld [vmem:[#allocation8 + $0x6e0] sm:$0xff]
    %v3405 = vld [vmem:[#allocation8 + $0x6e8] sm:$0xff]
    %v3406 = vld [vmem:[#allocation8 + $0x6f0] sm:$0xff]
    %v3407 = vld [vmem:[#allocation8 + $0x6f8] sm:$0xff]
    %v3408 = vld [vmem:[#allocation8 + $0x700] sm:$0xff]
    %v3409 = vld [vmem:[#allocation8 + $0x708] sm:$0xff]
    %v3410 = vld [vmem:[#allocation8 + $0x710] sm:$0xff]
    %v3411 = vld [vmem:[#allocation8 + $0x718] sm:$0xff]
    %v3412 = vld [vmem:[#allocation8 + $0x720] sm:$0xff]
    %v3413 = vld [vmem:[#allocation8 + $0x728] sm:$0xff]
    %v3414 = vld [vmem:[#allocation8 + $0x730] sm:$0xff]
    %v3415 = vld [vmem:[#allocation8 + $0x738] sm:$0xff]
    %v3416 = vld [vmem:[#allocation8 + $0x740] sm:$0xff]
    %v3417 = vld [vmem:[#allocation8 + $0x748] sm:$0xff]
    %v3418 = vld [vmem:[#allocation8 + $0x750] sm:$0xff]
    %v3419 = vld [vmem:[#allocation8 + $0x758] sm:$0xff]
    %v3420 = vld [vmem:[#allocation8 + $0x760] sm:$0xff]
    %v3421 = vld [vmem:[#allocation8 + $0x768] sm:$0xff]
    %v3422 = vld [vmem:[#allocation8 + $0x770] sm:$0xff]
    %v3423 = vld [vmem:[#allocation8 + $0x778] sm:$0xff]
    %v3424 = vld [vmem:[#allocation8 + $0x780] sm:$0xff]
    %v3425 = vld [vmem:[#allocation8 + $0x788] sm:$0xff]
    %v3426 = vld [vmem:[#allocation8 + $0x790] sm:$0xff]
    %v3427 = vld [vmem:[#allocation8 + $0x798] sm:$0xff]
    %v3428 = vld [vmem:[#allocation8 + $0x7a0] sm:$0xff]
    %v3429 = vld [vmem:[#allocation8 + $0x7a8] sm:$0xff]
    %v3430 = vld [vmem:[#allocation8 + $0x7b0] sm:$0xff]
    %v3431 = vld [vmem:[#allocation8 + $0x7b8] sm:$0xff]
    %v3432 = vld [vmem:[#allocation8 + $0x7c0] sm:$0xff]
    %v3433 = vld [vmem:[#allocation8 + $0x7c8] sm:$0xff]
    %v3434 = vld [vmem:[#allocation8 + $0x7d0] sm:$0xff]
    %v3435 = vld [vmem:[#allocation8 + $0x7d8] sm:$0xff]
    %v3436 = vld [vmem:[#allocation8 + $0x7e0] sm:$0xff]
    %v3437 = vld [vmem:[#allocation8 + $0x7e8] sm:$0xff]
    %v3438 = vld [vmem:[#allocation8 + $0x7f0] sm:$0xff]
    %v3439 = vld [vmem:[#allocation8 + $0x7f8] sm:$0xff]
    %v3440 = vld [vmem:[#allocation10] sm:$0xf]
    %v3442 = vperm.slane %v3440, 0
    %v3443 = vperm.slane %v3440, 1
    %v3444 = vperm.slane %v3440, 2
    %v3445 = vperm.slane %v3440, 3
    %v3706 = vunpack.c.l.b16 %v3184
    %v3707 = vunpack.c.h.b16 %v3184
    %v3708 = vunpack.c.l.b16 %v3185
    %v3709 = vunpack.c.h.b16 %v3185
    %v3710 = vunpack.c.l.b16 %v3186
    %v3711 = vunpack.c.h.b16 %v3186
    %v3712 = vunpack.c.l.b16 %v3187
    %v3713 = vunpack.c.h.b16 %v3187
    %v3714 = vunpack.c.l.b16 %v3188
    %v3715 = vunpack.c.h.b16 %v3188
    %v3716 = vunpack.c.l.b16 %v3189
    %v3717 = vunpack.c.h.b16 %v3189
    %v3718 = vunpack.c.l.b16 %v3190
    %v3719 = vunpack.c.h.b16 %v3190
    %v3720 = vunpack.c.l.b16 %v3191
    %v3721 = vunpack.c.h.b16 %v3191
    %v3722 = vunpack.c.l.b16 %v3192
    %v3723 = vunpack.c.h.b16 %v3192
    %v3724 = vunpack.c.l.b16 %v3193
    %v3725 = vunpack.c.h.b16 %v3193
    %v3726 = vunpack.c.l.b16 %v3194
    %v3727 = vunpack.c.h.b16 %v3194
    %v3728 = vunpack.c.l.b16 %v3195
    %v3729 = vunpack.c.h.b16 %v3195
    %v3730 = vunpack.c.l.b16 %v3196
    %v3731 = vunpack.c.h.b16 %v3196
    %v3732 = vunpack.c.l.b16 %v3197
    %v3733 = vunpack.c.h.b16 %v3197
    %v3734 = vunpack.c.l.b16 %v3198
    %v3735 = vunpack.c.h.b16 %v3198
    %v3736 = vunpack.c.l.b16 %v3199
    %v3737 = vunpack.c.h.b16 %v3199
    %v3738 = vunpack.c.l.b16 %v3200
    %v3739 = vunpack.c.h.b16 %v3200
    %v3740 = vunpack.c.l.b16 %v3201
    %v3741 = vunpack.c.h.b16 %v3201
    %v3742 = vunpack.c.l.b16 %v3202
    %v3743 = vunpack.c.h.b16 %v3202
    %v3744 = vunpack.c.l.b16 %v3203
    %v3745 = vunpack.c.h.b16 %v3203
    %v3746 = vunpack.c.l.b16 %v3204
    %v3747 = vunpack.c.h.b16 %v3204
    %v3748 = vunpack.c.l.b16 %v3205
    %v3749 = vunpack.c.h.b16 %v3205
    %v3750 = vunpack.c.l.b16 %v3206
    %v3751 = vunpack.c.h.b16 %v3206
    %v3752 = vunpack.c.l.b16 %v3207
    %v3753 = vunpack.c.h.b16 %v3207
    %v3754 = vunpack.c.l.b16 %v3208
    %v3755 = vunpack.c.h.b16 %v3208
    %v3756 = vunpack.c.l.b16 %v3209
    %v3757 = vunpack.c.h.b16 %v3209
    %v3758 = vunpack.c.l.b16 %v3210
    %v3759 = vunpack.c.h.b16 %v3210
    %v3760 = vunpack.c.l.b16 %v3211
    %v3761 = vunpack.c.h.b16 %v3211
    %v3762 = vunpack.c.l.b16 %v3212
    %v3763 = vunpack.c.h.b16 %v3212
    %v3764 = vunpack.c.l.b16 %v3213
    %v3765 = vunpack.c.h.b16 %v3213
    %v3766 = vunpack.c.l.b16 %v3214
    %v3767 = vunpack.c.h.b16 %v3214
    %v3768 = vunpack.c.l.b16 %v3215
    %v3769 = vunpack.c.h.b16 %v3215
    %v3770 = vunpack.c.l.b16 %v3216
    %v3771 = vunpack.c.h.b16 %v3216
    %v3772 = vunpack.c.l.b16 %v3217
    %v3773 = vunpack.c.h.b16 %v3217
    %v3774 = vunpack.c.l.b16 %v3218
    %v3775 = vunpack.c.h.b16 %v3218
    %v3776 = vunpack.c.l.b16 %v3219
    %v3777 = vunpack.c.h.b16 %v3219
    %v3778 = vunpack.c.l.b16 %v3220
    %v3779 = vunpack.c.h.b16 %v3220
    %v3780 = vunpack.c.l.b16 %v3221
    %v3781 = vunpack.c.h.b16 %v3221
    %v3782 = vunpack.c.l.b16 %v3222
    %v3783 = vunpack.c.h.b16 %v3222
    %v3784 = vunpack.c.l.b16 %v3223
    %v3785 = vunpack.c.h.b16 %v3223
    %v3786 = vunpack.c.l.b16 %v3224
    %v3787 = vunpack.c.h.b16 %v3224
    %v3788 = vunpack.c.l.b16 %v3225
    %v3789 = vunpack.c.h.b16 %v3225
    %v3790 = vunpack.c.l.b16 %v3226
    %v3791 = vunpack.c.h.b16 %v3226
    %v3792 = vunpack.c.l.b16 %v3227
    %v3793 = vunpack.c.h.b16 %v3227
    %v3794 = vunpack.c.l.b16 %v3228
    %v3795 = vunpack.c.h.b16 %v3228
    %v3796 = vunpack.c.l.b16 %v3229
    %v3797 = vunpack.c.h.b16 %v3229
    %v3798 = vunpack.c.l.b16 %v3230
    %v3799 = vunpack.c.h.b16 %v3230
    %v3800 = vunpack.c.l.b16 %v3231
    %v3801 = vunpack.c.h.b16 %v3231
    %v3802 = vunpack.c.l.b16 %v3232
    %v3803 = vunpack.c.h.b16 %v3232
    %v3804 = vunpack.c.l.b16 %v3233
    %v3805 = vunpack.c.h.b16 %v3233
    %v3806 = vunpack.c.l.b16 %v3234
    %v3807 = vunpack.c.h.b16 %v3234
    %v3808 = vunpack.c.l.b16 %v3235
    %v3809 = vunpack.c.h.b16 %v3235
    %v3810 = vunpack.c.l.b16 %v3236
    %v3811 = vunpack.c.h.b16 %v3236
    %v3812 = vunpack.c.l.b16 %v3237
    %v3813 = vunpack.c.h.b16 %v3237
    %v3814 = vunpack.c.l.b16 %v3238
    %v3815 = vunpack.c.h.b16 %v3238
    %v3816 = vunpack.c.l.b16 %v3239
    %v3817 = vunpack.c.h.b16 %v3239
    %v3818 = vunpack.c.l.b16 %v3240
    %v3819 = vunpack.c.h.b16 %v3240
    %v3820 = vunpack.c.l.b16 %v3241
    %v3821 = vunpack.c.h.b16 %v3241
    %v3822 = vunpack.c.l.b16 %v3242
    %v3823 = vunpack.c.h.b16 %v3242
    %v3824 = vunpack.c.l.b16 %v3243
    %v3825 = vunpack.c.h.b16 %v3243
    %v3826 = vunpack.c.l.b16 %v3244
    %v3827 = vunpack.c.h.b16 %v3244
    %v3828 = vunpack.c.l.b16 %v3245
    %v3829 = vunpack.c.h.b16 %v3245
    %v3830 = vunpack.c.l.b16 %v3246
    %v3831 = vunpack.c.h.b16 %v3246
    %v3832 = vunpack.c.l.b16 %v3247
    %v3833 = vunpack.c.h.b16 %v3247
    %v3834 = vunpack.c.l.b16 %v3248
    %v3835 = vunpack.c.h.b16 %v3248
    %v3836 = vunpack.c.l.b16 %v3249
    %v3837 = vunpack.c.h.b16 %v3249
    %v3838 = vunpack.c.l.b16 %v3250
    %v3839 = vunpack.c.h.b16 %v3250
    %v3840 = vunpack.c.l.b16 %v3251
    %v3841 = vunpack.c.h.b16 %v3251
    %v3842 = vunpack.c.l.b16 %v3252
    %v3843 = vunpack.c.h.b16 %v3252
    %v3844 = vunpack.c.l.b16 %v3253
    %v3845 = vunpack.c.h.b16 %v3253
    %v3846 = vunpack.c.l.b16 %v3254
    %v3847 = vunpack.c.h.b16 %v3254
    %v3848 = vunpack.c.l.b16 %v3255
    %v3849 = vunpack.c.h.b16 %v3255
    %v3850 = vunpack.c.l.b16 %v3256
    %v3851 = vunpack.c.h.b16 %v3256
    %v3852 = vunpack.c.l.b16 %v3257
    %v3853 = vunpack.c.h.b16 %v3257
    %v3854 = vunpack.c.l.b16 %v3258
    %v3855 = vunpack.c.h.b16 %v3258
    %v3856 = vunpack.c.l.b16 %v3259
    %v3857 = vunpack.c.h.b16 %v3259
    %v3858 = vunpack.c.l.b16 %v3260
    %v3859 = vunpack.c.h.b16 %v3260
    %v3860 = vunpack.c.l.b16 %v3261
    %v3861 = vunpack.c.h.b16 %v3261
    %v3862 = vunpack.c.l.b16 %v3262
    %v3863 = vunpack.c.h.b16 %v3262
    %v3864 = vunpack.c.l.b16 %v3263
    %v3865 = vunpack.c.h.b16 %v3263
    %v3866 = vunpack.c.l.b16 %v3264
    %v3867 = vunpack.c.h.b16 %v3264
    %v3868 = vunpack.c.l.b16 %v3265
    %v3869 = vunpack.c.h.b16 %v3265
    %v3870 = vunpack.c.l.b16 %v3266
    %v3871 = vunpack.c.h.b16 %v3266
    %v3872 = vunpack.c.l.b16 %v3267
    %v3873 = vunpack.c.h.b16 %v3267
    %v3874 = vunpack.c.l.b16 %v3268
    %v3875 = vunpack.c.h.b16 %v3268
    %v3876 = vunpack.c.l.b16 %v3269
    %v3877 = vunpack.c.h.b16 %v3269
    %v3878 = vunpack.c.l.b16 %v3270
    %v3879 = vunpack.c.h.b16 %v3270
    %v3880 = vunpack.c.l.b16 %v3271
    %v3881 = vunpack.c.h.b16 %v3271
    %v3882 = vunpack.c.l.b16 %v3272
    %v3883 = vunpack.c.h.b16 %v3272
    %v3884 = vunpack.c.l.b16 %v3273
    %v3885 = vunpack.c.h.b16 %v3273
    %v3886 = vunpack.c.l.b16 %v3274
    %v3887 = vunpack.c.h.b16 %v3274
    %v3888 = vunpack.c.l.b16 %v3275
    %v3889 = vunpack.c.h.b16 %v3275
    %v3890 = vunpack.c.l.b16 %v3276
    %v3891 = vunpack.c.h.b16 %v3276
    %v3892 = vunpack.c.l.b16 %v3277
    %v3893 = vunpack.c.h.b16 %v3277
    %v3894 = vunpack.c.l.b16 %v3278
    %v3895 = vunpack.c.h.b16 %v3278
    %v3896 = vunpack.c.l.b16 %v3279
    %v3897 = vunpack.c.h.b16 %v3279
    %v3898 = vunpack.c.l.b16 %v3280
    %v3899 = vunpack.c.h.b16 %v3280
    %v3900 = vunpack.c.l.b16 %v3281
    %v3901 = vunpack.c.h.b16 %v3281
    %v3902 = vunpack.c.l.b16 %v3282
    %v3903 = vunpack.c.h.b16 %v3282
    %v3904 = vunpack.c.l.b16 %v3283
    %v3905 = vunpack.c.h.b16 %v3283
    %v3906 = vunpack.c.l.b16 %v3284
    %v3907 = vunpack.c.h.b16 %v3284
    %v3908 = vunpack.c.l.b16 %v3285
    %v3909 = vunpack.c.h.b16 %v3285
    %v3910 = vunpack.c.l.b16 %v3286
    %v3911 = vunpack.c.h.b16 %v3286
    %v3912 = vunpack.c.l.b16 %v3287
    %v3913 = vunpack.c.h.b16 %v3287
    %v3914 = vunpack.c.l.b16 %v3288
    %v3915 = vunpack.c.h.b16 %v3288
    %v3916 = vunpack.c.l.b16 %v3289
    %v3917 = vunpack.c.h.b16 %v3289
    %v3918 = vunpack.c.l.b16 %v3290
    %v3919 = vunpack.c.h.b16 %v3290
    %v3920 = vunpack.c.l.b16 %v3291
    %v3921 = vunpack.c.h.b16 %v3291
    %v3922 = vunpack.c.l.b16 %v3292
    %v3923 = vunpack.c.h.b16 %v3292
    %v3924 = vunpack.c.l.b16 %v3293
    %v3925 = vunpack.c.h.b16 %v3293
    %v3926 = vunpack.c.l.b16 %v3294
    %v3927 = vunpack.c.h.b16 %v3294
    %v3928 = vunpack.c.l.b16 %v3295
    %v3929 = vunpack.c.h.b16 %v3295
    %v3930 = vunpack.c.l.b16 %v3296
    %v3931 = vunpack.c.h.b16 %v3296
    %v3932 = vunpack.c.l.b16 %v3297
    %v3933 = vunpack.c.h.b16 %v3297
    %v3934 = vunpack.c.l.b16 %v3298
    %v3935 = vunpack.c.h.b16 %v3298
    %v3936 = vunpack.c.l.b16 %v3299
    %v3937 = vunpack.c.h.b16 %v3299
    %v3938 = vunpack.c.l.b16 %v3300
    %v3939 = vunpack.c.h.b16 %v3300
    %v3940 = vunpack.c.l.b16 %v3301
    %v3941 = vunpack.c.h.b16 %v3301
    %v3942 = vunpack.c.l.b16 %v3302
    %v3943 = vunpack.c.h.b16 %v3302
    %v3944 = vunpack.c.l.b16 %v3303
    %v3945 = vunpack.c.h.b16 %v3303
    %v3946 = vunpack.c.l.b16 %v3304
    %v3947 = vunpack.c.h.b16 %v3304
    %v3948 = vunpack.c.l.b16 %v3305
    %v3949 = vunpack.c.h.b16 %v3305
    %v3950 = vunpack.c.l.b16 %v3306
    %v3951 = vunpack.c.h.b16 %v3306
    %v3952 = vunpack.c.l.b16 %v3307
    %v3953 = vunpack.c.h.b16 %v3307
    %v3954 = vunpack.c.l.b16 %v3308
    %v3955 = vunpack.c.h.b16 %v3308
    %v3956 = vunpack.c.l.b16 %v3309
    %v3957 = vunpack.c.h.b16 %v3309
    %v3958 = vunpack.c.l.b16 %v3310
    %v3959 = vunpack.c.h.b16 %v3310
    %v3960 = vunpack.c.l.b16 %v3311
    %v3961 = vunpack.c.h.b16 %v3311
    %v3962 = vunpack.c.l.b16 %v3312
    %v3963 = vunpack.c.h.b16 %v3312
    %v3964 = vunpack.c.l.b16 %v3313
    %v3965 = vunpack.c.h.b16 %v3313
    %v3966 = vunpack.c.l.b16 %v3314
    %v3967 = vunpack.c.h.b16 %v3314
    %v3968 = vunpack.c.l.b16 %v3315
    %v3969 = vunpack.c.h.b16 %v3315
    %v3970 = vunpack.c.l.b16 %v3316
    %v3971 = vunpack.c.h.b16 %v3316
    %v3972 = vunpack.c.l.b16 %v3317
    %v3973 = vunpack.c.h.b16 %v3317
    %v3974 = vunpack.c.l.b16 %v3318
    %v3975 = vunpack.c.h.b16 %v3318
    %v3976 = vunpack.c.l.b16 %v3319
    %v3977 = vunpack.c.h.b16 %v3319
    %v3978 = vunpack.c.l.b16 %v3320
    %v3979 = vunpack.c.h.b16 %v3320
    %v3980 = vunpack.c.l.b16 %v3321
    %v3981 = vunpack.c.h.b16 %v3321
    %v3982 = vunpack.c.l.b16 %v3322
    %v3983 = vunpack.c.h.b16 %v3322
    %v3984 = vunpack.c.l.b16 %v3323
    %v3985 = vunpack.c.h.b16 %v3323
    %v3986 = vunpack.c.l.b16 %v3324
    %v3987 = vunpack.c.h.b16 %v3324
    %v3988 = vunpack.c.l.b16 %v3325
    %v3989 = vunpack.c.h.b16 %v3325
    %v3990 = vunpack.c.l.b16 %v3326
    %v3991 = vunpack.c.h.b16 %v3326
    %v3992 = vunpack.c.l.b16 %v3327
    %v3993 = vunpack.c.h.b16 %v3327
    %v3994 = vunpack.c.l.b16 %v3328
    %v3995 = vunpack.c.h.b16 %v3328
    %v3996 = vunpack.c.l.b16 %v3329
    %v3997 = vunpack.c.h.b16 %v3329
    %v3998 = vunpack.c.l.b16 %v3330
    %v3999 = vunpack.c.h.b16 %v3330
    %v4000 = vunpack.c.l.b16 %v3331
    %v4001 = vunpack.c.h.b16 %v3331
    %v4002 = vunpack.c.l.b16 %v3332
    %v4003 = vunpack.c.h.b16 %v3332
    %v4004 = vunpack.c.l.b16 %v3333
    %v4005 = vunpack.c.h.b16 %v3333
    %v4006 = vunpack.c.l.b16 %v3334
    %v4007 = vunpack.c.h.b16 %v3334
    %v4008 = vunpack.c.l.b16 %v3335
    %v4009 = vunpack.c.h.b16 %v3335
    %v4010 = vunpack.c.l.b16 %v3336
    %v4011 = vunpack.c.h.b16 %v3336
    %v4012 = vunpack.c.l.b16 %v3337
    %v4013 = vunpack.c.h.b16 %v3337
    %v4014 = vunpack.c.l.b16 %v3338
    %v4015 = vunpack.c.h.b16 %v3338
    %v4016 = vunpack.c.l.b16 %v3339
    %v4017 = vunpack.c.h.b16 %v3339
    %v4018 = vunpack.c.l.b16 %v3340
    %v4019 = vunpack.c.h.b16 %v3340
    %v4020 = vunpack.c.l.b16 %v3341
    %v4021 = vunpack.c.h.b16 %v3341
    %v4022 = vunpack.c.l.b16 %v3342
    %v4023 = vunpack.c.h.b16 %v3342
    %v4024 = vunpack.c.l.b16 %v3343
    %v4025 = vunpack.c.h.b16 %v3343
    %v4026 = vunpack.c.l.b16 %v3344
    %v4027 = vunpack.c.h.b16 %v3344
    %v4028 = vunpack.c.l.b16 %v3345
    %v4029 = vunpack.c.h.b16 %v3345
    %v4030 = vunpack.c.l.b16 %v3346
    %v4031 = vunpack.c.h.b16 %v3346
    %v4032 = vunpack.c.l.b16 %v3347
    %v4033 = vunpack.c.h.b16 %v3347
    %v4034 = vunpack.c.l.b16 %v3348
    %v4035 = vunpack.c.h.b16 %v3348
    %v4036 = vunpack.c.l.b16 %v3349
    %v4037 = vunpack.c.h.b16 %v3349
    %v4038 = vunpack.c.l.b16 %v3350
    %v4039 = vunpack.c.h.b16 %v3350
    %v4040 = vunpack.c.l.b16 %v3351
    %v4041 = vunpack.c.h.b16 %v3351
    %v4042 = vunpack.c.l.b16 %v3352
    %v4043 = vunpack.c.h.b16 %v3352
    %v4044 = vunpack.c.l.b16 %v3353
    %v4045 = vunpack.c.h.b16 %v3353
    %v4046 = vunpack.c.l.b16 %v3354
    %v4047 = vunpack.c.h.b16 %v3354
    %v4048 = vunpack.c.l.b16 %v3355
    %v4049 = vunpack.c.h.b16 %v3355
    %v4050 = vunpack.c.l.b16 %v3356
    %v4051 = vunpack.c.h.b16 %v3356
    %v4052 = vunpack.c.l.b16 %v3357
    %v4053 = vunpack.c.h.b16 %v3357
    %v4054 = vunpack.c.l.b16 %v3358
    %v4055 = vunpack.c.h.b16 %v3358
    %v4056 = vunpack.c.l.b16 %v3359
    %v4057 = vunpack.c.h.b16 %v3359
    %v4058 = vunpack.c.l.b16 %v3360
    %v4059 = vunpack.c.h.b16 %v3360
    %v4060 = vunpack.c.l.b16 %v3361
    %v4061 = vunpack.c.h.b16 %v3361
    %v4062 = vunpack.c.l.b16 %v3362
    %v4063 = vunpack.c.h.b16 %v3362
    %v4064 = vunpack.c.l.b16 %v3363
    %v4065 = vunpack.c.h.b16 %v3363
    %v4066 = vunpack.c.l.b16 %v3364
    %v4067 = vunpack.c.h.b16 %v3364
    %v4068 = vunpack.c.l.b16 %v3365
    %v4069 = vunpack.c.h.b16 %v3365
    %v4070 = vunpack.c.l.b16 %v3366
    %v4071 = vunpack.c.h.b16 %v3366
    %v4072 = vunpack.c.l.b16 %v3367
    %v4073 = vunpack.c.h.b16 %v3367
    %v4074 = vunpack.c.l.b16 %v3368
    %v4075 = vunpack.c.h.b16 %v3368
    %v4076 = vunpack.c.l.b16 %v3369
    %v4077 = vunpack.c.h.b16 %v3369
    %v4078 = vunpack.c.l.b16 %v3370
    %v4079 = vunpack.c.h.b16 %v3370
    %v4080 = vunpack.c.l.b16 %v3371
    %v4081 = vunpack.c.h.b16 %v3371
    %v4082 = vunpack.c.l.b16 %v3372
    %v4083 = vunpack.c.h.b16 %v3372
    %v4084 = vunpack.c.l.b16 %v3373
    %v4085 = vunpack.c.h.b16 %v3373
    %v4086 = vunpack.c.l.b16 %v3374
    %v4087 = vunpack.c.h.b16 %v3374
    %v4088 = vunpack.c.l.b16 %v3375
    %v4089 = vunpack.c.h.b16 %v3375
    %v4090 = vunpack.c.l.b16 %v3376
    %v4091 = vunpack.c.h.b16 %v3376
    %v4092 = vunpack.c.l.b16 %v3377
    %v4093 = vunpack.c.h.b16 %v3377
    %v4094 = vunpack.c.l.b16 %v3378
    %v4095 = vunpack.c.h.b16 %v3378
    %v4096 = vunpack.c.l.b16 %v3379
    %v4097 = vunpack.c.h.b16 %v3379
    %v4098 = vunpack.c.l.b16 %v3380
    %v4099 = vunpack.c.h.b16 %v3380
    %v4100 = vunpack.c.l.b16 %v3381
    %v4101 = vunpack.c.h.b16 %v3381
    %v4102 = vunpack.c.l.b16 %v3382
    %v4103 = vunpack.c.h.b16 %v3382
    %v4104 = vunpack.c.l.b16 %v3383
    %v4105 = vunpack.c.h.b16 %v3383
    %v4106 = vunpack.c.l.b16 %v3384
    %v4107 = vunpack.c.h.b16 %v3384
    %v4108 = vunpack.c.l.b16 %v3385
    %v4109 = vunpack.c.h.b16 %v3385
    %v4110 = vunpack.c.l.b16 %v3386
    %v4111 = vunpack.c.h.b16 %v3386
    %v4112 = vunpack.c.l.b16 %v3387
    %v4113 = vunpack.c.h.b16 %v3387
    %v4114 = vunpack.c.l.b16 %v3388
    %v4115 = vunpack.c.h.b16 %v3388
    %v4116 = vunpack.c.l.b16 %v3389
    %v4117 = vunpack.c.h.b16 %v3389
    %v4118 = vunpack.c.l.b16 %v3390
    %v4119 = vunpack.c.h.b16 %v3390
    %v4120 = vunpack.c.l.b16 %v3391
    %v4121 = vunpack.c.h.b16 %v3391
    %v4122 = vunpack.c.l.b16 %v3392
    %v4123 = vunpack.c.h.b16 %v3392
    %v4124 = vunpack.c.l.b16 %v3393
    %v4125 = vunpack.c.h.b16 %v3393
    %v4126 = vunpack.c.l.b16 %v3394
    %v4127 = vunpack.c.h.b16 %v3394
    %v4128 = vunpack.c.l.b16 %v3395
    %v4129 = vunpack.c.h.b16 %v3395
    %v4130 = vunpack.c.l.b16 %v3396
    %v4131 = vunpack.c.h.b16 %v3396
    %v4132 = vunpack.c.l.b16 %v3397
    %v4133 = vunpack.c.h.b16 %v3397
    %v4134 = vunpack.c.l.b16 %v3398
    %v4135 = vunpack.c.h.b16 %v3398
    %v4136 = vunpack.c.l.b16 %v3399
    %v4137 = vunpack.c.h.b16 %v3399
    %v4138 = vunpack.c.l.b16 %v3400
    %v4139 = vunpack.c.h.b16 %v3400
    %v4140 = vunpack.c.l.b16 %v3401
    %v4141 = vunpack.c.h.b16 %v3401
    %v4142 = vunpack.c.l.b16 %v3402
    %v4143 = vunpack.c.h.b16 %v3402
    %v4144 = vunpack.c.l.b16 %v3403
    %v4145 = vunpack.c.h.b16 %v3403
    %v4146 = vunpack.c.l.b16 %v3404
    %v4147 = vunpack.c.h.b16 %v3404
    %v4148 = vunpack.c.l.b16 %v3405
    %v4149 = vunpack.c.h.b16 %v3405
    %v4150 = vunpack.c.l.b16 %v3406
    %v4151 = vunpack.c.h.b16 %v3406
    %v4152 = vunpack.c.l.b16 %v3407
    %v4153 = vunpack.c.h.b16 %v3407
    %v4154 = vunpack.c.l.b16 %v3408
    %v4155 = vunpack.c.h.b16 %v3408
    %v4156 = vunpack.c.l.b16 %v3409
    %v4157 = vunpack.c.h.b16 %v3409
    %v4158 = vunpack.c.l.b16 %v3410
    %v4159 = vunpack.c.h.b16 %v3410
    %v4160 = vunpack.c.l.b16 %v3411
    %v4161 = vunpack.c.h.b16 %v3411
    %v4162 = vunpack.c.l.b16 %v3412
    %v4163 = vunpack.c.h.b16 %v3412
    %v4164 = vunpack.c.l.b16 %v3413
    %v4165 = vunpack.c.h.b16 %v3413
    %v4166 = vunpack.c.l.b16 %v3414
    %v4167 = vunpack.c.h.b16 %v3414
    %v4168 = vunpack.c.l.b16 %v3415
    %v4169 = vunpack.c.h.b16 %v3415
    %v4170 = vunpack.c.l.b16 %v3416
    %v4171 = vunpack.c.h.b16 %v3416
    %v4172 = vunpack.c.l.b16 %v3417
    %v4173 = vunpack.c.h.b16 %v3417
    %v4174 = vunpack.c.l.b16 %v3418
    %v4175 = vunpack.c.h.b16 %v3418
    %v4176 = vunpack.c.l.b16 %v3419
    %v4177 = vunpack.c.h.b16 %v3419
    %v4178 = vunpack.c.l.b16 %v3420
    %v4179 = vunpack.c.h.b16 %v3420
    %v4180 = vunpack.c.l.b16 %v3421
    %v4181 = vunpack.c.h.b16 %v3421
    %v4182 = vunpack.c.l.b16 %v3422
    %v4183 = vunpack.c.h.b16 %v3422
    %v4184 = vunpack.c.l.b16 %v3423
    %v4185 = vunpack.c.h.b16 %v3423
    %v4186 = vunpack.c.l.b16 %v3424
    %v4187 = vunpack.c.h.b16 %v3424
    %v4188 = vunpack.c.l.b16 %v3425
    %v4189 = vunpack.c.h.b16 %v3425
    %v4190 = vunpack.c.l.b16 %v3426
    %v4191 = vunpack.c.h.b16 %v3426
    %v4192 = vunpack.c.l.b16 %v3427
    %v4193 = vunpack.c.h.b16 %v3427
    %v4194 = vunpack.c.l.b16 %v3428
    %v4195 = vunpack.c.h.b16 %v3428
    %v4196 = vunpack.c.l.b16 %v3429
    %v4197 = vunpack.c.h.b16 %v3429
    %v4198 = vunpack.c.l.b16 %v3430
    %v4199 = vunpack.c.h.b16 %v3430
    %v4200 = vunpack.c.l.b16 %v3431
    %v4201 = vunpack.c.h.b16 %v3431
    %v4202 = vunpack.c.l.b16 %v3432
    %v4203 = vunpack.c.h.b16 %v3432
    %v4204 = vunpack.c.l.b16 %v3433
    %v4205 = vunpack.c.h.b16 %v3433
    %v4206 = vunpack.c.l.b16 %v3434
    %v4207 = vunpack.c.h.b16 %v3434
    %v4208 = vunpack.c.l.b16 %v3435
    %v4209 = vunpack.c.h.b16 %v3435
    %v4210 = vunpack.c.l.b16 %v3436
    %v4211 = vunpack.c.h.b16 %v3436
    %v4212 = vunpack.c.l.b16 %v3437
    %v4213 = vunpack.c.h.b16 %v3437
    %v4214 = vunpack.c.l.b16 %v3438
    %v4215 = vunpack.c.h.b16 %v3438
    %v4216 = vunpack.c.l.b16 %v3439
    %v4217 = vunpack.c.h.b16 %v3439
    %v4218 = vpack.c.b16 %v3710, %v3706
    %v4219 = vpack.c.b16 %v3711, %v3707
    %v4220 = vpack.c.b16 %v3712, %v3708
    %v4221 = vpack.c.b16 %v3713, %v3709
    %v4222 = vpack.c.b16 %v3718, %v3714
    %v4223 = vpack.c.b16 %v3719, %v3715
    %v4224 = vpack.c.b16 %v3720, %v3716
    %v4225 = vpack.c.b16 %v3721, %v3717
    %v4226 = vpack.c.b16 %v3726, %v3722
    %v4227 = vpack.c.b16 %v3727, %v3723
    %v4228 = vpack.c.b16 %v3728, %v3724
    %v4229 = vpack.c.b16 %v3729, %v3725
    %v4230 = vpack.c.b16 %v3734, %v3730
    %v4231 = vpack.c.b16 %v3735, %v3731
    %v4232 = vpack.c.b16 %v3736, %v3732
    %v4233 = vpack.c.b16 %v3737, %v3733
    %v4234 = vpack.c.b16 %v3742, %v3738
    %v4235 = vpack.c.b16 %v3743, %v3739
    %v4236 = vpack.c.b16 %v3744, %v3740
    %v4237 = vpack.c.b16 %v3745, %v3741
    %v4238 = vpack.c.b16 %v3750, %v3746
    %v4239 = vpack.c.b16 %v3751, %v3747
    %v4240 = vpack.c.b16 %v3752, %v3748
    %v4241 = vpack.c.b16 %v3753, %v3749
    %v4242 = vpack.c.b16 %v3758, %v3754
    %v4243 = vpack.c.b16 %v3759, %v3755
    %v4244 = vpack.c.b16 %v3760, %v3756
    %v4245 = vpack.c.b16 %v3761, %v3757
    %v4246 = vpack.c.b16 %v3766, %v3762
    %v4247 = vpack.c.b16 %v3767, %v3763
    %v4248 = vpack.c.b16 %v3768, %v3764
    %v4249 = vpack.c.b16 %v3769, %v3765
    %v4250 = vpack.c.b16 %v3774, %v3770
    %v4251 = vpack.c.b16 %v3775, %v3771
    %v4252 = vpack.c.b16 %v3776, %v3772
    %v4253 = vpack.c.b16 %v3777, %v3773
    %v4254 = vpack.c.b16 %v3782, %v3778
    %v4255 = vpack.c.b16 %v3783, %v3779
    %v4256 = vpack.c.b16 %v3784, %v3780
    %v4257 = vpack.c.b16 %v3785, %v3781
    %v4258 = vpack.c.b16 %v3790, %v3786
    %v4259 = vpack.c.b16 %v3791, %v3787
    %v4260 = vpack.c.b16 %v3792, %v3788
    %v4261 = vpack.c.b16 %v3793, %v3789
    %v4262 = vpack.c.b16 %v3798, %v3794
    %v4263 = vpack.c.b16 %v3799, %v3795
    %v4264 = vpack.c.b16 %v3800, %v3796
    %v4265 = vpack.c.b16 %v3801, %v3797
    %v4266 = vpack.c.b16 %v3806, %v3802
    %v4267 = vpack.c.b16 %v3807, %v3803
    %v4268 = vpack.c.b16 %v3808, %v3804
    %v4269 = vpack.c.b16 %v3809, %v3805
    %v4270 = vpack.c.b16 %v3814, %v3810
    %v4271 = vpack.c.b16 %v3815, %v3811
    %v4272 = vpack.c.b16 %v3816, %v3812
    %v4273 = vpack.c.b16 %v3817, %v3813
    %v4274 = vpack.c.b16 %v3822, %v3818
    %v4275 = vpack.c.b16 %v3823, %v3819
    %v4276 = vpack.c.b16 %v3824, %v3820
    %v4277 = vpack.c.b16 %v3825, %v3821
    %v4278 = vpack.c.b16 %v3830, %v3826
    %v4279 = vpack.c.b16 %v3831, %v3827
    %v4280 = vpack.c.b16 %v3832, %v3828
    %v4281 = vpack.c.b16 %v3833, %v3829
    %v4282 = vpack.c.b16 %v3838, %v3834
    %v4283 = vpack.c.b16 %v3839, %v3835
    %v4284 = vpack.c.b16 %v3840, %v3836
    %v4285 = vpack.c.b16 %v3841, %v3837
    %v4286 = vpack.c.b16 %v3846, %v3842
    %v4287 = vpack.c.b16 %v3847, %v3843
    %v4288 = vpack.c.b16 %v3848, %v3844
    %v4289 = vpack.c.b16 %v3849, %v3845
    %v4290 = vpack.c.b16 %v3854, %v3850
    %v4291 = vpack.c.b16 %v3855, %v3851
    %v4292 = vpack.c.b16 %v3856, %v3852
    %v4293 = vpack.c.b16 %v3857, %v3853
    %v4294 = vpack.c.b16 %v3862, %v3858
    %v4295 = vpack.c.b16 %v3863, %v3859
    %v4296 = vpack.c.b16 %v3864, %v3860
    %v4297 = vpack.c.b16 %v3865, %v3861
    %v4298 = vpack.c.b16 %v3870, %v3866
    %v4299 = vpack.c.b16 %v3871, %v3867
    %v4300 = vpack.c.b16 %v3872, %v3868
    %v4301 = vpack.c.b16 %v3873, %v3869
    %v4302 = vpack.c.b16 %v3878, %v3874
    %v4303 = vpack.c.b16 %v3879, %v3875
    %v4304 = vpack.c.b16 %v3880, %v3876
    %v4305 = vpack.c.b16 %v3881, %v3877
    %v4306 = vpack.c.b16 %v3886, %v3882
    %v4307 = vpack.c.b16 %v3887, %v3883
    %v4308 = vpack.c.b16 %v3888, %v3884
    %v4309 = vpack.c.b16 %v3889, %v3885
    %v4310 = vpack.c.b16 %v3894, %v3890
    %v4311 = vpack.c.b16 %v3895, %v3891
    %v4312 = vpack.c.b16 %v3896, %v3892
    %v4313 = vpack.c.b16 %v3897, %v3893
    %v4314 = vpack.c.b16 %v3902, %v3898
    %v4315 = vpack.c.b16 %v3903, %v3899
    %v4316 = vpack.c.b16 %v3904, %v3900
    %v4317 = vpack.c.b16 %v3905, %v3901
    %v4318 = vpack.c.b16 %v3910, %v3906
    %v4319 = vpack.c.b16 %v3911, %v3907
    %v4320 = vpack.c.b16 %v3912, %v3908
    %v4321 = vpack.c.b16 %v3913, %v3909
    %v4322 = vpack.c.b16 %v3918, %v3914
    %v4323 = vpack.c.b16 %v3919, %v3915
    %v4324 = vpack.c.b16 %v3920, %v3916
    %v4325 = vpack.c.b16 %v3921, %v3917
    %v4326 = vpack.c.b16 %v3926, %v3922
    %v4327 = vpack.c.b16 %v3927, %v3923
    %v4328 = vpack.c.b16 %v3928, %v3924
    %v4329 = vpack.c.b16 %v3929, %v3925
    %v4330 = vpack.c.b16 %v3934, %v3930
    %v4331 = vpack.c.b16 %v3935, %v3931
    %v4332 = vpack.c.b16 %v3936, %v3932
    %v4333 = vpack.c.b16 %v3937, %v3933
    %v4334 = vpack.c.b16 %v3942, %v3938
    %v4335 = vpack.c.b16 %v3943, %v3939
    %v4336 = vpack.c.b16 %v3944, %v3940
    %v4337 = vpack.c.b16 %v3945, %v3941
    %v4338 = vpack.c.b16 %v3950, %v3946
    %v4339 = vpack.c.b16 %v3951, %v3947
    %v4340 = vpack.c.b16 %v3952, %v3948
    %v4341 = vpack.c.b16 %v3953, %v3949
    %v4342 = vpack.c.b16 %v3958, %v3954
    %v4343 = vpack.c.b16 %v3959, %v3955
    %v4344 = vpack.c.b16 %v3960, %v3956
    %v4345 = vpack.c.b16 %v3961, %v3957
    %v4346 = vpack.c.b16 %v3966, %v3962
    %v4347 = vpack.c.b16 %v3967, %v3963
    %v4348 = vpack.c.b16 %v3968, %v3964
    %v4349 = vpack.c.b16 %v3969, %v3965
    %v4350 = vpack.c.b16 %v3974, %v3970
    %v4351 = vpack.c.b16 %v3975, %v3971
    %v4352 = vpack.c.b16 %v3976, %v3972
    %v4353 = vpack.c.b16 %v3977, %v3973
    %v4354 = vpack.c.b16 %v3982, %v3978
    %v4355 = vpack.c.b16 %v3983, %v3979
    %v4356 = vpack.c.b16 %v3984, %v3980
    %v4357 = vpack.c.b16 %v3985, %v3981
    %v4358 = vpack.c.b16 %v3990, %v3986
    %v4359 = vpack.c.b16 %v3991, %v3987
    %v4360 = vpack.c.b16 %v3992, %v3988
    %v4361 = vpack.c.b16 %v3993, %v3989
    %v4362 = vpack.c.b16 %v3998, %v3994
    %v4363 = vpack.c.b16 %v3999, %v3995
    %v4364 = vpack.c.b16 %v4000, %v3996
    %v4365 = vpack.c.b16 %v4001, %v3997
    %v4366 = vpack.c.b16 %v4006, %v4002
    %v4367 = vpack.c.b16 %v4007, %v4003
    %v4368 = vpack.c.b16 %v4008, %v4004
    %v4369 = vpack.c.b16 %v4009, %v4005
    %v4370 = vpack.c.b16 %v4014, %v4010
    %v4371 = vpack.c.b16 %v4015, %v4011
    %v4372 = vpack.c.b16 %v4016, %v4012
    %v4373 = vpack.c.b16 %v4017, %v4013
    %v4374 = vpack.c.b16 %v4022, %v4018
    %v4375 = vpack.c.b16 %v4023, %v4019
    %v4376 = vpack.c.b16 %v4024, %v4020
    %v4377 = vpack.c.b16 %v4025, %v4021
    %v4378 = vpack.c.b16 %v4030, %v4026
    %v4379 = vpack.c.b16 %v4031, %v4027
    %v4380 = vpack.c.b16 %v4032, %v4028
    %v4381 = vpack.c.b16 %v4033, %v4029
    %v4382 = vpack.c.b16 %v4038, %v4034
    %v4383 = vpack.c.b16 %v4039, %v4035
    %v4384 = vpack.c.b16 %v4040, %v4036
    %v4385 = vpack.c.b16 %v4041, %v4037
    %v4386 = vpack.c.b16 %v4046, %v4042
    %v4387 = vpack.c.b16 %v4047, %v4043
    %v4388 = vpack.c.b16 %v4048, %v4044
    %v4389 = vpack.c.b16 %v4049, %v4045
    %v4390 = vpack.c.b16 %v4054, %v4050
    %v4391 = vpack.c.b16 %v4055, %v4051
    %v4392 = vpack.c.b16 %v4056, %v4052
    %v4393 = vpack.c.b16 %v4057, %v4053
    %v4394 = vpack.c.b16 %v4062, %v4058
    %v4395 = vpack.c.b16 %v4063, %v4059
    %v4396 = vpack.c.b16 %v4064, %v4060
    %v4397 = vpack.c.b16 %v4065, %v4061
    %v4398 = vpack.c.b16 %v4070, %v4066
    %v4399 = vpack.c.b16 %v4071, %v4067
    %v4400 = vpack.c.b16 %v4072, %v4068
    %v4401 = vpack.c.b16 %v4073, %v4069
    %v4402 = vpack.c.b16 %v4078, %v4074
    %v4403 = vpack.c.b16 %v4079, %v4075
    %v4404 = vpack.c.b16 %v4080, %v4076
    %v4405 = vpack.c.b16 %v4081, %v4077
    %v4406 = vpack.c.b16 %v4086, %v4082
    %v4407 = vpack.c.b16 %v4087, %v4083
    %v4408 = vpack.c.b16 %v4088, %v4084
    %v4409 = vpack.c.b16 %v4089, %v4085
    %v4410 = vpack.c.b16 %v4094, %v4090
    %v4411 = vpack.c.b16 %v4095, %v4091
    %v4412 = vpack.c.b16 %v4096, %v4092
    %v4413 = vpack.c.b16 %v4097, %v4093
    %v4414 = vpack.c.b16 %v4102, %v4098
    %v4415 = vpack.c.b16 %v4103, %v4099
    %v4416 = vpack.c.b16 %v4104, %v4100
    %v4417 = vpack.c.b16 %v4105, %v4101
    %v4418 = vpack.c.b16 %v4110, %v4106
    %v4419 = vpack.c.b16 %v4111, %v4107
    %v4420 = vpack.c.b16 %v4112, %v4108
    %v4421 = vpack.c.b16 %v4113, %v4109
    %v4422 = vpack.c.b16 %v4118, %v4114
    %v4423 = vpack.c.b16 %v4119, %v4115
    %v4424 = vpack.c.b16 %v4120, %v4116
    %v4425 = vpack.c.b16 %v4121, %v4117
    %v4426 = vpack.c.b16 %v4126, %v4122
    %v4427 = vpack.c.b16 %v4127, %v4123
    %v4428 = vpack.c.b16 %v4128, %v4124
    %v4429 = vpack.c.b16 %v4129, %v4125
    %v4430 = vpack.c.b16 %v4134, %v4130
    %v4431 = vpack.c.b16 %v4135, %v4131
    %v4432 = vpack.c.b16 %v4136, %v4132
    %v4433 = vpack.c.b16 %v4137, %v4133
    %v4434 = vpack.c.b16 %v4142, %v4138
    %v4435 = vpack.c.b16 %v4143, %v4139
    %v4436 = vpack.c.b16 %v4144, %v4140
    %v4437 = vpack.c.b16 %v4145, %v4141
    %v4438 = vpack.c.b16 %v4150, %v4146
    %v4439 = vpack.c.b16 %v4151, %v4147
    %v4440 = vpack.c.b16 %v4152, %v4148
    %v4441 = vpack.c.b16 %v4153, %v4149
    %v4442 = vpack.c.b16 %v4158, %v4154
    %v4443 = vpack.c.b16 %v4159, %v4155
    %v4444 = vpack.c.b16 %v4160, %v4156
    %v4445 = vpack.c.b16 %v4161, %v4157
    %v4446 = vpack.c.b16 %v4166, %v4162
    %v4447 = vpack.c.b16 %v4167, %v4163
    %v4448 = vpack.c.b16 %v4168, %v4164
    %v4449 = vpack.c.b16 %v4169, %v4165
    %v4450 = vpack.c.b16 %v4174, %v4170
    %v4451 = vpack.c.b16 %v4175, %v4171
    %v4452 = vpack.c.b16 %v4176, %v4172
    %v4453 = vpack.c.b16 %v4177, %v4173
    %v4454 = vpack.c.b16 %v4182, %v4178
    %v4455 = vpack.c.b16 %v4183, %v4179
    %v4456 = vpack.c.b16 %v4184, %v4180
    %v4457 = vpack.c.b16 %v4185, %v4181
    %v4458 = vpack.c.b16 %v4190, %v4186
    %v4459 = vpack.c.b16 %v4191, %v4187
    %v4460 = vpack.c.b16 %v4192, %v4188
    %v4461 = vpack.c.b16 %v4193, %v4189
    %v4462 = vpack.c.b16 %v4198, %v4194
    %v4463 = vpack.c.b16 %v4199, %v4195
    %v4464 = vpack.c.b16 %v4200, %v4196
    %v4465 = vpack.c.b16 %v4201, %v4197
    %v4466 = vpack.c.b16 %v4206, %v4202
    %v4467 = vpack.c.b16 %v4207, %v4203
    %v4468 = vpack.c.b16 %v4208, %v4204
    %v4469 = vpack.c.b16 %v4209, %v4205
    %v4470 = vpack.c.b16 %v4214, %v4210
    %v4471 = vpack.c.b16 %v4215, %v4211
    %v4472 = vpack.c.b16 %v4216, %v4212
    %v4473 = vpack.c.b16 %v4217, %v4213
    %4730 = vmatpush.bf16.msra.mxu0 %v4246
    %4731 = vmatpush.bf16.msra.mxu0 %v4242
    %4732 = vmatpush.bf16.msra.mxu0 %v4238
    %4733 = vmatpush.bf16.msra.mxu0 %v4234
    %4734 = vmatpush.bf16.msra.mxu0 %v4230
    %4735 = vmatpush.bf16.msra.mxu0 %v4226
    %4736 = vmatpush.bf16.msra.mxu0 %v4222
    %4737 = vmatpush.bf16.msra.mxu0 %v4218
    %4738 = vmatmul.bf16.gmra.mxu0 %v3176
    %v4739 = vpop.f32.mrf.mxu0
    %v4740 = vadd.f32 %v3442, %v4739
    %v4741 = vpop.f32.mrf.mxu0
    %4742 = vdwg.mxu0
    %4743 = vmatpush.bf16.msra.mxu0 %v4278
    %4744 = vmatpush.bf16.msra.mxu0 %v4274
    %4745 = vmatpush.bf16.msra.mxu0 %v4270
    %4746 = vmatpush.bf16.msra.mxu0 %v4266
    %4747 = vmatpush.bf16.msra.mxu0 %v4262
    %4748 = vmatpush.bf16.msra.mxu0 %v4258
    %4749 = vmatpush.bf16.msra.mxu0 %v4254
    %4750 = vmatpush.bf16.msra.mxu0 %v4250
    %4751 = vmatmul.bf16.gmra.mxu0 %v3177
    %v4752 = vpop.f32.mrf.mxu0
    %v4753 = vadd.f32 %v4740, %v4752
    %v4754 = vpop.f32.mrf.mxu0
    %4755 = vdwg.mxu0
    %4756 = vmatpush.bf16.msra.mxu0 %v4310
    %4757 = vmatpush.bf16.msra.mxu0 %v4306
    %4758 = vmatpush.bf16.msra.mxu0 %v4302
    %4759 = vmatpush.bf16.msra.mxu0 %v4298
    %4760 = vmatpush.bf16.msra.mxu0 %v4294
    %4761 = vmatpush.bf16.msra.mxu0 %v4290
    %4762 = vmatpush.bf16.msra.mxu0 %v4286
    %4763 = vmatpush.bf16.msra.mxu0 %v4282
    %4764 = vmatmul.bf16.gmra.mxu0 %v3178
    %v4765 = vpop.f32.mrf.mxu0
    %v4766 = vadd.f32 %v4753, %v4765
    %v4767 = vpop.f32.mrf.mxu0
    %4768 = vdwg.mxu0
    %4769 = vmatpush.bf16.msra.mxu0 %v4342
    %4770 = vmatpush.bf16.msra.mxu0 %v4338
    %4771 = vmatpush.bf16.msra.mxu0 %v4334
    %4772 = vmatpush.bf16.msra.mxu0 %v4330
    %4773 = vmatpush.bf16.msra.mxu0 %v4326
    %4774 = vmatpush.bf16.msra.mxu0 %v4322
    %4775 = vmatpush.bf16.msra.mxu0 %v4318
    %4776 = vmatpush.bf16.msra.mxu0 %v4314
    %4777 = vmatmul.bf16.gmra.mxu0 %v3179
    %v4778 = vpop.f32.mrf.mxu0
    %v4779 = vadd.f32 %v4766, %v4778
    %v4780 = vpop.f32.mrf.mxu0
    %4781 = vdwg.mxu0
    %4782 = vmatpush.bf16.msra.mxu0 %v4374
    %4783 = vmatpush.bf16.msra.mxu0 %v4370
    %4784 = vmatpush.bf16.msra.mxu0 %v4366
    %4785 = vmatpush.bf16.msra.mxu0 %v4362
    %4786 = vmatpush.bf16.msra.mxu0 %v4358
    %4787 = vmatpush.bf16.msra.mxu0 %v4354
    %4788 = vmatpush.bf16.msra.mxu0 %v4350
    %4789 = vmatpush.bf16.msra.mxu0 %v4346
    %4790 = vmatmul.bf16.gmra.mxu0 %v3180
    %v4791 = vpop.f32.mrf.mxu0
    %v4792 = vadd.f32 %v4779, %v4791
    %v4793 = vpop.f32.mrf.mxu0
    %4794 = vdwg.mxu0
    %4795 = vmatpush.bf16.msra.mxu0 %v4406
    %4796 = vmatpush.bf16.msra.mxu0 %v4402
    %4797 = vmatpush.bf16.msra.mxu0 %v4398
    %4798 = vmatpush.bf16.msra.mxu0 %v4394
    %4799 = vmatpush.bf16.msra.mxu0 %v4390
    %4800 = vmatpush.bf16.msra.mxu0 %v4386
    %4801 = vmatpush.bf16.msra.mxu0 %v4382
    %4802 = vmatpush.bf16.msra.mxu0 %v4378
    %4803 = vmatmul.bf16.gmra.mxu0 %v3181
    %v4804 = vpop.f32.mrf.mxu0
    %v4805 = vadd.f32 %v4792, %v4804
    %v4806 = vpop.f32.mrf.mxu0
    %4807 = vdwg.mxu0
    %4808 = vmatpush.bf16.msra.mxu0 %v4438
    %4809 = vmatpush.bf16.msra.mxu0 %v4434
    %4810 = vmatpush.bf16.msra.mxu0 %v4430
    %4811 = vmatpush.bf16.msra.mxu0 %v4426
    %4812 = vmatpush.bf16.msra.mxu0 %v4422
    %4813 = vmatpush.bf16.msra.mxu0 %v4418
    %4814 = vmatpush.bf16.msra.mxu0 %v4414
    %4815 = vmatpush.bf16.msra.mxu0 %v4410
    %4816 = vmatmul.bf16.gmra.mxu0 %v3182
    %v4817 = vpop.f32.mrf.mxu0
    %v4818 = vadd.f32 %v4805, %v4817
    %v4819 = vpop.f32.mrf.mxu0
    %4820 = vdwg.mxu0
    %4821 = vmatpush.bf16.msra.mxu0 %v4470
    %4822 = vmatpush.bf16.msra.mxu0 %v4466
    %4823 = vmatpush.bf16.msra.mxu0 %v4462
    %4824 = vmatpush.bf16.msra.mxu0 %v4458
    %4825 = vmatpush.bf16.msra.mxu0 %v4454
    %4826 = vmatpush.bf16.msra.mxu0 %v4450
    %4827 = vmatpush.bf16.msra.mxu0 %v4446
    %4828 = vmatpush.bf16.msra.mxu0 %v4442
    %4829 = vmatmul.bf16.gmra.mxu0 %v3183
    %v4830 = vpop.f32.mrf.mxu0
    %v4831 = vadd.f32 %v4818, %v4830
    %v4832 = vpop.f32.mrf.mxu0
    %4833 = vdwg.mxu0
    %4834 = vmatpush.bf16.msra.mxu0 %v4247
    %4835 = vmatpush.bf16.msra.mxu0 %v4243
    %4836 = vmatpush.bf16.msra.mxu0 %v4239
    %4837 = vmatpush.bf16.msra.mxu0 %v4235
    %4838 = vmatpush.bf16.msra.mxu0 %v4231
    %4839 = vmatpush.bf16.msra.mxu0 %v4227
    %4840 = vmatpush.bf16.msra.mxu0 %v4223
    %4841 = vmatpush.bf16.msra.mxu0 %v4219
    %4842 = vmatmul.bf16.gmra.mxu0 %v3176
    %v4843 = vpop.f32.mrf.mxu0
    %v4844 = vadd.f32 %v3443, %v4843
    %v4845 = vpop.f32.mrf.mxu0
    %4846 = vdwg.mxu0
    %4847 = vmatpush.bf16.msra.mxu0 %v4279
    %4848 = vmatpush.bf16.msra.mxu0 %v4275
    %4849 = vmatpush.bf16.msra.mxu0 %v4271
    %4850 = vmatpush.bf16.msra.mxu0 %v4267
    %4851 = vmatpush.bf16.msra.mxu0 %v4263
    %4852 = vmatpush.bf16.msra.mxu0 %v4259
    %4853 = vmatpush.bf16.msra.mxu0 %v4255
    %4854 = vmatpush.bf16.msra.mxu0 %v4251
    %4855 = vmatmul.bf16.gmra.mxu0 %v3177
    %v4856 = vpop.f32.mrf.mxu0
    %v4857 = vadd.f32 %v4844, %v4856
    %v4858 = vpop.f32.mrf.mxu0
    %4859 = vdwg.mxu0
    %4860 = vmatpush.bf16.msra.mxu0 %v4311
    %4861 = vmatpush.bf16.msra.mxu0 %v4307
    %4862 = vmatpush.bf16.msra.mxu0 %v4303
    %4863 = vmatpush.bf16.msra.mxu0 %v4299
    %4864 = vmatpush.bf16.msra.mxu0 %v4295
    %4865 = vmatpush.bf16.msra.mxu0 %v4291
    %4866 = vmatpush.bf16.msra.mxu0 %v4287
    %4867 = vmatpush.bf16.msra.mxu0 %v4283
    %4868 = vmatmul.bf16.gmra.mxu0 %v3178
    %v4869 = vpop.f32.mrf.mxu0
    %v4870 = vadd.f32 %v4857, %v4869
    %v4871 = vpop.f32.mrf.mxu0
    %4872 = vdwg.mxu0
    %4873 = vmatpush.bf16.msra.mxu0 %v4343
    %4874 = vmatpush.bf16.msra.mxu0 %v4339
    %4875 = vmatpush.bf16.msra.mxu0 %v4335
    %4876 = vmatpush.bf16.msra.mxu0 %v4331
    %4877 = vmatpush.bf16.msra.mxu0 %v4327
    %4878 = vmatpush.bf16.msra.mxu0 %v4323
    %4879 = vmatpush.bf16.msra.mxu0 %v4319
    %4880 = vmatpush.bf16.msra.mxu0 %v4315
    %4881 = vmatmul.bf16.gmra.mxu0 %v3179
    %v4882 = vpop.f32.mrf.mxu0
    %v4883 = vadd.f32 %v4870, %v4882
    %v4884 = vpop.f32.mrf.mxu0
    %4885 = vdwg.mxu0
    %4886 = vmatpush.bf16.msra.mxu0 %v4375
    %4887 = vmatpush.bf16.msra.mxu0 %v4371
    %4888 = vmatpush.bf16.msra.mxu0 %v4367
    %4889 = vmatpush.bf16.msra.mxu0 %v4363
    %4890 = vmatpush.bf16.msra.mxu0 %v4359
    %4891 = vmatpush.bf16.msra.mxu0 %v4355
    %4892 = vmatpush.bf16.msra.mxu0 %v4351
    %4893 = vmatpush.bf16.msra.mxu0 %v4347
    %4894 = vmatmul.bf16.gmra.mxu0 %v3180
    %v4895 = vpop.f32.mrf.mxu0
    %v4896 = vadd.f32 %v4883, %v4895
    %v4897 = vpop.f32.mrf.mxu0
    %4898 = vdwg.mxu0
    %4899 = vmatpush.bf16.msra.mxu0 %v4407
    %4900 = vmatpush.bf16.msra.mxu0 %v4403
    %4901 = vmatpush.bf16.msra.mxu0 %v4399
    %4902 = vmatpush.bf16.msra.mxu0 %v4395
    %4903 = vmatpush.bf16.msra.mxu0 %v4391
    %4904 = vmatpush.bf16.msra.mxu0 %v4387
    %4905 = vmatpush.bf16.msra.mxu0 %v4383
    %4906 = vmatpush.bf16.msra.mxu0 %v4379
    %4907 = vmatmul.bf16.gmra.mxu0 %v3181
    %v4908 = vpop.f32.mrf.mxu0
    %v4909 = vadd.f32 %v4896, %v4908
    %v4910 = vpop.f32.mrf.mxu0
    %4911 = vdwg.mxu0
    %4912 = vmatpush.bf16.msra.mxu0 %v4439
    %4913 = vmatpush.bf16.msra.mxu0 %v4435
    %4914 = vmatpush.bf16.msra.mxu0 %v4431
    %4915 = vmatpush.bf16.msra.mxu0 %v4427
    %4916 = vmatpush.bf16.msra.mxu0 %v4423
    %4917 = vmatpush.bf16.msra.mxu0 %v4419
    %4918 = vmatpush.bf16.msra.mxu0 %v4415
    %4919 = vmatpush.bf16.msra.mxu0 %v4411
    %4920 = vmatmul.bf16.gmra.mxu0 %v3182
    %v4921 = vpop.f32.mrf.mxu0
    %v4922 = vadd.f32 %v4909, %v4921
    %v4923 = vpop.f32.mrf.mxu0
    %4924 = vdwg.mxu0
    %4925 = vmatpush.bf16.msra.mxu0 %v4471
    %4926 = vmatpush.bf16.msra.mxu0 %v4467
    %4927 = vmatpush.bf16.msra.mxu0 %v4463
    %4928 = vmatpush.bf16.msra.mxu0 %v4459
    %4929 = vmatpush.bf16.msra.mxu0 %v4455
    %4930 = vmatpush.bf16.msra.mxu0 %v4451
    %4931 = vmatpush.bf16.msra.mxu0 %v4447
    %4932 = vmatpush.bf16.msra.mxu0 %v4443
    %4933 = vmatmul.bf16.gmra.mxu0 %v3183
    %v4934 = vpop.f32.mrf.mxu0
    %v4935 = vadd.f32 %v4922, %v4934
    %v4936 = vpop.f32.mrf.mxu0
    %4937 = vdwg.mxu0
    %4938 = vmatpush.bf16.msra.mxu0 %v4248
    %4939 = vmatpush.bf16.msra.mxu0 %v4244
    %4940 = vmatpush.bf16.msra.mxu0 %v4240
    %4941 = vmatpush.bf16.msra.mxu0 %v4236
    %4942 = vmatpush.bf16.msra.mxu0 %v4232
    %4943 = vmatpush.bf16.msra.mxu0 %v4228
    %4944 = vmatpush.bf16.msra.mxu0 %v4224
    %4945 = vmatpush.bf16.msra.mxu0 %v4220
    %4946 = vmatmul.bf16.gmra.mxu0 %v3176
    %v4947 = vpop.f32.mrf.mxu0
    %v4948 = vadd.f32 %v3444, %v4947
    %v4949 = vpop.f32.mrf.mxu0
    %4950 = vdwg.mxu0
    %4951 = vmatpush.bf16.msra.mxu0 %v4280
    %4952 = vmatpush.bf16.msra.mxu0 %v4276
    %4953 = vmatpush.bf16.msra.mxu0 %v4272
    %4954 = vmatpush.bf16.msra.mxu0 %v4268
    %4955 = vmatpush.bf16.msra.mxu0 %v4264
    %4956 = vmatpush.bf16.msra.mxu0 %v4260
    %4957 = vmatpush.bf16.msra.mxu0 %v4256
    %4958 = vmatpush.bf16.msra.mxu0 %v4252
    %4959 = vmatmul.bf16.gmra.mxu0 %v3177
    %v4960 = vpop.f32.mrf.mxu0
    %v4961 = vadd.f32 %v4948, %v4960
    %v4962 = vpop.f32.mrf.mxu0
    %4963 = vdwg.mxu0
    %4964 = vmatpush.bf16.msra.mxu0 %v4312
    %4965 = vmatpush.bf16.msra.mxu0 %v4308
    %4966 = vmatpush.bf16.msra.mxu0 %v4304
    %4967 = vmatpush.bf16.msra.mxu0 %v4300
    %4968 = vmatpush.bf16.msra.mxu0 %v4296
    %4969 = vmatpush.bf16.msra.mxu0 %v4292
    %4970 = vmatpush.bf16.msra.mxu0 %v4288
    %4971 = vmatpush.bf16.msra.mxu0 %v4284
    %4972 = vmatmul.bf16.gmra.mxu0 %v3178
    %v4973 = vpop.f32.mrf.mxu0
    %v4974 = vadd.f32 %v4961, %v4973
    %v4975 = vpop.f32.mrf.mxu0
    %4976 = vdwg.mxu0
    %4977 = vmatpush.bf16.msra.mxu0 %v4344
    %4978 = vmatpush.bf16.msra.mxu0 %v4340
    %4979 = vmatpush.bf16.msra.mxu0 %v4336
    %4980 = vmatpush.bf16.msra.mxu0 %v4332
    %4981 = vmatpush.bf16.msra.mxu0 %v4328
    %4982 = vmatpush.bf16.msra.mxu0 %v4324
    %4983 = vmatpush.bf16.msra.mxu0 %v4320
    %4984 = vmatpush.bf16.msra.mxu0 %v4316
    %4985 = vmatmul.bf16.gmra.mxu0 %v3179
    %v4986 = vpop.f32.mrf.mxu0
    %v4987 = vadd.f32 %v4974, %v4986
    %v4988 = vpop.f32.mrf.mxu0
    %4989 = vdwg.mxu0
    %4990 = vmatpush.bf16.msra.mxu0 %v4376
    %4991 = vmatpush.bf16.msra.mxu0 %v4372
    %4992 = vmatpush.bf16.msra.mxu0 %v4368
    %4993 = vmatpush.bf16.msra.mxu0 %v4364
    %4994 = vmatpush.bf16.msra.mxu0 %v4360
    %4995 = vmatpush.bf16.msra.mxu0 %v4356
    %4996 = vmatpush.bf16.msra.mxu0 %v4352
    %4997 = vmatpush.bf16.msra.mxu0 %v4348
    %4998 = vmatmul.bf16.gmra.mxu0 %v3180
    %v4999 = vpop.f32.mrf.mxu0
    %v5000 = vadd.f32 %v4987, %v4999
    %v5001 = vpop.f32.mrf.mxu0
    %5002 = vdwg.mxu0
    %5003 = vmatpush.bf16.msra.mxu0 %v4408
    %5004 = vmatpush.bf16.msra.mxu0 %v4404
    %5005 = vmatpush.bf16.msra.mxu0 %v4400
    %5006 = vmatpush.bf16.msra.mxu0 %v4396
    %5007 = vmatpush.bf16.msra.mxu0 %v4392
    %5008 = vmatpush.bf16.msra.mxu0 %v4388
    %5009 = vmatpush.bf16.msra.mxu0 %v4384
    %5010 = vmatpush.bf16.msra.mxu0 %v4380
    %5011 = vmatmul.bf16.gmra.mxu0 %v3181
    %v5012 = vpop.f32.mrf.mxu0
    %v5013 = vadd.f32 %v5000, %v5012
    %v5014 = vpop.f32.mrf.mxu0
    %5015 = vdwg.mxu0
    %5016 = vmatpush.bf16.msra.mxu0 %v4440
    %5017 = vmatpush.bf16.msra.mxu0 %v4436
    %5018 = vmatpush.bf16.msra.mxu0 %v4432
    %5019 = vmatpush.bf16.msra.mxu0 %v4428
    %5020 = vmatpush.bf16.msra.mxu0 %v4424
    %5021 = vmatpush.bf16.msra.mxu0 %v4420
    %5022 = vmatpush.bf16.msra.mxu0 %v4416
    %5023 = vmatpush.bf16.msra.mxu0 %v4412
    %5024 = vmatmul.bf16.gmra.mxu0 %v3182
    %v5025 = vpop.f32.mrf.mxu0
    %v5026 = vadd.f32 %v5013, %v5025
    %v5027 = vpop.f32.mrf.mxu0
    %5028 = vdwg.mxu0
    %5029 = vmatpush.bf16.msra.mxu0 %v4472
    %5030 = vmatpush.bf16.msra.mxu0 %v4468
    %5031 = vmatpush.bf16.msra.mxu0 %v4464
    %5032 = vmatpush.bf16.msra.mxu0 %v4460
    %5033 = vmatpush.bf16.msra.mxu0 %v4456
    %5034 = vmatpush.bf16.msra.mxu0 %v4452
    %5035 = vmatpush.bf16.msra.mxu0 %v4448
    %5036 = vmatpush.bf16.msra.mxu0 %v4444
    %5037 = vmatmul.bf16.gmra.mxu0 %v3183
    %v5038 = vpop.f32.mrf.mxu0
    %v5039 = vadd.f32 %v5026, %v5038
    %v5040 = vpop.f32.mrf.mxu0
    %5041 = vdwg.mxu0
    %5042 = vmatpush.bf16.msra.mxu0 %v4249
    %5043 = vmatpush.bf16.msra.mxu0 %v4245
    %5044 = vmatpush.bf16.msra.mxu0 %v4241
    %5045 = vmatpush.bf16.msra.mxu0 %v4237
    %5046 = vmatpush.bf16.msra.mxu0 %v4233
    %5047 = vmatpush.bf16.msra.mxu0 %v4229
    %5048 = vmatpush.bf16.msra.mxu0 %v4225
    %5049 = vmatpush.bf16.msra.mxu0 %v4221
    %5050 = vmatmul.bf16.gmra.mxu0 %v3176
    %v5051 = vpop.f32.mrf.mxu0
    %v5052 = vadd.f32 %v3445, %v5051
    %v5053 = vpop.f32.mrf.mxu0
    %5054 = vdwg.mxu0
    %5055 = vmatpush.bf16.msra.mxu0 %v4281
    %5056 = vmatpush.bf16.msra.mxu0 %v4277
    %5057 = vmatpush.bf16.msra.mxu0 %v4273
    %5058 = vmatpush.bf16.msra.mxu0 %v4269
    %5059 = vmatpush.bf16.msra.mxu0 %v4265
    %5060 = vmatpush.bf16.msra.mxu0 %v4261
    %5061 = vmatpush.bf16.msra.mxu0 %v4257
    %5062 = vmatpush.bf16.msra.mxu0 %v4253
    %5063 = vmatmul.bf16.gmra.mxu0 %v3177
    %v5064 = vpop.f32.mrf.mxu0
    %v5065 = vadd.f32 %v5052, %v5064
    %v5066 = vpop.f32.mrf.mxu0
    %5067 = vdwg.mxu0
    %5068 = vmatpush.bf16.msra.mxu0 %v4313
    %5069 = vmatpush.bf16.msra.mxu0 %v4309
    %5070 = vmatpush.bf16.msra.mxu0 %v4305
    %5071 = vmatpush.bf16.msra.mxu0 %v4301
    %5072 = vmatpush.bf16.msra.mxu0 %v4297
    %5073 = vmatpush.bf16.msra.mxu0 %v4293
    %5074 = vmatpush.bf16.msra.mxu0 %v4289
    %5075 = vmatpush.bf16.msra.mxu0 %v4285
    %5076 = vmatmul.bf16.gmra.mxu0 %v3178
    %v5077 = vpop.f32.mrf.mxu0
    %v5078 = vadd.f32 %v5065, %v5077
    %v5079 = vpop.f32.mrf.mxu0
    %5080 = vdwg.mxu0
    %5081 = vmatpush.bf16.msra.mxu0 %v4345
    %5082 = vmatpush.bf16.msra.mxu0 %v4341
    %5083 = vmatpush.bf16.msra.mxu0 %v4337
    %5084 = vmatpush.bf16.msra.mxu0 %v4333
    %5085 = vmatpush.bf16.msra.mxu0 %v4329
    %5086 = vmatpush.bf16.msra.mxu0 %v4325
    %5087 = vmatpush.bf16.msra.mxu0 %v4321
    %5088 = vmatpush.bf16.msra.mxu0 %v4317
    %5089 = vmatmul.bf16.gmra.mxu0 %v3179
    %v5090 = vpop.f32.mrf.mxu0
    %v5091 = vadd.f32 %v5078, %v5090
    %v5092 = vpop.f32.mrf.mxu0
    %5093 = vdwg.mxu0
    %5094 = vmatpush.bf16.msra.mxu0 %v4377
    %5095 = vmatpush.bf16.msra.mxu0 %v4373
    %5096 = vmatpush.bf16.msra.mxu0 %v4369
    %5097 = vmatpush.bf16.msra.mxu0 %v4365
    %5098 = vmatpush.bf16.msra.mxu0 %v4361
    %5099 = vmatpush.bf16.msra.mxu0 %v4357
    %5100 = vmatpush.bf16.msra.mxu0 %v4353
    %5101 = vmatpush.bf16.msra.mxu0 %v4349
    %5102 = vmatmul.bf16.gmra.mxu0 %v3180
    %v5103 = vpop.f32.mrf.mxu0
    %v5104 = vadd.f32 %v5091, %v5103
    %v5105 = vpop.f32.mrf.mxu0
    %5106 = vdwg.mxu0
    %5107 = vmatpush.bf16.msra.mxu0 %v4409
    %5108 = vmatpush.bf16.msra.mxu0 %v4405
    %5109 = vmatpush.bf16.msra.mxu0 %v4401
    %5110 = vmatpush.bf16.msra.mxu0 %v4397
    %5111 = vmatpush.bf16.msra.mxu0 %v4393
    %5112 = vmatpush.bf16.msra.mxu0 %v4389
    %5113 = vmatpush.bf16.msra.mxu0 %v4385
    %5114 = vmatpush.bf16.msra.mxu0 %v4381
    %5115 = vmatmul.bf16.gmra.mxu0 %v3181
    %v5116 = vpop.f32.mrf.mxu0
    %v5117 = vadd.f32 %v5104, %v5116
    %v5118 = vpop.f32.mrf.mxu0
    %5119 = vdwg.mxu0
    %5120 = vmatpush.bf16.msra.mxu0 %v4441
    %5121 = vmatpush.bf16.msra.mxu0 %v4437
    %5122 = vmatpush.bf16.msra.mxu0 %v4433
    %5123 = vmatpush.bf16.msra.mxu0 %v4429
    %5124 = vmatpush.bf16.msra.mxu0 %v4425
    %5125 = vmatpush.bf16.msra.mxu0 %v4421
    %5126 = vmatpush.bf16.msra.mxu0 %v4417
    %5127 = vmatpush.bf16.msra.mxu0 %v4413
    %5128 = vmatmul.bf16.gmra.mxu0 %v3182
    %v5129 = vpop.f32.mrf.mxu0
    %v5130 = vadd.f32 %v5117, %v5129
    %v5131 = vpop.f32.mrf.mxu0
    %5132 = vdwg.mxu0
    %5133 = vmatpush.bf16.msra.mxu0 %v4473
    %5134 = vmatpush.bf16.msra.mxu0 %v4469
    %5135 = vmatpush.bf16.msra.mxu0 %v4465
    %5136 = vmatpush.bf16.msra.mxu0 %v4461
    %5137 = vmatpush.bf16.msra.mxu0 %v4457
    %5138 = vmatpush.bf16.msra.mxu0 %v4453
    %5139 = vmatpush.bf16.msra.mxu0 %v4449
    %5140 = vmatpush.bf16.msra.mxu0 %v4445
    %5141 = vmatmul.bf16.gmra.mxu0 %v3183
    %v5142 = vpop.f32.mrf.mxu0
    %v5143 = vadd.f32 %v5130, %v5142
    %v5144 = vpop.f32.mrf.mxu0
    %5145 = vdwg.mxu0
    %v5146 = vmax.f32 %v4831, 0.0
    %v5147 = vmax.f32 %v4935, 0.0
    %v5148 = vmax.f32 %v5039, 0.0
    %v5149 = vmax.f32 %v5143, 0.0
    %v5150 = vpack.c.bf16 %v5146, %v5146
    %v5151 = vpack.c.bf16 %v5147, %v5147
    %v5152 = vpack.c.bf16 %v5148, %v5148
    %v5153 = vpack.c.bf16 %v5149, %v5149
    %v5154 = vld [vmem:[#allocation11] sm:$0xff]
    %v5155 = vld [vmem:[#allocation11 + $0x8] sm:$0xff]
    %v5156 = vld [vmem:[#allocation11 + $0x10] sm:$0xff]
    %v5157 = vld [vmem:[#allocation11 + $0x18] sm:$0xff]
    %v5158 = vld [vmem:[#allocation11 + $0x20] sm:$0xff]
    %v5159 = vld [vmem:[#allocation11 + $0x28] sm:$0xff]
    %v5160 = vld [vmem:[#allocation11 + $0x30] sm:$0xff]
    %v5161 = vld [vmem:[#allocation11 + $0x38] sm:$0xff]
    %v5162 = vld [vmem:[#allocation11 + $0x40] sm:$0xff]
    %v5163 = vld [vmem:[#allocation11 + $0x48] sm:$0xff]
    %v5164 = vld [vmem:[#allocation11 + $0x50] sm:$0xff]
    %v5165 = vld [vmem:[#allocation11 + $0x58] sm:$0xff]
    %v5166 = vld [vmem:[#allocation11 + $0x60] sm:$0xff]
    %v5167 = vld [vmem:[#allocation11 + $0x68] sm:$0xff]
    %v5168 = vld [vmem:[#allocation11 + $0x70] sm:$0xff]
    %v5169 = vld [vmem:[#allocation11 + $0x78] sm:$0xff]
    %v5170 = vld [vmem:[#allocation11 + $0x80] sm:$0xff]
    %v5171 = vld [vmem:[#allocation11 + $0x88] sm:$0xff]
    %v5172 = vld [vmem:[#allocation11 + $0x90] sm:$0xff]
    %v5173 = vld [vmem:[#allocation11 + $0x98] sm:$0xff]
    %v5174 = vld [vmem:[#allocation11 + $0xa0] sm:$0xff]
    %v5175 = vld [vmem:[#allocation11 + $0xa8] sm:$0xff]
    %v5176 = vld [vmem:[#allocation11 + $0xb0] sm:$0xff]
    %v5177 = vld [vmem:[#allocation11 + $0xb8] sm:$0xff]
    %v5178 = vld [vmem:[#allocation11 + $0xc0] sm:$0xff]
    %v5179 = vld [vmem:[#allocation11 + $0xc8] sm:$0xff]
    %v5180 = vld [vmem:[#allocation11 + $0xd0] sm:$0xff]
    %v5181 = vld [vmem:[#allocation11 + $0xd8] sm:$0xff]
    %v5182 = vld [vmem:[#allocation11 + $0xe0] sm:$0xff]
    %v5183 = vld [vmem:[#allocation11 + $0xe8] sm:$0xff]
    %v5184 = vld [vmem:[#allocation11 + $0xf0] sm:$0xff]
    %v5185 = vld [vmem:[#allocation11 + $0xf8] sm:$0xff]
    %v5186 = vld [vmem:[#allocation11 + $0x100] sm:$0xff]
    %v5187 = vld [vmem:[#allocation11 + $0x108] sm:$0xff]
    %v5188 = vld [vmem:[#allocation11 + $0x110] sm:$0xff]
    %v5189 = vld [vmem:[#allocation11 + $0x118] sm:$0xff]
    %v5190 = vld [vmem:[#allocation11 + $0x120] sm:$0xff]
    %v5191 = vld [vmem:[#allocation11 + $0x128] sm:$0xff]
    %v5192 = vld [vmem:[#allocation11 + $0x130] sm:$0xff]
    %v5193 = vld [vmem:[#allocation11 + $0x138] sm:$0xff]
    %v5194 = vld [vmem:[#allocation11 + $0x140] sm:$0xff]
    %v5195 = vld [vmem:[#allocation11 + $0x148] sm:$0xff]
    %v5196 = vld [vmem:[#allocation11 + $0x150] sm:$0xff]
    %v5197 = vld [vmem:[#allocation11 + $0x158] sm:$0xff]
    %v5198 = vld [vmem:[#allocation11 + $0x160] sm:$0xff]
    %v5199 = vld [vmem:[#allocation11 + $0x168] sm:$0xff]
    %v5200 = vld [vmem:[#allocation11 + $0x170] sm:$0xff]
    %v5201 = vld [vmem:[#allocation11 + $0x178] sm:$0xff]
    %v5202 = vld [vmem:[#allocation11 + $0x180] sm:$0xff]
    %v5203 = vld [vmem:[#allocation11 + $0x188] sm:$0xff]
    %v5204 = vld [vmem:[#allocation11 + $0x190] sm:$0xff]
    %v5205 = vld [vmem:[#allocation11 + $0x198] sm:$0xff]
    %v5206 = vld [vmem:[#allocation11 + $0x1a0] sm:$0xff]
    %v5207 = vld [vmem:[#allocation11 + $0x1a8] sm:$0xff]
    %v5208 = vld [vmem:[#allocation11 + $0x1b0] sm:$0xff]
    %v5209 = vld [vmem:[#allocation11 + $0x1b8] sm:$0xff]
    %v5210 = vld [vmem:[#allocation11 + $0x1c0] sm:$0xff]
    %v5211 = vld [vmem:[#allocation11 + $0x1c8] sm:$0xff]
    %v5212 = vld [vmem:[#allocation11 + $0x1d0] sm:$0xff]
    %v5213 = vld [vmem:[#allocation11 + $0x1d8] sm:$0xff]
    %v5214 = vld [vmem:[#allocation11 + $0x1e0] sm:$0xff]
    %v5215 = vld [vmem:[#allocation11 + $0x1e8] sm:$0xff]
    %v5216 = vld [vmem:[#allocation11 + $0x1f0] sm:$0xff]
    %v5217 = vld [vmem:[#allocation11 + $0x1f8] sm:$0xff]
    %v5218 = vld [vmem:[#allocation11 + $0x200] sm:$0xff]
    %v5219 = vld [vmem:[#allocation11 + $0x208] sm:$0xff]
    %v5220 = vld [vmem:[#allocation11 + $0x210] sm:$0xff]
    %v5221 = vld [vmem:[#allocation11 + $0x218] sm:$0xff]
    %v5222 = vld [vmem:[#allocation11 + $0x220] sm:$0xff]
    %v5223 = vld [vmem:[#allocation11 + $0x228] sm:$0xff]
    %v5224 = vld [vmem:[#allocation11 + $0x230] sm:$0xff]
    %v5225 = vld [vmem:[#allocation11 + $0x238] sm:$0xff]
    %v5226 = vld [vmem:[#allocation11 + $0x240] sm:$0xff]
    %v5227 = vld [vmem:[#allocation11 + $0x248] sm:$0xff]
    %v5228 = vld [vmem:[#allocation11 + $0x250] sm:$0xff]
    %v5229 = vld [vmem:[#allocation11 + $0x258] sm:$0xff]
    %v5230 = vld [vmem:[#allocation11 + $0x260] sm:$0xff]
    %v5231 = vld [vmem:[#allocation11 + $0x268] sm:$0xff]
    %v5232 = vld [vmem:[#allocation11 + $0x270] sm:$0xff]
    %v5233 = vld [vmem:[#allocation11 + $0x278] sm:$0xff]
    %v5234 = vld [vmem:[#allocation11 + $0x280] sm:$0xff]
    %v5235 = vld [vmem:[#allocation11 + $0x288] sm:$0xff]
    %v5236 = vld [vmem:[#allocation11 + $0x290] sm:$0xff]
    %v5237 = vld [vmem:[#allocation11 + $0x298] sm:$0xff]
    %v5238 = vld [vmem:[#allocation11 + $0x2a0] sm:$0xff]
    %v5239 = vld [vmem:[#allocation11 + $0x2a8] sm:$0xff]
    %v5240 = vld [vmem:[#allocation11 + $0x2b0] sm:$0xff]
    %v5241 = vld [vmem:[#allocation11 + $0x2b8] sm:$0xff]
    %v5242 = vld [vmem:[#allocation11 + $0x2c0] sm:$0xff]
    %v5243 = vld [vmem:[#allocation11 + $0x2c8] sm:$0xff]
    %v5244 = vld [vmem:[#allocation11 + $0x2d0] sm:$0xff]
    %v5245 = vld [vmem:[#allocation11 + $0x2d8] sm:$0xff]
    %v5246 = vld [vmem:[#allocation11 + $0x2e0] sm:$0xff]
    %v5247 = vld [vmem:[#allocation11 + $0x2e8] sm:$0xff]
    %v5248 = vld [vmem:[#allocation11 + $0x2f0] sm:$0xff]
    %v5249 = vld [vmem:[#allocation11 + $0x2f8] sm:$0xff]
    %v5250 = vld [vmem:[#allocation11 + $0x300] sm:$0xff]
    %v5251 = vld [vmem:[#allocation11 + $0x308] sm:$0xff]
    %v5252 = vld [vmem:[#allocation11 + $0x310] sm:$0xff]
    %v5253 = vld [vmem:[#allocation11 + $0x318] sm:$0xff]
    %v5254 = vld [vmem:[#allocation11 + $0x320] sm:$0xff]
    %v5255 = vld [vmem:[#allocation11 + $0x328] sm:$0xff]
    %v5256 = vld [vmem:[#allocation11 + $0x330] sm:$0xff]
    %v5257 = vld [vmem:[#allocation11 + $0x338] sm:$0xff]
    %v5258 = vld [vmem:[#allocation11 + $0x340] sm:$0xff]
    %v5259 = vld [vmem:[#allocation11 + $0x348] sm:$0xff]
    %v5260 = vld [vmem:[#allocation11 + $0x350] sm:$0xff]
    %v5261 = vld [vmem:[#allocation11 + $0x358] sm:$0xff]
    %v5262 = vld [vmem:[#allocation11 + $0x360] sm:$0xff]
    %v5263 = vld [vmem:[#allocation11 + $0x368] sm:$0xff]
    %v5264 = vld [vmem:[#allocation11 + $0x370] sm:$0xff]
    %v5265 = vld [vmem:[#allocation11 + $0x378] sm:$0xff]
    %v5266 = vld [vmem:[#allocation11 + $0x380] sm:$0xff]
    %v5267 = vld [vmem:[#allocation11 + $0x388] sm:$0xff]
    %v5268 = vld [vmem:[#allocation11 + $0x390] sm:$0xff]
    %v5269 = vld [vmem:[#allocation11 + $0x398] sm:$0xff]
    %v5270 = vld [vmem:[#allocation11 + $0x3a0] sm:$0xff]
    %v5271 = vld [vmem:[#allocation11 + $0x3a8] sm:$0xff]
    %v5272 = vld [vmem:[#allocation11 + $0x3b0] sm:$0xff]
    %v5273 = vld [vmem:[#allocation11 + $0x3b8] sm:$0xff]
    %v5274 = vld [vmem:[#allocation11 + $0x3c0] sm:$0xff]
    %v5275 = vld [vmem:[#allocation11 + $0x3c8] sm:$0xff]
    %v5276 = vld [vmem:[#allocation11 + $0x3d0] sm:$0xff]
    %v5277 = vld [vmem:[#allocation11 + $0x3d8] sm:$0xff]
    %v5278 = vld [vmem:[#allocation11 + $0x3e0] sm:$0xff]
    %v5279 = vld [vmem:[#allocation11 + $0x3e8] sm:$0xff]
    %v5280 = vld [vmem:[#allocation11 + $0x3f0] sm:$0xff]
    %v5281 = vld [vmem:[#allocation11 + $0x3f8] sm:$0xff]
    %v5282 = vld [vmem:[#allocation13] sm:$0xf]
    %v5284 = vperm.slane %v5282, 0
    %v5285 = vperm.slane %v5282, 1
    %v5286 = vperm.slane %v5282, 2
    %v5287 = vperm.slane %v5282, 3
    %v5420 = vunpack.c.l.b16 %v5154
    %v5421 = vunpack.c.h.b16 %v5154
    %v5422 = vunpack.c.l.b16 %v5155
    %v5423 = vunpack.c.h.b16 %v5155
    %v5424 = vunpack.c.l.b16 %v5156
    %v5425 = vunpack.c.h.b16 %v5156
    %v5426 = vunpack.c.l.b16 %v5157
    %v5427 = vunpack.c.h.b16 %v5157
    %v5428 = vunpack.c.l.b16 %v5158
    %v5429 = vunpack.c.h.b16 %v5158
    %v5430 = vunpack.c.l.b16 %v5159
    %v5431 = vunpack.c.h.b16 %v5159
    %v5432 = vunpack.c.l.b16 %v5160
    %v5433 = vunpack.c.h.b16 %v5160
    %v5434 = vunpack.c.l.b16 %v5161
    %v5435 = vunpack.c.h.b16 %v5161
    %v5436 = vunpack.c.l.b16 %v5162
    %v5437 = vunpack.c.h.b16 %v5162
    %v5438 = vunpack.c.l.b16 %v5163
    %v5439 = vunpack.c.h.b16 %v5163
    %v5440 = vunpack.c.l.b16 %v5164
    %v5441 = vunpack.c.h.b16 %v5164
    %v5442 = vunpack.c.l.b16 %v5165
    %v5443 = vunpack.c.h.b16 %v5165
    %v5444 = vunpack.c.l.b16 %v5166
    %v5445 = vunpack.c.h.b16 %v5166
    %v5446 = vunpack.c.l.b16 %v5167
    %v5447 = vunpack.c.h.b16 %v5167
    %v5448 = vunpack.c.l.b16 %v5168
    %v5449 = vunpack.c.h.b16 %v5168
    %v5450 = vunpack.c.l.b16 %v5169
    %v5451 = vunpack.c.h.b16 %v5169
    %v5452 = vunpack.c.l.b16 %v5170
    %v5453 = vunpack.c.h.b16 %v5170
    %v5454 = vunpack.c.l.b16 %v5171
    %v5455 = vunpack.c.h.b16 %v5171
    %v5456 = vunpack.c.l.b16 %v5172
    %v5457 = vunpack.c.h.b16 %v5172
    %v5458 = vunpack.c.l.b16 %v5173
    %v5459 = vunpack.c.h.b16 %v5173
    %v5460 = vunpack.c.l.b16 %v5174
    %v5461 = vunpack.c.h.b16 %v5174
    %v5462 = vunpack.c.l.b16 %v5175
    %v5463 = vunpack.c.h.b16 %v5175
    %v5464 = vunpack.c.l.b16 %v5176
    %v5465 = vunpack.c.h.b16 %v5176
    %v5466 = vunpack.c.l.b16 %v5177
    %v5467 = vunpack.c.h.b16 %v5177
    %v5468 = vunpack.c.l.b16 %v5178
    %v5469 = vunpack.c.h.b16 %v5178
    %v5470 = vunpack.c.l.b16 %v5179
    %v5471 = vunpack.c.h.b16 %v5179
    %v5472 = vunpack.c.l.b16 %v5180
    %v5473 = vunpack.c.h.b16 %v5180
    %v5474 = vunpack.c.l.b16 %v5181
    %v5475 = vunpack.c.h.b16 %v5181
    %v5476 = vunpack.c.l.b16 %v5182
    %v5477 = vunpack.c.h.b16 %v5182
    %v5478 = vunpack.c.l.b16 %v5183
    %v5479 = vunpack.c.h.b16 %v5183
    %v5480 = vunpack.c.l.b16 %v5184
    %v5481 = vunpack.c.h.b16 %v5184
    %v5482 = vunpack.c.l.b16 %v5185
    %v5483 = vunpack.c.h.b16 %v5185
    %v5484 = vunpack.c.l.b16 %v5186
    %v5485 = vunpack.c.h.b16 %v5186
    %v5486 = vunpack.c.l.b16 %v5187
    %v5487 = vunpack.c.h.b16 %v5187
    %v5488 = vunpack.c.l.b16 %v5188
    %v5489 = vunpack.c.h.b16 %v5188
    %v5490 = vunpack.c.l.b16 %v5189
    %v5491 = vunpack.c.h.b16 %v5189
    %v5492 = vunpack.c.l.b16 %v5190
    %v5493 = vunpack.c.h.b16 %v5190
    %v5494 = vunpack.c.l.b16 %v5191
    %v5495 = vunpack.c.h.b16 %v5191
    %v5496 = vunpack.c.l.b16 %v5192
    %v5497 = vunpack.c.h.b16 %v5192
    %v5498 = vunpack.c.l.b16 %v5193
    %v5499 = vunpack.c.h.b16 %v5193
    %v5500 = vunpack.c.l.b16 %v5194
    %v5501 = vunpack.c.h.b16 %v5194
    %v5502 = vunpack.c.l.b16 %v5195
    %v5503 = vunpack.c.h.b16 %v5195
    %v5504 = vunpack.c.l.b16 %v5196
    %v5505 = vunpack.c.h.b16 %v5196
    %v5506 = vunpack.c.l.b16 %v5197
    %v5507 = vunpack.c.h.b16 %v5197
    %v5508 = vunpack.c.l.b16 %v5198
    %v5509 = vunpack.c.h.b16 %v5198
    %v5510 = vunpack.c.l.b16 %v5199
    %v5511 = vunpack.c.h.b16 %v5199
    %v5512 = vunpack.c.l.b16 %v5200
    %v5513 = vunpack.c.h.b16 %v5200
    %v5514 = vunpack.c.l.b16 %v5201
    %v5515 = vunpack.c.h.b16 %v5201
    %v5516 = vunpack.c.l.b16 %v5202
    %v5517 = vunpack.c.h.b16 %v5202
    %v5518 = vunpack.c.l.b16 %v5203
    %v5519 = vunpack.c.h.b16 %v5203
    %v5520 = vunpack.c.l.b16 %v5204
    %v5521 = vunpack.c.h.b16 %v5204
    %v5522 = vunpack.c.l.b16 %v5205
    %v5523 = vunpack.c.h.b16 %v5205
    %v5524 = vunpack.c.l.b16 %v5206
    %v5525 = vunpack.c.h.b16 %v5206
    %v5526 = vunpack.c.l.b16 %v5207
    %v5527 = vunpack.c.h.b16 %v5207
    %v5528 = vunpack.c.l.b16 %v5208
    %v5529 = vunpack.c.h.b16 %v5208
    %v5530 = vunpack.c.l.b16 %v5209
    %v5531 = vunpack.c.h.b16 %v5209
    %v5532 = vunpack.c.l.b16 %v5210
    %v5533 = vunpack.c.h.b16 %v5210
    %v5534 = vunpack.c.l.b16 %v5211
    %v5535 = vunpack.c.h.b16 %v5211
    %v5536 = vunpack.c.l.b16 %v5212
    %v5537 = vunpack.c.h.b16 %v5212
    %v5538 = vunpack.c.l.b16 %v5213
    %v5539 = vunpack.c.h.b16 %v5213
    %v5540 = vunpack.c.l.b16 %v5214
    %v5541 = vunpack.c.h.b16 %v5214
    %v5542 = vunpack.c.l.b16 %v5215
    %v5543 = vunpack.c.h.b16 %v5215
    %v5544 = vunpack.c.l.b16 %v5216
    %v5545 = vunpack.c.h.b16 %v5216
    %v5546 = vunpack.c.l.b16 %v5217
    %v5547 = vunpack.c.h.b16 %v5217
    %v5548 = vunpack.c.l.b16 %v5218
    %v5549 = vunpack.c.h.b16 %v5218
    %v5550 = vunpack.c.l.b16 %v5219
    %v5551 = vunpack.c.h.b16 %v5219
    %v5552 = vunpack.c.l.b16 %v5220
    %v5553 = vunpack.c.h.b16 %v5220
    %v5554 = vunpack.c.l.b16 %v5221
    %v5555 = vunpack.c.h.b16 %v5221
    %v5556 = vunpack.c.l.b16 %v5222
    %v5557 = vunpack.c.h.b16 %v5222
    %v5558 = vunpack.c.l.b16 %v5223
    %v5559 = vunpack.c.h.b16 %v5223
    %v5560 = vunpack.c.l.b16 %v5224
    %v5561 = vunpack.c.h.b16 %v5224
    %v5562 = vunpack.c.l.b16 %v5225
    %v5563 = vunpack.c.h.b16 %v5225
    %v5564 = vunpack.c.l.b16 %v5226
    %v5565 = vunpack.c.h.b16 %v5226
    %v5566 = vunpack.c.l.b16 %v5227
    %v5567 = vunpack.c.h.b16 %v5227
    %v5568 = vunpack.c.l.b16 %v5228
    %v5569 = vunpack.c.h.b16 %v5228
    %v5570 = vunpack.c.l.b16 %v5229
    %v5571 = vunpack.c.h.b16 %v5229
    %v5572 = vunpack.c.l.b16 %v5230
    %v5573 = vunpack.c.h.b16 %v5230
    %v5574 = vunpack.c.l.b16 %v5231
    %v5575 = vunpack.c.h.b16 %v5231
    %v5576 = vunpack.c.l.b16 %v5232
    %v5577 = vunpack.c.h.b16 %v5232
    %v5578 = vunpack.c.l.b16 %v5233
    %v5579 = vunpack.c.h.b16 %v5233
    %v5580 = vunpack.c.l.b16 %v5234
    %v5581 = vunpack.c.h.b16 %v5234
    %v5582 = vunpack.c.l.b16 %v5235
    %v5583 = vunpack.c.h.b16 %v5235
    %v5584 = vunpack.c.l.b16 %v5236
    %v5585 = vunpack.c.h.b16 %v5236
    %v5586 = vunpack.c.l.b16 %v5237
    %v5587 = vunpack.c.h.b16 %v5237
    %v5588 = vunpack.c.l.b16 %v5238
    %v5589 = vunpack.c.h.b16 %v5238
    %v5590 = vunpack.c.l.b16 %v5239
    %v5591 = vunpack.c.h.b16 %v5239
    %v5592 = vunpack.c.l.b16 %v5240
    %v5593 = vunpack.c.h.b16 %v5240
    %v5594 = vunpack.c.l.b16 %v5241
    %v5595 = vunpack.c.h.b16 %v5241
    %v5596 = vunpack.c.l.b16 %v5242
    %v5597 = vunpack.c.h.b16 %v5242
    %v5598 = vunpack.c.l.b16 %v5243
    %v5599 = vunpack.c.h.b16 %v5243
    %v5600 = vunpack.c.l.b16 %v5244
    %v5601 = vunpack.c.h.b16 %v5244
    %v5602 = vunpack.c.l.b16 %v5245
    %v5603 = vunpack.c.h.b16 %v5245
    %v5604 = vunpack.c.l.b16 %v5246
    %v5605 = vunpack.c.h.b16 %v5246
    %v5606 = vunpack.c.l.b16 %v5247
    %v5607 = vunpack.c.h.b16 %v5247
    %v5608 = vunpack.c.l.b16 %v5248
    %v5609 = vunpack.c.h.b16 %v5248
    %v5610 = vunpack.c.l.b16 %v5249
    %v5611 = vunpack.c.h.b16 %v5249
    %v5612 = vunpack.c.l.b16 %v5250
    %v5613 = vunpack.c.h.b16 %v5250
    %v5614 = vunpack.c.l.b16 %v5251
    %v5615 = vunpack.c.h.b16 %v5251
    %v5616 = vunpack.c.l.b16 %v5252
    %v5617 = vunpack.c.h.b16 %v5252
    %v5618 = vunpack.c.l.b16 %v5253
    %v5619 = vunpack.c.h.b16 %v5253
    %v5620 = vunpack.c.l.b16 %v5254
    %v5621 = vunpack.c.h.b16 %v5254
    %v5622 = vunpack.c.l.b16 %v5255
    %v5623 = vunpack.c.h.b16 %v5255
    %v5624 = vunpack.c.l.b16 %v5256
    %v5625 = vunpack.c.h.b16 %v5256
    %v5626 = vunpack.c.l.b16 %v5257
    %v5627 = vunpack.c.h.b16 %v5257
    %v5628 = vunpack.c.l.b16 %v5258
    %v5629 = vunpack.c.h.b16 %v5258
    %v5630 = vunpack.c.l.b16 %v5259
    %v5631 = vunpack.c.h.b16 %v5259
    %v5632 = vunpack.c.l.b16 %v5260
    %v5633 = vunpack.c.h.b16 %v5260
    %v5634 = vunpack.c.l.b16 %v5261
    %v5635 = vunpack.c.h.b16 %v5261
    %v5636 = vunpack.c.l.b16 %v5262
    %v5637 = vunpack.c.h.b16 %v5262
    %v5638 = vunpack.c.l.b16 %v5263
    %v5639 = vunpack.c.h.b16 %v5263
    %v5640 = vunpack.c.l.b16 %v5264
    %v5641 = vunpack.c.h.b16 %v5264
    %v5642 = vunpack.c.l.b16 %v5265
    %v5643 = vunpack.c.h.b16 %v5265
    %v5644 = vunpack.c.l.b16 %v5266
    %v5645 = vunpack.c.h.b16 %v5266
    %v5646 = vunpack.c.l.b16 %v5267
    %v5647 = vunpack.c.h.b16 %v5267
    %v5648 = vunpack.c.l.b16 %v5268
    %v5649 = vunpack.c.h.b16 %v5268
    %v5650 = vunpack.c.l.b16 %v5269
    %v5651 = vunpack.c.h.b16 %v5269
    %v5652 = vunpack.c.l.b16 %v5270
    %v5653 = vunpack.c.h.b16 %v5270
    %v5654 = vunpack.c.l.b16 %v5271
    %v5655 = vunpack.c.h.b16 %v5271
    %v5656 = vunpack.c.l.b16 %v5272
    %v5657 = vunpack.c.h.b16 %v5272
    %v5658 = vunpack.c.l.b16 %v5273
    %v5659 = vunpack.c.h.b16 %v5273
    %v5660 = vunpack.c.l.b16 %v5274
    %v5661 = vunpack.c.h.b16 %v5274
    %v5662 = vunpack.c.l.b16 %v5275
    %v5663 = vunpack.c.h.b16 %v5275
    %v5664 = vunpack.c.l.b16 %v5276
    %v5665 = vunpack.c.h.b16 %v5276
    %v5666 = vunpack.c.l.b16 %v5277
    %v5667 = vunpack.c.h.b16 %v5277
    %v5668 = vunpack.c.l.b16 %v5278
    %v5669 = vunpack.c.h.b16 %v5278
    %v5670 = vunpack.c.l.b16 %v5279
    %v5671 = vunpack.c.h.b16 %v5279
    %v5672 = vunpack.c.l.b16 %v5280
    %v5673 = vunpack.c.h.b16 %v5280
    %v5674 = vunpack.c.l.b16 %v5281
    %v5675 = vunpack.c.h.b16 %v5281
    %v5676 = vpack.c.b16 %v5424, %v5420
    %v5677 = vpack.c.b16 %v5425, %v5421
    %v5678 = vpack.c.b16 %v5426, %v5422
    %v5679 = vpack.c.b16 %v5427, %v5423
    %v5680 = vpack.c.b16 %v5432, %v5428
    %v5681 = vpack.c.b16 %v5433, %v5429
    %v5682 = vpack.c.b16 %v5434, %v5430
    %v5683 = vpack.c.b16 %v5435, %v5431
    %v5684 = vpack.c.b16 %v5440, %v5436
    %v5685 = vpack.c.b16 %v5441, %v5437
    %v5686 = vpack.c.b16 %v5442, %v5438
    %v5687 = vpack.c.b16 %v5443, %v5439
    %v5688 = vpack.c.b16 %v5448, %v5444
    %v5689 = vpack.c.b16 %v5449, %v5445
    %v5690 = vpack.c.b16 %v5450, %v5446
    %v5691 = vpack.c.b16 %v5451, %v5447
    %v5692 = vpack.c.b16 %v5456, %v5452
    %v5693 = vpack.c.b16 %v5457, %v5453
    %v5694 = vpack.c.b16 %v5458, %v5454
    %v5695 = vpack.c.b16 %v5459, %v5455
    %v5696 = vpack.c.b16 %v5464, %v5460
    %v5697 = vpack.c.b16 %v5465, %v5461
    %v5698 = vpack.c.b16 %v5466, %v5462
    %v5699 = vpack.c.b16 %v5467, %v5463
    %v5700 = vpack.c.b16 %v5472, %v5468
    %v5701 = vpack.c.b16 %v5473, %v5469
    %v5702 = vpack.c.b16 %v5474, %v5470
    %v5703 = vpack.c.b16 %v5475, %v5471
    %v5704 = vpack.c.b16 %v5480, %v5476
    %v5705 = vpack.c.b16 %v5481, %v5477
    %v5706 = vpack.c.b16 %v5482, %v5478
    %v5707 = vpack.c.b16 %v5483, %v5479
    %v5708 = vpack.c.b16 %v5488, %v5484
    %v5709 = vpack.c.b16 %v5489, %v5485
    %v5710 = vpack.c.b16 %v5490, %v5486
    %v5711 = vpack.c.b16 %v5491, %v5487
    %v5712 = vpack.c.b16 %v5496, %v5492
    %v5713 = vpack.c.b16 %v5497, %v5493
    %v5714 = vpack.c.b16 %v5498, %v5494
    %v5715 = vpack.c.b16 %v5499, %v5495
    %v5716 = vpack.c.b16 %v5504, %v5500
    %v5717 = vpack.c.b16 %v5505, %v5501
    %v5718 = vpack.c.b16 %v5506, %v5502
    %v5719 = vpack.c.b16 %v5507, %v5503
    %v5720 = vpack.c.b16 %v5512, %v5508
    %v5721 = vpack.c.b16 %v5513, %v5509
    %v5722 = vpack.c.b16 %v5514, %v5510
    %v5723 = vpack.c.b16 %v5515, %v5511
    %v5724 = vpack.c.b16 %v5520, %v5516
    %v5725 = vpack.c.b16 %v5521, %v5517
    %v5726 = vpack.c.b16 %v5522, %v5518
    %v5727 = vpack.c.b16 %v5523, %v5519
    %v5728 = vpack.c.b16 %v5528, %v5524
    %v5729 = vpack.c.b16 %v5529, %v5525
    %v5730 = vpack.c.b16 %v5530, %v5526
    %v5731 = vpack.c.b16 %v5531, %v5527
    %v5732 = vpack.c.b16 %v5536, %v5532
    %v5733 = vpack.c.b16 %v5537, %v5533
    %v5734 = vpack.c.b16 %v5538, %v5534
    %v5735 = vpack.c.b16 %v5539, %v5535
    %v5736 = vpack.c.b16 %v5544, %v5540
    %v5737 = vpack.c.b16 %v5545, %v5541
    %v5738 = vpack.c.b16 %v5546, %v5542
    %v5739 = vpack.c.b16 %v5547, %v5543
    %v5740 = vpack.c.b16 %v5552, %v5548
    %v5741 = vpack.c.b16 %v5553, %v5549
    %v5742 = vpack.c.b16 %v5554, %v5550
    %v5743 = vpack.c.b16 %v5555, %v5551
    %v5744 = vpack.c.b16 %v5560, %v5556
    %v5745 = vpack.c.b16 %v5561, %v5557
    %v5746 = vpack.c.b16 %v5562, %v5558
    %v5747 = vpack.c.b16 %v5563, %v5559
    %v5748 = vpack.c.b16 %v5568, %v5564
    %v5749 = vpack.c.b16 %v5569, %v5565
    %v5750 = vpack.c.b16 %v5570, %v5566
    %v5751 = vpack.c.b16 %v5571, %v5567
    %v5752 = vpack.c.b16 %v5576, %v5572
    %v5753 = vpack.c.b16 %v5577, %v5573
    %v5754 = vpack.c.b16 %v5578, %v5574
    %v5755 = vpack.c.b16 %v5579, %v5575
    %v5756 = vpack.c.b16 %v5584, %v5580
    %v5757 = vpack.c.b16 %v5585, %v5581
    %v5758 = vpack.c.b16 %v5586, %v5582
    %v5759 = vpack.c.b16 %v5587, %v5583
    %v5760 = vpack.c.b16 %v5592, %v5588
    %v5761 = vpack.c.b16 %v5593, %v5589
    %v5762 = vpack.c.b16 %v5594, %v5590
    %v5763 = vpack.c.b16 %v5595, %v5591
    %v5764 = vpack.c.b16 %v5600, %v5596
    %v5765 = vpack.c.b16 %v5601, %v5597
    %v5766 = vpack.c.b16 %v5602, %v5598
    %v5767 = vpack.c.b16 %v5603, %v5599
    %v5768 = vpack.c.b16 %v5608, %v5604
    %v5769 = vpack.c.b16 %v5609, %v5605
    %v5770 = vpack.c.b16 %v5610, %v5606
    %v5771 = vpack.c.b16 %v5611, %v5607
    %v5772 = vpack.c.b16 %v5616, %v5612
    %v5773 = vpack.c.b16 %v5617, %v5613
    %v5774 = vpack.c.b16 %v5618, %v5614
    %v5775 = vpack.c.b16 %v5619, %v5615
    %v5776 = vpack.c.b16 %v5624, %v5620
    %v5777 = vpack.c.b16 %v5625, %v5621
    %v5778 = vpack.c.b16 %v5626, %v5622
    %v5779 = vpack.c.b16 %v5627, %v5623
    %v5780 = vpack.c.b16 %v5632, %v5628
    %v5781 = vpack.c.b16 %v5633, %v5629
    %v5782 = vpack.c.b16 %v5634, %v5630
    %v5783 = vpack.c.b16 %v5635, %v5631
    %v5784 = vpack.c.b16 %v5640, %v5636
    %v5785 = vpack.c.b16 %v5641, %v5637
    %v5786 = vpack.c.b16 %v5642, %v5638
    %v5787 = vpack.c.b16 %v5643, %v5639
    %v5788 = vpack.c.b16 %v5648, %v5644
    %v5789 = vpack.c.b16 %v5649, %v5645
    %v5790 = vpack.c.b16 %v5650, %v5646
    %v5791 = vpack.c.b16 %v5651, %v5647
    %v5792 = vpack.c.b16 %v5656, %v5652
    %v5793 = vpack.c.b16 %v5657, %v5653
    %v5794 = vpack.c.b16 %v5658, %v5654
    %v5795 = vpack.c.b16 %v5659, %v5655
    %v5796 = vpack.c.b16 %v5664, %v5660
    %v5797 = vpack.c.b16 %v5665, %v5661
    %v5798 = vpack.c.b16 %v5666, %v5662
    %v5799 = vpack.c.b16 %v5667, %v5663
    %v5800 = vpack.c.b16 %v5672, %v5668
    %v5801 = vpack.c.b16 %v5673, %v5669
    %v5802 = vpack.c.b16 %v5674, %v5670
    %v5803 = vpack.c.b16 %v5675, %v5671
    %5932 = vmatpush.bf16.msra.mxu0 %v5704
    %5933 = vmatpush.bf16.msra.mxu0 %v5700
    %5934 = vmatpush.bf16.msra.mxu0 %v5696
    %5935 = vmatpush.bf16.msra.mxu0 %v5692
    %5936 = vmatpush.bf16.msra.mxu0 %v5688
    %5937 = vmatpush.bf16.msra.mxu0 %v5684
    %5938 = vmatpush.bf16.msra.mxu0 %v5680
    %5939 = vmatpush.bf16.msra.mxu0 %v5676
    %5940 = vmatmul.bf16.gmra.mxu0 %v5150
    %v5941 = vpop.f32.mrf.mxu0
    %v5942 = vadd.f32 %v5284, %v5941
    %v5943 = vpop.f32.mrf.mxu0
    %5944 = vdwg.mxu0
    %5945 = vmatpush.bf16.msra.mxu0 %v5736
    %5946 = vmatpush.bf16.msra.mxu0 %v5732
    %5947 = vmatpush.bf16.msra.mxu0 %v5728
    %5948 = vmatpush.bf16.msra.mxu0 %v5724
    %5949 = vmatpush.bf16.msra.mxu0 %v5720
    %5950 = vmatpush.bf16.msra.mxu0 %v5716
    %5951 = vmatpush.bf16.msra.mxu0 %v5712
    %5952 = vmatpush.bf16.msra.mxu0 %v5708
    %5953 = vmatmul.bf16.gmra.mxu0 %v5151
    %v5954 = vpop.f32.mrf.mxu0
    %v5955 = vadd.f32 %v5942, %v5954
    %v5956 = vpop.f32.mrf.mxu0
    %5957 = vdwg.mxu0
    %5958 = vmatpush.bf16.msra.mxu0 %v5768
    %5959 = vmatpush.bf16.msra.mxu0 %v5764
    %5960 = vmatpush.bf16.msra.mxu0 %v5760
    %5961 = vmatpush.bf16.msra.mxu0 %v5756
    %5962 = vmatpush.bf16.msra.mxu0 %v5752
    %5963 = vmatpush.bf16.msra.mxu0 %v5748
    %5964 = vmatpush.bf16.msra.mxu0 %v5744
    %5965 = vmatpush.bf16.msra.mxu0 %v5740
    %5966 = vmatmul.bf16.gmra.mxu0 %v5152
    %v5967 = vpop.f32.mrf.mxu0
    %v5968 = vadd.f32 %v5955, %v5967
    %v5969 = vpop.f32.mrf.mxu0
    %5970 = vdwg.mxu0
    %5971 = vmatpush.bf16.msra.mxu0 %v5800
    %5972 = vmatpush.bf16.msra.mxu0 %v5796
    %5973 = vmatpush.bf16.msra.mxu0 %v5792
    %5974 = vmatpush.bf16.msra.mxu0 %v5788
    %5975 = vmatpush.bf16.msra.mxu0 %v5784
    %5976 = vmatpush.bf16.msra.mxu0 %v5780
    %5977 = vmatpush.bf16.msra.mxu0 %v5776
    %5978 = vmatpush.bf16.msra.mxu0 %v5772
    %5979 = vmatmul.bf16.gmra.mxu0 %v5153
    %v5980 = vpop.f32.mrf.mxu0
    %v5981 = vadd.f32 %v5968, %v5980
    %v5982 = vpop.f32.mrf.mxu0
    %5983 = vdwg.mxu0
    %5984 = vmatpush.bf16.msra.mxu0 %v5705
    %5985 = vmatpush.bf16.msra.mxu0 %v5701
    %5986 = vmatpush.bf16.msra.mxu0 %v5697
    %5987 = vmatpush.bf16.msra.mxu0 %v5693
    %5988 = vmatpush.bf16.msra.mxu0 %v5689
    %5989 = vmatpush.bf16.msra.mxu0 %v5685
    %5990 = vmatpush.bf16.msra.mxu0 %v5681
    %5991 = vmatpush.bf16.msra.mxu0 %v5677
    %5992 = vmatmul.bf16.gmra.mxu0 %v5150
    %v5993 = vpop.f32.mrf.mxu0
    %v5994 = vadd.f32 %v5285, %v5993
    %v5995 = vpop.f32.mrf.mxu0
    %5996 = vdwg.mxu0
    %5997 = vmatpush.bf16.msra.mxu0 %v5737
    %5998 = vmatpush.bf16.msra.mxu0 %v5733
    %5999 = vmatpush.bf16.msra.mxu0 %v5729
    %6000 = vmatpush.bf16.msra.mxu0 %v5725
    %6001 = vmatpush.bf16.msra.mxu0 %v5721
    %6002 = vmatpush.bf16.msra.mxu0 %v5717
    %6003 = vmatpush.bf16.msra.mxu0 %v5713
    %6004 = vmatpush.bf16.msra.mxu0 %v5709
    %6005 = vmatmul.bf16.gmra.mxu0 %v5151
    %v6006 = vpop.f32.mrf.mxu0
    %v6007 = vadd.f32 %v5994, %v6006
    %v6008 = vpop.f32.mrf.mxu0
    %6009 = vdwg.mxu0
    %6010 = vmatpush.bf16.msra.mxu0 %v5769
    %6011 = vmatpush.bf16.msra.mxu0 %v5765
    %6012 = vmatpush.bf16.msra.mxu0 %v5761
    %6013 = vmatpush.bf16.msra.mxu0 %v5757
    %6014 = vmatpush.bf16.msra.mxu0 %v5753
    %6015 = vmatpush.bf16.msra.mxu0 %v5749
    %6016 = vmatpush.bf16.msra.mxu0 %v5745
    %6017 = vmatpush.bf16.msra.mxu0 %v5741
    %6018 = vmatmul.bf16.gmra.mxu0 %v5152
    %v6019 = vpop.f32.mrf.mxu0
    %v6020 = vadd.f32 %v6007, %v6019
    %v6021 = vpop.f32.mrf.mxu0
    %6022 = vdwg.mxu0
    %6023 = vmatpush.bf16.msra.mxu0 %v5801
    %6024 = vmatpush.bf16.msra.mxu0 %v5797
    %6025 = vmatpush.bf16.msra.mxu0 %v5793
    %6026 = vmatpush.bf16.msra.mxu0 %v5789
    %6027 = vmatpush.bf16.msra.mxu0 %v5785
    %6028 = vmatpush.bf16.msra.mxu0 %v5781
    %6029 = vmatpush.bf16.msra.mxu0 %v5777
    %6030 = vmatpush.bf16.msra.mxu0 %v5773
    %6031 = vmatmul.bf16.gmra.mxu0 %v5153
    %v6032 = vpop.f32.mrf.mxu0
    %v6033 = vadd.f32 %v6020, %v6032
    %v6034 = vpop.f32.mrf.mxu0
    %6035 = vdwg.mxu0
    %6036 = vmatpush.bf16.msra.mxu0 %v5706
    %6037 = vmatpush.bf16.msra.mxu0 %v5702
    %6038 = vmatpush.bf16.msra.mxu0 %v5698
    %6039 = vmatpush.bf16.msra.mxu0 %v5694
    %6040 = vmatpush.bf16.msra.mxu0 %v5690
    %6041 = vmatpush.bf16.msra.mxu0 %v5686
    %6042 = vmatpush.bf16.msra.mxu0 %v5682
    %6043 = vmatpush.bf16.msra.mxu0 %v5678
    %6044 = vmatmul.bf16.gmra.mxu0 %v5150
    %v6045 = vpop.f32.mrf.mxu0
    %v6046 = vadd.f32 %v5286, %v6045
    %v6047 = vpop.f32.mrf.mxu0
    %6048 = vdwg.mxu0
    %6049 = vmatpush.bf16.msra.mxu0 %v5738
    %6050 = vmatpush.bf16.msra.mxu0 %v5734
    %6051 = vmatpush.bf16.msra.mxu0 %v5730
    %6052 = vmatpush.bf16.msra.mxu0 %v5726
    %6053 = vmatpush.bf16.msra.mxu0 %v5722
    %6054 = vmatpush.bf16.msra.mxu0 %v5718
    %6055 = vmatpush.bf16.msra.mxu0 %v5714
    %6056 = vmatpush.bf16.msra.mxu0 %v5710
    %6057 = vmatmul.bf16.gmra.mxu0 %v5151
    %v6058 = vpop.f32.mrf.mxu0
    %v6059 = vadd.f32 %v6046, %v6058
    %v6060 = vpop.f32.mrf.mxu0
    %6061 = vdwg.mxu0
    %6062 = vmatpush.bf16.msra.mxu0 %v5770
    %6063 = vmatpush.bf16.msra.mxu0 %v5766
    %6064 = vmatpush.bf16.msra.mxu0 %v5762
    %6065 = vmatpush.bf16.msra.mxu0 %v5758
    %6066 = vmatpush.bf16.msra.mxu0 %v5754
    %6067 = vmatpush.bf16.msra.mxu0 %v5750
    %6068 = vmatpush.bf16.msra.mxu0 %v5746
    %6069 = vmatpush.bf16.msra.mxu0 %v5742
    %6070 = vmatmul.bf16.gmra.mxu0 %v5152
    %v6071 = vpop.f32.mrf.mxu0
    %v6072 = vadd.f32 %v6059, %v6071
    %v6073 = vpop.f32.mrf.mxu0
    %6074 = vdwg.mxu0
    %6075 = vmatpush.bf16.msra.mxu0 %v5802
    %6076 = vmatpush.bf16.msra.mxu0 %v5798
    %6077 = vmatpush.bf16.msra.mxu0 %v5794
    %6078 = vmatpush.bf16.msra.mxu0 %v5790
    %6079 = vmatpush.bf16.msra.mxu0 %v5786
    %6080 = vmatpush.bf16.msra.mxu0 %v5782
    %6081 = vmatpush.bf16.msra.mxu0 %v5778
    %6082 = vmatpush.bf16.msra.mxu0 %v5774
    %6083 = vmatmul.bf16.gmra.mxu0 %v5153
    %v6084 = vpop.f32.mrf.mxu0
    %v6085 = vadd.f32 %v6072, %v6084
    %v6086 = vpop.f32.mrf.mxu0
    %6087 = vdwg.mxu0
    %6088 = vmatpush.bf16.msra.mxu0 %v5707
    %6089 = vmatpush.bf16.msra.mxu0 %v5703
    %6090 = vmatpush.bf16.msra.mxu0 %v5699
    %6091 = vmatpush.bf16.msra.mxu0 %v5695
    %6092 = vmatpush.bf16.msra.mxu0 %v5691
    %6093 = vmatpush.bf16.msra.mxu0 %v5687
    %6094 = vmatpush.bf16.msra.mxu0 %v5683
    %6095 = vmatpush.bf16.msra.mxu0 %v5679
    %6096 = vmatmul.bf16.gmra.mxu0 %v5150
    %v6097 = vpop.f32.mrf.mxu0
    %v6098 = vadd.f32 %v5287, %v6097
    %v6099 = vpop.f32.mrf.mxu0
    %6100 = vdwg.mxu0
    %6101 = vmatpush.bf16.msra.mxu0 %v5739
    %6102 = vmatpush.bf16.msra.mxu0 %v5735
    %6103 = vmatpush.bf16.msra.mxu0 %v5731
    %6104 = vmatpush.bf16.msra.mxu0 %v5727
    %6105 = vmatpush.bf16.msra.mxu0 %v5723
    %6106 = vmatpush.bf16.msra.mxu0 %v5719
    %6107 = vmatpush.bf16.msra.mxu0 %v5715
    %6108 = vmatpush.bf16.msra.mxu0 %v5711
    %6109 = vmatmul.bf16.gmra.mxu0 %v5151
    %v6110 = vpop.f32.mrf.mxu0
    %v6111 = vadd.f32 %v6098, %v6110
    %v6112 = vpop.f32.mrf.mxu0
    %6113 = vdwg.mxu0
    %6114 = vmatpush.bf16.msra.mxu0 %v5771
    %6115 = vmatpush.bf16.msra.mxu0 %v5767
    %6116 = vmatpush.bf16.msra.mxu0 %v5763
    %6117 = vmatpush.bf16.msra.mxu0 %v5759
    %6118 = vmatpush.bf16.msra.mxu0 %v5755
    %6119 = vmatpush.bf16.msra.mxu0 %v5751
    %6120 = vmatpush.bf16.msra.mxu0 %v5747
    %6121 = vmatpush.bf16.msra.mxu0 %v5743
    %6122 = vmatmul.bf16.gmra.mxu0 %v5152
    %v6123 = vpop.f32.mrf.mxu0
    %v6124 = vadd.f32 %v6111, %v6123
    %v6125 = vpop.f32.mrf.mxu0
    %6126 = vdwg.mxu0
    %6127 = vmatpush.bf16.msra.mxu0 %v5803
    %6128 = vmatpush.bf16.msra.mxu0 %v5799
    %6129 = vmatpush.bf16.msra.mxu0 %v5795
    %6130 = vmatpush.bf16.msra.mxu0 %v5791
    %6131 = vmatpush.bf16.msra.mxu0 %v5787
    %6132 = vmatpush.bf16.msra.mxu0 %v5783
    %6133 = vmatpush.bf16.msra.mxu0 %v5779
    %6134 = vmatpush.bf16.msra.mxu0 %v5775
    %6135 = vmatmul.bf16.gmra.mxu0 %v5153
    %v6136 = vpop.f32.mrf.mxu0
    %v6137 = vadd.f32 %v6124, %v6136
    %v6138 = vpop.f32.mrf.mxu0
    %6139 = vdwg.mxu0
    %v6140 = vmax.f32 %v5981, 0.0
    %v6141 = vmax.f32 %v6033, 0.0
    %v6142 = vmax.f32 %v6085, 0.0
    %v6143 = vmax.f32 %v6137, 0.0
    %v6144 = vpack.c.bf16 %v6140, %v6140
    %v6145 = vpack.c.bf16 %v6141, %v6141
    %v6146 = vpack.c.bf16 %v6142, %v6142
    %v6147 = vpack.c.bf16 %v6143, %v6143
    %6148 = vmatpush.bf16.msra.mxu0 %v5704
    %6149 = vmatpush.bf16.msra.mxu0 %v5700
    %6150 = vmatpush.bf16.msra.mxu0 %v5696
    %6151 = vmatpush.bf16.msra.mxu0 %v5692
    %6152 = vmatpush.bf16.msra.mxu0 %v5688
    %6153 = vmatpush.bf16.msra.mxu0 %v5684
    %6154 = vmatpush.bf16.msra.mxu0 %v5680
    %6155 = vmatpush.bf16.msra.mxu0 %v5676
    %6156 = vmatmul.bf16.gmra.mxu0 %v6144
    %v6157 = vpop.f32.mrf.mxu0
    %v6158 = vadd.f32 %v5284, %v6157
    %v6159 = vpop.f32.mrf.mxu0
    %6160 = vdwg.mxu0
    %6161 = vmatpush.bf16.msra.mxu0 %v5736
    %6162 = vmatpush.bf16.msra.mxu0 %v5732
    %6163 = vmatpush.bf16.msra.mxu0 %v5728
    %6164 = vmatpush.bf16.msra.mxu0 %v5724
    %6165 = vmatpush.bf16.msra.mxu0 %v5720
    %6166 = vmatpush.bf16.msra.mxu0 %v5716
    %6167 = vmatpush.bf16.msra.mxu0 %v5712
    %6168 = vmatpush.bf16.msra.mxu0 %v5708
    %6169 = vmatmul.bf16.gmra.mxu0 %v6145
    %v6170 = vpop.f32.mrf.mxu0
    %v6171 = vadd.f32 %v6158, %v6170
    %v6172 = vpop.f32.mrf.mxu0
    %6173 = vdwg.mxu0
    %6174 = vmatpush.bf16.msra.mxu0 %v5768
    %6175 = vmatpush.bf16.msra.mxu0 %v5764
    %6176 = vmatpush.bf16.msra.mxu0 %v5760
    %6177 = vmatpush.bf16.msra.mxu0 %v5756
    %6178 = vmatpush.bf16.msra.mxu0 %v5752
    %6179 = vmatpush.bf16.msra.mxu0 %v5748
    %6180 = vmatpush.bf16.msra.mxu0 %v5744
    %6181 = vmatpush.bf16.msra.mxu0 %v5740
    %6182 = vmatmul.bf16.gmra.mxu0 %v6146
    %v6183 = vpop.f32.mrf.mxu0
    %v6184 = vadd.f32 %v6171, %v6183
    %v6185 = vpop.f32.mrf.mxu0
    %6186 = vdwg.mxu0
    %6187 = vmatpush.bf16.msra.mxu0 %v5800
    %6188 = vmatpush.bf16.msra.mxu0 %v5796
    %6189 = vmatpush.bf16.msra.mxu0 %v5792
    %6190 = vmatpush.bf16.msra.mxu0 %v5788
    %6191 = vmatpush.bf16.msra.mxu0 %v5784
    %6192 = vmatpush.bf16.msra.mxu0 %v5780
    %6193 = vmatpush.bf16.msra.mxu0 %v5776
    %6194 = vmatpush.bf16.msra.mxu0 %v5772
    %6195 = vmatmul.bf16.gmra.mxu0 %v6147
    %v6196 = vpop.f32.mrf.mxu0
    %v6197 = vadd.f32 %v6184, %v6196
    %v6198 = vpop.f32.mrf.mxu0
    %6199 = vdwg.mxu0
    %6200 = vmatpush.bf16.msra.mxu0 %v5705
    %6201 = vmatpush.bf16.msra.mxu0 %v5701
    %6202 = vmatpush.bf16.msra.mxu0 %v5697
    %6203 = vmatpush.bf16.msra.mxu0 %v5693
    %6204 = vmatpush.bf16.msra.mxu0 %v5689
    %6205 = vmatpush.bf16.msra.mxu0 %v5685
    %6206 = vmatpush.bf16.msra.mxu0 %v5681
    %6207 = vmatpush.bf16.msra.mxu0 %v5677
    %6208 = vmatmul.bf16.gmra.mxu0 %v6144
    %v6209 = vpop.f32.mrf.mxu0
    %v6210 = vadd.f32 %v5285, %v6209
    %v6211 = vpop.f32.mrf.mxu0
    %6212 = vdwg.mxu0
    %6213 = vmatpush.bf16.msra.mxu0 %v5737
    %6214 = vmatpush.bf16.msra.mxu0 %v5733
    %6215 = vmatpush.bf16.msra.mxu0 %v5729
    %6216 = vmatpush.bf16.msra.mxu0 %v5725
    %6217 = vmatpush.bf16.msra.mxu0 %v5721
    %6218 = vmatpush.bf16.msra.mxu0 %v5717
    %6219 = vmatpush.bf16.msra.mxu0 %v5713
    %6220 = vmatpush.bf16.msra.mxu0 %v5709
    %6221 = vmatmul.bf16.gmra.mxu0 %v6145
    %v6222 = vpop.f32.mrf.mxu0
    %v6223 = vadd.f32 %v6210, %v6222
    %v6224 = vpop.f32.mrf.mxu0
    %6225 = vdwg.mxu0
    %6226 = vmatpush.bf16.msra.mxu0 %v5769
    %6227 = vmatpush.bf16.msra.mxu0 %v5765
    %6228 = vmatpush.bf16.msra.mxu0 %v5761
    %6229 = vmatpush.bf16.msra.mxu0 %v5757
    %6230 = vmatpush.bf16.msra.mxu0 %v5753
    %6231 = vmatpush.bf16.msra.mxu0 %v5749
    %6232 = vmatpush.bf16.msra.mxu0 %v5745
    %6233 = vmatpush.bf16.msra.mxu0 %v5741
    %6234 = vmatmul.bf16.gmra.mxu0 %v6146
    %v6235 = vpop.f32.mrf.mxu0
    %v6236 = vadd.f32 %v6223, %v6235
    %v6237 = vpop.f32.mrf.mxu0
    %6238 = vdwg.mxu0
    %6239 = vmatpush.bf16.msra.mxu0 %v5801
    %6240 = vmatpush.bf16.msra.mxu0 %v5797
    %6241 = vmatpush.bf16.msra.mxu0 %v5793
    %6242 = vmatpush.bf16.msra.mxu0 %v5789
    %6243 = vmatpush.bf16.msra.mxu0 %v5785
    %6244 = vmatpush.bf16.msra.mxu0 %v5781
    %6245 = vmatpush.bf16.msra.mxu0 %v5777
    %6246 = vmatpush.bf16.msra.mxu0 %v5773
    %6247 = vmatmul.bf16.gmra.mxu0 %v6147
    %v6248 = vpop.f32.mrf.mxu0
    %v6249 = vadd.f32 %v6236, %v6248
    %v6250 = vpop.f32.mrf.mxu0
    %6251 = vdwg.mxu0
    %6252 = vmatpush.bf16.msra.mxu0 %v5706
    %6253 = vmatpush.bf16.msra.mxu0 %v5702
    %6254 = vmatpush.bf16.msra.mxu0 %v5698
    %6255 = vmatpush.bf16.msra.mxu0 %v5694
    %6256 = vmatpush.bf16.msra.mxu0 %v5690
    %6257 = vmatpush.bf16.msra.mxu0 %v5686
    %6258 = vmatpush.bf16.msra.mxu0 %v5682
    %6259 = vmatpush.bf16.msra.mxu0 %v5678
    %6260 = vmatmul.bf16.gmra.mxu0 %v6144
    %v6261 = vpop.f32.mrf.mxu0
    %v6262 = vadd.f32 %v5286, %v6261
    %v6263 = vpop.f32.mrf.mxu0
    %6264 = vdwg.mxu0
    %6265 = vmatpush.bf16.msra.mxu0 %v5738
    %6266 = vmatpush.bf16.msra.mxu0 %v5734
    %6267 = vmatpush.bf16.msra.mxu0 %v5730
    %6268 = vmatpush.bf16.msra.mxu0 %v5726
    %6269 = vmatpush.bf16.msra.mxu0 %v5722
    %6270 = vmatpush.bf16.msra.mxu0 %v5718
    %6271 = vmatpush.bf16.msra.mxu0 %v5714
    %6272 = vmatpush.bf16.msra.mxu0 %v5710
    %6273 = vmatmul.bf16.gmra.mxu0 %v6145
    %v6274 = vpop.f32.mrf.mxu0
    %v6275 = vadd.f32 %v6262, %v6274
    %v6276 = vpop.f32.mrf.mxu0
    %6277 = vdwg.mxu0
    %6278 = vmatpush.bf16.msra.mxu0 %v5770
    %6279 = vmatpush.bf16.msra.mxu0 %v5766
    %6280 = vmatpush.bf16.msra.mxu0 %v5762
    %6281 = vmatpush.bf16.msra.mxu0 %v5758
    %6282 = vmatpush.bf16.msra.mxu0 %v5754
    %6283 = vmatpush.bf16.msra.mxu0 %v5750
    %6284 = vmatpush.bf16.msra.mxu0 %v5746
    %6285 = vmatpush.bf16.msra.mxu0 %v5742
    %6286 = vmatmul.bf16.gmra.mxu0 %v6146
    %v6287 = vpop.f32.mrf.mxu0
    %v6288 = vadd.f32 %v6275, %v6287
    %v6289 = vpop.f32.mrf.mxu0
    %6290 = vdwg.mxu0
    %6291 = vmatpush.bf16.msra.mxu0 %v5802
    %6292 = vmatpush.bf16.msra.mxu0 %v5798
    %6293 = vmatpush.bf16.msra.mxu0 %v5794
    %6294 = vmatpush.bf16.msra.mxu0 %v5790
    %6295 = vmatpush.bf16.msra.mxu0 %v5786
    %6296 = vmatpush.bf16.msra.mxu0 %v5782
    %6297 = vmatpush.bf16.msra.mxu0 %v5778
    %6298 = vmatpush.bf16.msra.mxu0 %v5774
    %6299 = vmatmul.bf16.gmra.mxu0 %v6147
    %v6300 = vpop.f32.mrf.mxu0
    %v6301 = vadd.f32 %v6288, %v6300
    %v6302 = vpop.f32.mrf.mxu0
    %6303 = vdwg.mxu0
    %6304 = vmatpush.bf16.msra.mxu0 %v5707
    %6305 = vmatpush.bf16.msra.mxu0 %v5703
    %6306 = vmatpush.bf16.msra.mxu0 %v5699
    %6307 = vmatpush.bf16.msra.mxu0 %v5695
    %6308 = vmatpush.bf16.msra.mxu0 %v5691
    %6309 = vmatpush.bf16.msra.mxu0 %v5687
    %6310 = vmatpush.bf16.msra.mxu0 %v5683
    %6311 = vmatpush.bf16.msra.mxu0 %v5679
    %6312 = vmatmul.bf16.gmra.mxu0 %v6144
    %v6313 = vpop.f32.mrf.mxu0
    %v6314 = vadd.f32 %v5287, %v6313
    %v6315 = vpop.f32.mrf.mxu0
    %6316 = vdwg.mxu0
    %6317 = vmatpush.bf16.msra.mxu0 %v5739
    %6318 = vmatpush.bf16.msra.mxu0 %v5735
    %6319 = vmatpush.bf16.msra.mxu0 %v5731
    %6320 = vmatpush.bf16.msra.mxu0 %v5727
    %6321 = vmatpush.bf16.msra.mxu0 %v5723
    %6322 = vmatpush.bf16.msra.mxu0 %v5719
    %6323 = vmatpush.bf16.msra.mxu0 %v5715
    %6324 = vmatpush.bf16.msra.mxu0 %v5711
    %6325 = vmatmul.bf16.gmra.mxu0 %v6145
    %v6326 = vpop.f32.mrf.mxu0
    %v6327 = vadd.f32 %v6314, %v6326
    %v6328 = vpop.f32.mrf.mxu0
    %6329 = vdwg.mxu0
    %6330 = vmatpush.bf16.msra.mxu0 %v5771
    %6331 = vmatpush.bf16.msra.mxu0 %v5767
    %6332 = vmatpush.bf16.msra.mxu0 %v5763
    %6333 = vmatpush.bf16.msra.mxu0 %v5759
    %6334 = vmatpush.bf16.msra.mxu0 %v5755
    %6335 = vmatpush.bf16.msra.mxu0 %v5751
    %6336 = vmatpush.bf16.msra.mxu0 %v5747
    %6337 = vmatpush.bf16.msra.mxu0 %v5743
    %6338 = vmatmul.bf16.gmra.mxu0 %v6146
    %v6339 = vpop.f32.mrf.mxu0
    %v6340 = vadd.f32 %v6327, %v6339
    %v6341 = vpop.f32.mrf.mxu0
    %6342 = vdwg.mxu0
    %6343 = vmatpush.bf16.msra.mxu0 %v5803
    %6344 = vmatpush.bf16.msra.mxu0 %v5799
    %6345 = vmatpush.bf16.msra.mxu0 %v5795
    %6346 = vmatpush.bf16.msra.mxu0 %v5791
    %6347 = vmatpush.bf16.msra.mxu0 %v5787
    %6348 = vmatpush.bf16.msra.mxu0 %v5783
    %6349 = vmatpush.bf16.msra.mxu0 %v5779
    %6350 = vmatpush.bf16.msra.mxu0 %v5775
    %6351 = vmatmul.bf16.gmra.mxu0 %v6147
    %v6352 = vpop.f32.mrf.mxu0
    %v6353 = vadd.f32 %v6340, %v6352
    %v6354 = vpop.f32.mrf.mxu0
    %6355 = vdwg.mxu0
    %v6356 = vmax.f32 %v6197, 0.0
    %v6357 = vmax.f32 %v6249, 0.0
    %v6358 = vmax.f32 %v6301, 0.0
    %v6359 = vmax.f32 %v6353, 0.0
    %v6360 = vpack.c.bf16 %v6356, %v6356
    %v6361 = vpack.c.bf16 %v6357, %v6357
    %v6362 = vpack.c.bf16 %v6358, %v6358
    %v6363 = vpack.c.bf16 %v6359, %v6359
    %v6364 = vld [vmem:[#allocation14] sm:$0xf]
    %v6365 = vld [vmem:[#allocation14 + $0x4] sm:$0xf]
    %v6366 = vld [vmem:[#allocation14 + $0x8] sm:$0xf]
    %v6367 = vld [vmem:[#allocation14 + $0xc] sm:$0xf]
    %v6368 = vld [vmem:[#allocation14 + $0x10] sm:$0xf]
    %v6369 = vld [vmem:[#allocation14 + $0x14] sm:$0xf]
    %v6370 = vld [vmem:[#allocation14 + $0x18] sm:$0xf]
    %v6371 = vld [vmem:[#allocation14 + $0x1c] sm:$0xf]
    %v6372 = vld [vmem:[#allocation14 + $0x20] sm:$0xf]
    %v6373 = vld [vmem:[#allocation14 + $0x24] sm:$0xf]
    %v6374 = vld [vmem:[#allocation14 + $0x28] sm:$0xf]
    %v6375 = vld [vmem:[#allocation14 + $0x2c] sm:$0xf]
    %v6376 = vld [vmem:[#allocation14 + $0x30] sm:$0xf]
    %v6377 = vld [vmem:[#allocation14 + $0x34] sm:$0xf]
    %v6378 = vld [vmem:[#allocation14 + $0x38] sm:$0xf]
    %v6379 = vld [vmem:[#allocation14 + $0x3c] sm:$0xf]
    %v6380 = vld [vmem:[#allocation14 + $0x40] sm:$0xf]
    %v6381 = vld [vmem:[#allocation14 + $0x44] sm:$0xf]
    %v6382 = vld [vmem:[#allocation14 + $0x48] sm:$0xf]
    %v6383 = vld [vmem:[#allocation14 + $0x4c] sm:$0xf]
    %v6384 = vld [vmem:[#allocation14 + $0x50] sm:$0xf]
    %v6385 = vld [vmem:[#allocation14 + $0x54] sm:$0xf]
    %v6386 = vld [vmem:[#allocation14 + $0x58] sm:$0xf]
    %v6387 = vld [vmem:[#allocation14 + $0x5c] sm:$0xf]
    %v6388 = vld [vmem:[#allocation14 + $0x60] sm:$0xf]
    %v6389 = vld [vmem:[#allocation14 + $0x64] sm:$0xf]
    %v6390 = vld [vmem:[#allocation14 + $0x68] sm:$0xf]
    %v6391 = vld [vmem:[#allocation14 + $0x6c] sm:$0xf]
    %v6392 = vld [vmem:[#allocation14 + $0x70] sm:$0xf]
    %v6393 = vld [vmem:[#allocation14 + $0x74] sm:$0xf]
    %v6394 = vld [vmem:[#allocation14 + $0x78] sm:$0xf]
    %v6395 = vld [vmem:[#allocation14 + $0x7c] sm:$0xf]
    %v6396 = vld [vmem:[#allocation14 + $0x80] sm:$0xf]
    %v6397 = vld [vmem:[#allocation14 + $0x84] sm:$0xf]
    %v6398 = vld [vmem:[#allocation14 + $0x88] sm:$0xf]
    %v6399 = vld [vmem:[#allocation14 + $0x8c] sm:$0xf]
    %v6400 = vld [vmem:[#allocation14 + $0x90] sm:$0xf]
    %v6401 = vld [vmem:[#allocation14 + $0x94] sm:$0xf]
    %v6402 = vld [vmem:[#allocation14 + $0x98] sm:$0xf]
    %v6403 = vld [vmem:[#allocation14 + $0x9c] sm:$0xf]
    %v6404 = vld [vmem:[#allocation14 + $0xa0] sm:$0xf]
    %v6405 = vld [vmem:[#allocation14 + $0xa4] sm:$0xf]
    %v6406 = vld [vmem:[#allocation14 + $0xa8] sm:$0xf]
    %v6407 = vld [vmem:[#allocation14 + $0xac] sm:$0xf]
    %v6408 = vld [vmem:[#allocation14 + $0xb0] sm:$0xf]
    %v6409 = vld [vmem:[#allocation14 + $0xb4] sm:$0xf]
    %v6410 = vld [vmem:[#allocation14 + $0xb8] sm:$0xf]
    %v6411 = vld [vmem:[#allocation14 + $0xbc] sm:$0xf]
    %v6412 = vld [vmem:[#allocation14 + $0xc0] sm:$0xf]
    %v6413 = vld [vmem:[#allocation14 + $0xc4] sm:$0xf]
    %v6414 = vld [vmem:[#allocation14 + $0xc8] sm:$0xf]
    %v6415 = vld [vmem:[#allocation14 + $0xcc] sm:$0xf]
    %v6416 = vld [vmem:[#allocation14 + $0xd0] sm:$0xf]
    %v6417 = vld [vmem:[#allocation14 + $0xd4] sm:$0xf]
    %v6418 = vld [vmem:[#allocation14 + $0xd8] sm:$0xf]
    %v6419 = vld [vmem:[#allocation14 + $0xdc] sm:$0xf]
    %v6420 = vld [vmem:[#allocation14 + $0xe0] sm:$0xf]
    %v6421 = vld [vmem:[#allocation14 + $0xe4] sm:$0xf]
    %v6422 = vld [vmem:[#allocation14 + $0xe8] sm:$0xf]
    %v6423 = vld [vmem:[#allocation14 + $0xec] sm:$0xf]
    %v6424 = vld [vmem:[#allocation14 + $0xf0] sm:$0xf]
    %v6425 = vld [vmem:[#allocation14 + $0xf4] sm:$0xf]
    %v6426 = vld [vmem:[#allocation14 + $0xf8] sm:$0xf]
    %v6427 = vld [vmem:[#allocation14 + $0xfc] sm:$0xf]
    %v6428 = vld [vmem:[#allocation16] sm:$0x1]
    %v6430 = vperm.slane %v6428, 0
    %v6496 = vunpack.c.l.b16 %v6364
    %v6497 = vunpack.c.l.b16 %v6365
    %v6498 = vunpack.c.l.b16 %v6366
    %v6499 = vunpack.c.l.b16 %v6367
    %v6500 = vunpack.c.l.b16 %v6368
    %v6501 = vunpack.c.l.b16 %v6369
    %v6502 = vunpack.c.l.b16 %v6370
    %v6503 = vunpack.c.l.b16 %v6371
    %v6504 = vunpack.c.l.b16 %v6372
    %v6505 = vunpack.c.l.b16 %v6373
    %v6506 = vunpack.c.l.b16 %v6374
    %v6507 = vunpack.c.l.b16 %v6375
    %v6508 = vunpack.c.l.b16 %v6376
    %v6509 = vunpack.c.l.b16 %v6377
    %v6510 = vunpack.c.l.b16 %v6378
    %v6511 = vunpack.c.l.b16 %v6379
    %v6512 = vunpack.c.l.b16 %v6380
    %v6513 = vunpack.c.l.b16 %v6381
    %v6514 = vunpack.c.l.b16 %v6382
    %v6515 = vunpack.c.l.b16 %v6383
    %v6516 = vunpack.c.l.b16 %v6384
    %v6517 = vunpack.c.l.b16 %v6385
    %v6518 = vunpack.c.l.b16 %v6386
    %v6519 = vunpack.c.l.b16 %v6387
    %v6520 = vunpack.c.l.b16 %v6388
    %v6521 = vunpack.c.l.b16 %v6389
    %v6522 = vunpack.c.l.b16 %v6390
    %v6523 = vunpack.c.l.b16 %v6391
    %v6524 = vunpack.c.l.b16 %v6392
    %v6525 = vunpack.c.l.b16 %v6393
    %v6526 = vunpack.c.l.b16 %v6394
    %v6527 = vunpack.c.l.b16 %v6395
    %v6528 = vunpack.c.l.b16 %v6396
    %v6529 = vunpack.c.l.b16 %v6397
    %v6530 = vunpack.c.l.b16 %v6398
    %v6531 = vunpack.c.l.b16 %v6399
    %v6532 = vunpack.c.l.b16 %v6400
    %v6533 = vunpack.c.l.b16 %v6401
    %v6534 = vunpack.c.l.b16 %v6402
    %v6535 = vunpack.c.l.b16 %v6403
    %v6536 = vunpack.c.l.b16 %v6404
    %v6537 = vunpack.c.l.b16 %v6405
    %v6538 = vunpack.c.l.b16 %v6406
    %v6539 = vunpack.c.l.b16 %v6407
    %v6540 = vunpack.c.l.b16 %v6408
    %v6541 = vunpack.c.l.b16 %v6409
    %v6542 = vunpack.c.l.b16 %v6410
    %v6543 = vunpack.c.l.b16 %v6411
    %v6544 = vunpack.c.l.b16 %v6412
    %v6545 = vunpack.c.l.b16 %v6413
    %v6546 = vunpack.c.l.b16 %v6414
    %v6547 = vunpack.c.l.b16 %v6415
    %v6548 = vunpack.c.l.b16 %v6416
    %v6549 = vunpack.c.l.b16 %v6417
    %v6550 = vunpack.c.l.b16 %v6418
    %v6551 = vunpack.c.l.b16 %v6419
    %v6552 = vunpack.c.l.b16 %v6420
    %v6553 = vunpack.c.l.b16 %v6421
    %v6554 = vunpack.c.l.b16 %v6422
    %v6555 = vunpack.c.l.b16 %v6423
    %v6556 = vunpack.c.l.b16 %v6424
    %v6557 = vunpack.c.l.b16 %v6425
    %v6558 = vunpack.c.l.b16 %v6426
    %v6559 = vunpack.c.l.b16 %v6427
    %v6560 = vpack.c.b16 %v6497, %v6496
    %v6561 = vpack.c.b16 %v6499, %v6498
    %v6562 = vpack.c.b16 %v6501, %v6500
    %v6563 = vpack.c.b16 %v6503, %v6502
    %v6564 = vpack.c.b16 %v6505, %v6504
    %v6565 = vpack.c.b16 %v6507, %v6506
    %v6566 = vpack.c.b16 %v6509, %v6508
    %v6567 = vpack.c.b16 %v6511, %v6510
    %v6568 = vpack.c.b16 %v6513, %v6512
    %v6569 = vpack.c.b16 %v6515, %v6514
    %v6570 = vpack.c.b16 %v6517, %v6516
    %v6571 = vpack.c.b16 %v6519, %v6518
    %v6572 = vpack.c.b16 %v6521, %v6520
    %v6573 = vpack.c.b16 %v6523, %v6522
    %v6574 = vpack.c.b16 %v6525, %v6524
    %v6575 = vpack.c.b16 %v6527, %v6526
    %v6576 = vpack.c.b16 %v6529, %v6528
    %v6577 = vpack.c.b16 %v6531, %v6530
    %v6578 = vpack.c.b16 %v6533, %v6532
    %v6579 = vpack.c.b16 %v6535, %v6534
    %v6580 = vpack.c.b16 %v6537, %v6536
    %v6581 = vpack.c.b16 %v6539, %v6538
    %v6582 = vpack.c.b16 %v6541, %v6540
    %v6583 = vpack.c.b16 %v6543, %v6542
    %v6584 = vpack.c.b16 %v6545, %v6544
    %v6585 = vpack.c.b16 %v6547, %v6546
    %v6586 = vpack.c.b16 %v6549, %v6548
    %v6587 = vpack.c.b16 %v6551, %v6550
    %v6588 = vpack.c.b16 %v6553, %v6552
    %v6589 = vpack.c.b16 %v6555, %v6554
    %v6590 = vpack.c.b16 %v6557, %v6556
    %v6591 = vpack.c.b16 %v6559, %v6558
    %6624 = vmatpush.bf16.msra.mxu0 %v6567
    %6625 = vmatpush.bf16.msra.mxu0 %v6566
    %6626 = vmatpush.bf16.msra.mxu0 %v6565
    %6627 = vmatpush.bf16.msra.mxu0 %v6564
    %6628 = vmatpush.bf16.msra.mxu0 %v6563
    %6629 = vmatpush.bf16.msra.mxu0 %v6562
    %6630 = vmatpush.bf16.msra.mxu0 %v6561
    %6631 = vmatpush.bf16.msra.mxu0 %v6560
    %6632 = vmatmul.bf16.gmra.mxu0 %v6360
    %v6633 = vpop.f32.mrf.mxu0
    %v6634 = vadd.f32 %v6430, %v6633
    %v6635 = vpop.f32.mrf.mxu0
    %6636 = vdwg.mxu0
    %6637 = vmatpush.bf16.msra.mxu0 %v6575
    %6638 = vmatpush.bf16.msra.mxu0 %v6574
    %6639 = vmatpush.bf16.msra.mxu0 %v6573
    %6640 = vmatpush.bf16.msra.mxu0 %v6572
    %6641 = vmatpush.bf16.msra.mxu0 %v6571
    %6642 = vmatpush.bf16.msra.mxu0 %v6570
    %6643 = vmatpush.bf16.msra.mxu0 %v6569
    %6644 = vmatpush.bf16.msra.mxu0 %v6568
    %6645 = vmatmul.bf16.gmra.mxu0 %v6361
    %v6646 = vpop.f32.mrf.mxu0
    %v6647 = vadd.f32 %v6634, %v6646
    %v6648 = vpop.f32.mrf.mxu0
    %6649 = vdwg.mxu0
    %6650 = vmatpush.bf16.msra.mxu0 %v6583
    %6651 = vmatpush.bf16.msra.mxu0 %v6582
    %6652 = vmatpush.bf16.msra.mxu0 %v6581
    %6653 = vmatpush.bf16.msra.mxu0 %v6580
    %6654 = vmatpush.bf16.msra.mxu0 %v6579
    %6655 = vmatpush.bf16.msra.mxu0 %v6578
    %6656 = vmatpush.bf16.msra.mxu0 %v6577
    %6657 = vmatpush.bf16.msra.mxu0 %v6576
    %6658 = vmatmul.bf16.gmra.mxu0 %v6362
    %v6659 = vpop.f32.mrf.mxu0
    %v6660 = vadd.f32 %v6647, %v6659
    %v6661 = vpop.f32.mrf.mxu0
    %6662 = vdwg.mxu0
    %6663 = vmatpush.bf16.msra.mxu0 %v6591
    %6664 = vmatpush.bf16.msra.mxu0 %v6590
    %6665 = vmatpush.bf16.msra.mxu0 %v6589
    %6666 = vmatpush.bf16.msra.mxu0 %v6588
    %6667 = vmatpush.bf16.msra.mxu0 %v6587
    %6668 = vmatpush.bf16.msra.mxu0 %v6586
    %6669 = vmatpush.bf16.msra.mxu0 %v6585
    %6670 = vmatpush.bf16.msra.mxu0 %v6584
    %6671 = vmatmul.bf16.gmra.mxu0 %v6363
    %v6672 = vpop.f32.mrf.mxu0
    %v6673 = vadd.f32 %v6660, %v6672
    %v6674 = vpop.f32.mrf.mxu0
    %6675 = vdwg.mxu0
    %v6676 = vmax.f32 %v6673, 0.0
    %v6677 = vpack.c.bf16 %v6676, %v6676
    %v6678 = vld [vmem:[#allocation17] sm:$0xf]
    %v6679 = vld [vmem:[#allocation17 + $0x4] sm:$0xf]
    %v6680 = vld [vmem:[#allocation17 + $0x8] sm:$0xf]
    %v6681 = vld [vmem:[#allocation17 + $0xc] sm:$0xf]
    %v6682 = vld [vmem:[#allocation17 + $0x10] sm:$0xf]
    %v6683 = vld [vmem:[#allocation17 + $0x14] sm:$0xf]
    %v6684 = vld [vmem:[#allocation17 + $0x18] sm:$0xf]
    %v6685 = vld [vmem:[#allocation17 + $0x1c] sm:$0xf]
    %v6686 = vld [vmem:[#allocation17 + $0x20] sm:$0xf]
    %v6687 = vld [vmem:[#allocation17 + $0x24] sm:$0xf]
    %v6688 = vld [vmem:[#allocation17 + $0x28] sm:$0xf]
    %v6689 = vld [vmem:[#allocation17 + $0x2c] sm:$0xf]
    %v6690 = vld [vmem:[#allocation17 + $0x30] sm:$0xf]
    %v6691 = vld [vmem:[#allocation17 + $0x34] sm:$0xf]
    %v6692 = vld [vmem:[#allocation17 + $0x38] sm:$0xf]
    %v6693 = vld [vmem:[#allocation17 + $0x3c] sm:$0xf]
    %v6694 = vld [vmem:[#allocation19] sm:$0x1]
    %v6696 = vperm.slane %v6694, 0
    %v6714 = vunpack.c.l.b16 %v6678
    %v6715 = vunpack.c.l.b16 %v6679
    %v6716 = vunpack.c.l.b16 %v6680
    %v6717 = vunpack.c.l.b16 %v6681
    %v6718 = vunpack.c.l.b16 %v6682
    %v6719 = vunpack.c.l.b16 %v6683
    %v6720 = vunpack.c.l.b16 %v6684
    %v6721 = vunpack.c.l.b16 %v6685
    %v6722 = vunpack.c.l.b16 %v6686
    %v6723 = vunpack.c.l.b16 %v6687
    %v6724 = vunpack.c.l.b16 %v6688
    %v6725 = vunpack.c.l.b16 %v6689
    %v6726 = vunpack.c.l.b16 %v6690
    %v6727 = vunpack.c.l.b16 %v6691
    %v6728 = vunpack.c.l.b16 %v6692
    %v6729 = vunpack.c.l.b16 %v6693
    %v6730 = vpack.c.b16 %v6715, %v6714
    %v6731 = vpack.c.b16 %v6717, %v6716
    %v6732 = vpack.c.b16 %v6719, %v6718
    %v6733 = vpack.c.b16 %v6721, %v6720
    %v6734 = vpack.c.b16 %v6723, %v6722
    %v6735 = vpack.c.b16 %v6725, %v6724
    %v6736 = vpack.c.b16 %v6727, %v6726
    %v6737 = vpack.c.b16 %v6729, %v6728
    %6746 = vmatpush.bf16.msra.mxu0 %v6737
    %6747 = vmatpush.bf16.msra.mxu0 %v6736
    %6748 = vmatpush.bf16.msra.mxu0 %v6735
    %6749 = vmatpush.bf16.msra.mxu0 %v6734
    %6750 = vmatpush.bf16.msra.mxu0 %v6733
    %6751 = vmatpush.bf16.msra.mxu0 %v6732
    %6752 = vmatpush.bf16.msra.mxu0 %v6731
    %6753 = vmatpush.bf16.msra.mxu0 %v6730
    %6754 = vmatmul.bf16.gmra.mxu0 %v6677
    %v6755 = vpop.f32.mrf.mxu0
    %v6756 = vadd.f32 %v6696, %v6755
    %v6757 = vpop.f32.mrf.mxu0
    %6758 = vdwg.mxu0
    %v6759 = vsub.f32 0.0, %v6756
    %v6760 = vmul.f32 %v6759, 1.442695
    %v6761 = vpow.pop %v6760
    %v6762 = vadd.f32 %v6761, 1.0
    %v6763 = vrcp.pop %v6762
    %v6764 = vlaneseq
    %v6765 = vand.u32 %v6764, 127
    %vm6766 = vcmp.lt.s32.totalorder %v6765, 4
    %v6767 = vsel %vm6766, %v6763, -1e+30
    %6768 = vmax.xlane.f32.xlu0 %v6767
    %v6769 = vpop.xlane.xlu0 %6768
    %v6770 = vsub.f32 %v6767, %v6769
    %v6771 = vmul.f32 %v6770, 1.442695
    %v6772 = vpow.pop %v6771
    %v6773 = vsel %vm6766, %v6772, 0.0
    %6774 = vadd.xlane.f32.xlu0 %v6773
    %v6775 = vpop.xlane.xlu0 %6774
    %v6776 = vrcp.pop %v6775
    %v6777 = vmul.f32 %v6775, %v6776
    %v6778 = vsub.f32 1.0, %v6777
    %v6779 = vmul.f32 %v6776, %v6778
    %v6780 = vadd.f32 %v6776, %v6779
    %vm6781 = vweird.f32 %v6775
    %vm6782 = vweird.f32 %v6776
    %vm6783 = vmor %vm6781, %vm6782
    %v6784 = vsel %vm6783, %v6776, %v6780
    %v6785 = vand.u32 2147483647, %v6775
    %vm6786 = vcmp.eq.f32.partialorder %v6785, 8.507059e+37
    %v6787 = vand.u32 %v6775, 2147483648
    %v6788 = vor.u32 1.1754944e-38, %v6787
    %v6789 = vsel %vm6786, %v6788, %v6784
    %v6790 = vmul.f32 %v6773, %v6789
    %6791 = vst [vmem:[#allocation20] sm:$0xff] %v6790
    // Predicated region
    $region90: #{tpu_custom_call.1} parent=1 // pred_check
      _
    $region91: #{tpu_custom_call.1} parent=1 // pred_check_branch
      %6793 = sbr.rel (0) target = $region93
    $region92: #{tpu_custom_call.1} parent=1 // pred_region
      %6795 = vsyncadd [#allocation4], 0
      %s6797 = sshll.u32 [#allocation20], 4
      %s6798 = int_to_ptr.vmem [resolvable:$true] %s6797
      %s6799 = sshll.u32 %s11, 4
      %s6800 = int_to_ptr.hbm [resolvable:$true] %s6799
      %6802 = dma.vmem_to_hbm [thread:$0]  %s6798, 128, %s6800, [#allocation4]
    $region93: #{tpu_custom_call.1} parent=1 // pred_fallthru
      _
    // Predicated region
    $region94: #{tpu_custom_call.1} parent=1 // pred_check
      _
    $region95: #{tpu_custom_call.1} parent=1 // pred_check_branch
      %6804 = sbr.rel (0) target = $region97
    $region96: #{tpu_custom_call.1} parent=1 // pred_region
      %6806 = dma.done [#allocation4], 128
    $region97: #{tpu_custom_call.1} parent=1 // pred_fallthru
      _
    %6807 = vsyncpa [#allocation3], 1
    %6808 = vsyncpa [#allocation6], 1
    %6809 = vsyncpa [#allocation9], 1
    %6810 = vsyncpa [#allocation12], 1
    %6811 = vsyncpa [#allocation15], 1
    %6812 = vsyncpa [#allocation18], 1
    %6813 = vsyncpa [#allocation4], 1

</llo_original>
